<compile_context>
chip_gen: v7x
topology: tpu7x:2x2x1
jax: 0.10.0
libtpu: 0.0.40
codegen_flags: <defaults>
</compile_context>

<pallas_src>
import functools
import math

import jax
import jax.numpy as jnp
import numpy as np
from jax.experimental import pallas as pl
from jax.experimental.pallas import tpu as pltpu


# ----------------------------- tiling helpers --------------------------------

def _round_up(x, m):
    return ((x + m - 1) // m) * m


def _pick_tile(dim, target, align):
    """Largest tile <= target that divides `dim` and is a multiple of `align`.
    Callers pad `dim` to a multiple of `align` first, so this never has to fall
    back to a full (possibly huge) dimension for the matmul kernels."""
    if dim <= target:
        return dim
    t = (target // align) * align
    while t >= align:
        if dim % t == 0:
            return t
        t -= align
    return dim  # only reachable for un-padded dims (full-extent block is legal)


def _pad2(a, rows, cols):
    r, c = a.shape
    if (r, c) == (rows, cols):
        return a
    return jnp.pad(a, ((0, rows - r), (0, cols - c)))


# ----------------------------- Pallas kernels --------------------------------

def _linear_kernel(x_ref, w_ref, b_ref, o_ref, acc_ref, *, activation):
    # grid = (M-tiles, N-tiles, K-tiles); K (reduction) is the last grid axis.
    @pl.when(pl.program_id(2) == 0)
    def _init():
        acc_ref[...] = jnp.zeros_like(acc_ref)

    acc_ref[...] += jnp.dot(x_ref[...], w_ref[...],
                            preferred_element_type=jnp.float32)

    @pl.when(pl.program_id(2) == pl.num_programs(2) - 1)
    def _finish():
        y = acc_ref[...] + b_ref[...]
        if activation == "gelu":
            # Exact (erf-based) GELU, matching torch.nn.functional.gelu default.
            y = 0.5 * y * (1.0 + jax.lax.erf(y * (1.0 / math.sqrt(2.0))))
        o_ref[...] = y.astype(o_ref.dtype)


def linear(x, w, b, activation=None, *, out_dtype=jnp.bfloat16,
           tm=256, tn=256, tk=512):
    """x:(M,K) @ w:(K,N) + b:(N,) -> (M,N), optional fused exact GELU.
    Ragged dims are zero-padded to tile alignment and the result is sliced back."""
    M, K = x.shape
    N = w.shape[1]
    m_align = 128 if M >= 128 else 8
    Mp, Kp, Np = _round_up(M, m_align), _round_up(K, 128), _round_up(N, 128)
    x = _pad2(x, Mp, Kp)
    w = _pad2(w, Kp, Np)
    b2 = _pad2(b.reshape(1, N).astype(jnp.float32), 1, Np)
    tm = _pick_tile(Mp, tm, m_align)
    tn = _pick_tile(Np, tn, 128)
    tk = _pick_tile(Kp, tk, 128)
    grid = (Mp // tm, Np // tn, Kp // tk)
    cost = pl.CostEstimate(
        flops=2 * Mp * Np * Kp,
        transcendentals=(Mp * Np) if activation == "gelu" else 0,
        bytes_accessed=2 * (Mp * Kp + Kp * Np + Mp * Np) + 4 * Np,
    )
    out = pl.pallas_call(
        functools.partial(_linear_kernel, activation=activation),
        out_shape=jax.ShapeDtypeStruct((Mp, Np), out_dtype),
        grid_spec=pltpu.PrefetchScalarGridSpec(
            num_scalar_prefetch=0,
            grid=grid,
            in_specs=[
                pl.BlockSpec((tm, tk), lambda i, j, k: (i, k)),
                pl.BlockSpec((tk, tn), lambda i, j, k: (k, j)),
                pl.BlockSpec((1, tn), lambda i, j, k: (0, j)),
            ],
            out_specs=pl.BlockSpec((tm, tn), lambda i, j, k: (i, j)),
            scratch_shapes=[pltpu.VMEM((tm, tn), jnp.float32)],
        ),
        compiler_params=pltpu.CompilerParams(
            dimension_semantics=("parallel", "parallel", "arbitrary")),
        cost_estimate=cost,
    )(x, w, b2)
    # TODO(synk): consider pipeline_mode=pl.Buffered(3) on the weight spec for the long-K
    # vocab projection, and 512-tiles (+vmem_limit_bytes) on v5e/v6e's 128 MiB VMEM.
    if (Mp, Np) != (M, N):
        out = out[:M, :N]
    return out


def _linear_add_ln_kernel(x_ref, w_ref, b_ref, r_ref, g_ref, bt_ref,
                          o_ref, acc_ref, *, eps):
    # grid = (M-tiles, K-tiles); the full feature row (N = d_model) is one block so the
    # residual add + LayerNorm can run in the finalize epilogue (saves an HBM round trip).
    @pl.when(pl.program_id(1) == 0)
    def _init():
        acc_ref[...] = jnp.zeros_like(acc_ref)

    acc_ref[...] += jnp.dot(x_ref[...], w_ref[...],
                            preferred_element_type=jnp.float32)

    @pl.when(pl.program_id(1) == pl.num_programs(1) - 1)
    def _finish():
        y = acc_ref[...] + b_ref[...] + r_ref[...].astype(jnp.float32)
        mu = jnp.mean(y, axis=-1, keepdims=True)
        var = jnp.mean((y - mu) * (y - mu), axis=-1, keepdims=True)
        o_ref[...] = ((y - mu) * jax.lax.rsqrt(var + eps) * g_ref[...]
                      + bt_ref[...]).astype(o_ref.dtype)


def linear_add_layernorm(x, w, b, residual, gamma, beta, *, eps=1e-5,
                         out_dtype=jnp.bfloat16, tm=256, tk=512):
    """LayerNorm((x @ w + b) + residual) with the whole thing fused into one kernel."""
    M, K = x.shape
    N = w.shape[1]
    m_align = 128 if M >= 128 else 8
    Mp, Kp = _round_up(M, m_align), _round_up(K, 128)
    x = _pad2(x, Mp, Kp)
    w = _pad2(w, Kp, N)
    residual = _pad2(residual, Mp, N)
    tm = _pick_tile(Mp, tm, m_align)
    tk = _pick_tile(Kp, tk, 128)
    grid = (Mp // tm, Kp // tk)
    cost = pl.CostEstimate(flops=2 * Mp * N * Kp, transcendentals=0,
                           bytes_accessed=2 * (Mp * Kp + Kp * N + 2 * Mp * N) + 12 * N)
    out = pl.pallas_call(
        functools.partial(_linear_add_ln_kernel, eps=eps),
        out_shape=jax.ShapeDtypeStruct((Mp, N), out_dtype),
        grid_spec=pltpu.PrefetchScalarGridSpec(
            num_scalar_prefetch=0,
            grid=grid,
            in_specs=[
                pl.BlockSpec((tm, tk), lambda i, k: (i, k)),
                pl.BlockSpec((tk, N), lambda i, k: (k, 0)),
                pl.BlockSpec((1, N), lambda i, k: (0, 0)),
                pl.BlockSpec((tm, N), lambda i, k: (i, 0)),
                pl.BlockSpec((1, N), lambda i, k: (0, 0)),
                pl.BlockSpec((1, N), lambda i, k: (0, 0)),
            ],
            out_specs=pl.BlockSpec((tm, N), lambda i, k: (i, 0)),
            scratch_shapes=[pltpu.VMEM((tm, N), jnp.float32)],
        ),
        compiler_params=pltpu.CompilerParams(
            dimension_semantics=("parallel", "arbitrary")),
        cost_estimate=cost,
    )(x, w, b.reshape(1, N).astype(jnp.float32), residual,
      gamma.reshape(1, N), beta.reshape(1, N))
    if Mp != M:
        out = out[:M]
    return out


def _attention_kernel(q_ref, k_ref, v_ref, o_ref):
    # One (batch, head, q-tile) per grid step; 1/sqrt(dh) is pre-folded into the Q weights.
    q = q_ref[0, 0]                       # (tq, dh) bf16
    k = k_ref[0, 0]                       # (S, dh)  bf16
    v = v_ref[0, 0]                       # (S, dh)  bf16
    s = jax.lax.dot_general(q, k, (((1,), (1,)), ((), ())),
                            preferred_element_type=jnp.float32)      # (tq, S)
    m = jnp.max(s, axis=-1, keepdims=True)
    p = jnp.exp(s - m)
    l = jnp.sum(p, axis=-1, keepdims=True)
    o = jnp.dot(p.astype(v.dtype), v, preferred_element_type=jnp.float32)  # (tq, dh)
    # Normalize AFTER the PV matmul: (p/l)@v == (p@v)/l, S*dh mults instead of S*S.
    o = o * pl.reciprocal(l, approx=True)
    o_ref[0, 0] = o.astype(o_ref.dtype)
    # TODO(synk): causal mask not implemented (reference forward default mask=None).
    # TODO(synk): for very long S, tile the KV axis with an online softmax.


def attention(q, k, v, *, out_dtype=jnp.bfloat16, tq=256):
    """q, k, v: (B, H, S, dh) -> (B, H, S, dh) softmax(q k^T) v (scale already in q)."""
    B, H, S, dh = q.shape
    tq = _pick_tile(S, tq, 8)
    grid = (B, H, S // tq)
    kv_spec = pl.BlockSpec((1, 1, S, dh), lambda b, h, i: (b, h, 0, 0))
    return pl.pallas_call(
        _attention_kernel,
        out_shape=jax.ShapeDtypeStruct((B, H, S, dh), out_dtype),
        grid=grid,
        in_specs=[pl.BlockSpec((1, 1, tq, dh), lambda b, h, i: (b, h, i, 0)),
                  kv_spec, kv_spec],
        out_specs=pl.BlockSpec((1, 1, tq, dh), lambda b, h, i: (b, h, i, 0)),
        compiler_params=pltpu.CompilerParams(
            dimension_semantics=("parallel", "parallel", "parallel")),
    )(q, k, v)


def _layernorm_kernel(x_ref, g_ref, b_ref, o_ref, *, eps):
    x = x_ref[...].astype(jnp.float32)
    mu = jnp.mean(x, axis=-1, keepdims=True)
    var = jnp.mean((x - mu) * (x - mu), axis=-1, keepdims=True)
    o_ref[...] = ((x - mu) * jax.lax.rsqrt(var + eps) * g_ref[...]
                  + b_ref[...]).astype(o_ref.dtype)


def layernorm(x, gamma, beta, *, eps=1e-5, out_dtype=jnp.bfloat16, tm=256):
    """Row-tiled LayerNorm over the last axis (used only for the final, un-fused LN)."""
    M, D = x.shape
    tm = _pick_tile(M, tm, 8)
    row = pl.BlockSpec((tm, D), lambda i: (i, 0))
    vec = pl.BlockSpec((1, D), lambda i: (0, 0))
    return pl.pallas_call(
        functools.partial(_layernorm_kernel, eps=eps),
        out_shape=jax.ShapeDtypeStruct((M, D), out_dtype),
        grid=(M // tm,),
        in_specs=[row, vec, vec],
        out_specs=row,
        compiler_params=pltpu.CompilerParams(dimension_semantics=("parallel",)),
    )(x, gamma.reshape(1, D), beta.reshape(1, D))


# ----------------------------- model assembly --------------------------------

def decoder_layer(x2, p, num_heads, B, S):
    """x2: (B*S, D) bf16 activation slab -> (B*S, D) bf16."""
    D = x2.shape[-1]
    dh = D // num_heads

    qkv = linear(x2, p["attn"]["wqkv"], p["attn"]["bqkv"])          # (B*S, 3D) bf16
    q, k, v = jnp.split(qkv, 3, axis=-1)
    # TODO(synk): head split/merge kept as XLA reshapes/transposes (bf16, memory-bound glue).
    def heads(t):
        return t.reshape(B, S, num_heads, dh).transpose(0, 2, 1, 3)  # (B, H, S, dh)

    ctx = attention(heads(q), heads(k), heads(v))                    # (B, H, S, dh)
    ctx = ctx.transpose(0, 2, 1, 3).reshape(B * S, D)

    # out-proj + residual + LayerNorm fused into one kernel epilogue.
    x2 = linear_add_layernorm(ctx, p["attn"]["wo"], p["attn"]["bo"],
                              residual=x2, gamma=p["ln1_g"], beta=p["ln1_b"])

    h = linear(x2, p["ff"]["w1"], p["ff"]["b1"], activation="gelu")
    # down-proj + residual + LayerNorm fused.
    x2 = linear_add_layernorm(h, p["ff"]["w2"], p["ff"]["b2"],
                              residual=x2, gamma=p["ln2_g"], beta=p["ln2_b"])
    return x2


def create_positional_encoding(max_seq_len, d_model):
    # Faithfully reproduces the (quirky) reference formula:
    #   pe[pos, i]   = sin(pos / 10000 ** (2*i / d_model))
    #   pe[pos, i+1] = cos(pos / 10000 ** (2*i / d_model))   for even i
    pe = np.zeros((max_seq_len, d_model), dtype=np.float32)
    pos = np.arange(max_seq_len, dtype=np.float32)[:, None]
    i_even = np.arange(0, d_model, 2, dtype=np.float32)
    denom = np.power(10000.0, 2.0 * i_even / d_model)
    pe[:, 0::2] = np.sin(pos / denom)
    pe[:, 1::2] = np.cos(pos / denom)
    return jnp.asarray(pe)[None, :, :]  # (1, max_seq_len, d_model)


def gpt_forward(token_ids, params, *, num_heads):
    B, S = token_ids.shape
    # TODO(synk): embedding gather kept as XLA glue (jnp.take); a DMA-gather Pallas kernel
    # is not worthwhile at these sizes.
    emb = jnp.take(params["embedding"], token_ids, axis=0)              # (B, S, D) f32
    x = (emb + params["pos_enc"][:, :S, :]).astype(jnp.bfloat16)
    D = x.shape[-1]
    x2 = x.reshape(B * S, D)
    for layer_p in params["layers"]:
        x2 = decoder_layer(x2, layer_p, num_heads, B, S)
    x2 = layernorm(x2, params["ln_f_g"], params["ln_f_b"])
    logits = linear(x2, params["w_out"], params["b_out"],
                    out_dtype=jnp.float32)                              # (B*S, vocab)
    return logits.reshape(B, S, -1)


# ----------------------------- parameter init --------------------------------

def init_params(key, vocab_size, d_model, num_heads, num_layers, hidden_dim, max_seq_len):
    keys = iter(jax.random.split(key, 2 + 6 * num_layers))

    def w(shape):
        return 0.02 * jax.random.normal(next(keys), shape, dtype=jnp.float32)

    dh = d_model // num_heads
    scale = 1.0 / math.sqrt(dh)

    params = {
        "embedding": w((vocab_size, d_model)),
        "pos_enc": create_positional_encoding(max_seq_len, d_model),
        "ln_f_g": jnp.ones((d_model,), jnp.float32),
        "ln_f_b": jnp.zeros((d_model,), jnp.float32),
        "w_out": w((d_model, vocab_size)).astype(jnp.bfloat16),
        "b_out": jnp.zeros((vocab_size,), jnp.float32),
        "layers": [],
    }
    for _ in range(num_layers):
        # Fused Q|K|V projection; 1/sqrt(d_head) folded into the Q columns (host-side, free).
        # (When porting real torch weights, fold the scale into W_q and b_q the same way.)
        wq = w((d_model, d_model)) * scale
        wk = w((d_model, d_model))
        wv = w((d_model, d_model))
        layer = {
            "attn": {
                "wqkv": jnp.concatenate([wq, wk, wv], axis=1).astype(jnp.bfloat16),
                "bqkv": jnp.zeros((3 * d_model,), jnp.float32),
                "wo": w((d_model, d_model)).astype(jnp.bfloat16),
                "bo": jnp.zeros((d_model,), jnp.float32),
            },
            "ff": {
                "w1": w((d_model, hidden_dim)).astype(jnp.bfloat16),
                "b1": jnp.zeros((hidden_dim,), jnp.float32),
                "w2": w((hidden_dim, d_model)).astype(jnp.bfloat16),
                "b2": jnp.zeros((d_model,), jnp.float32),
            },
            "ln1_g": jnp.ones((d_model,), jnp.float32),
            "ln1_b": jnp.zeros((d_model,), jnp.float32),
            "ln2_g": jnp.ones((d_model,), jnp.float32),
            "ln2_b": jnp.zeros((d_model,), jnp.float32),
        }
        params["layers"].append(layer)
    return params


# ----------------------------------- main -------------------------------------

if __name__ == "__main__":
    # Small, forward-consistent shapes.
    VOCAB = 512
    D_MODEL = 128
    NUM_LAYERS = 2
    NUM_HEADS = 4
    HIDDEN_DIM = 256
    MAX_SEQ_LEN = 16
    B, S = 2, 8

    key = jax.random.PRNGKey(0)
    pkey, xkey = jax.random.split(key)
    params = init_params(pkey, VOCAB, D_MODEL, NUM_HEADS, NUM_LAYERS,
                         HIDDEN_DIM, MAX_SEQ_LEN)
    token_ids = jax.random.randint(xkey, (B, S), 0, VOCAB, dtype=jnp.int32)

    fwd = jax.jit(functools.partial(gpt_forward, num_heads=NUM_HEADS))
    logits = jax.block_until_ready(fwd(token_ids, params))

    assert logits.shape == (B, S, VOCAB), logits.shape
    assert bool(jnp.all(jnp.isfinite(logits)))
    print("KERNEL_OK")
</pallas_src>

<mosaic_0001>
module attributes {stable_mosaic.version = 11 : i64} {
  func.func @_linear_kernel(%arg0: i32, %arg1: i32, %arg2: i32, %arg3: memref<16x128xbf16, #tpu.memory_space<vmem>>, %arg4: memref<128x128xbf16, #tpu.memory_space<vmem>>, %arg5: memref<1x128xf32, #tpu.memory_space<vmem>>, %arg6: memref<16x128xbf16, #tpu.memory_space<vmem>>, %arg7: memref<16x128xf32, #tpu.memory_space<vmem>>) attributes {dimension_semantics = [#tpu.dimension_semantics<parallel>, #tpu.dimension_semantics<parallel>, #tpu.dimension_semantics<arbitrary>], iteration_bounds = array<i64: 1, 3, 1>, scalar_prefetch = 0 : i64, scratch_operands = 1 : i64, tpu.core_type = #tpu.core_type<tc>, window_params = [{transform_indices = @transform_0, window_bounds = array<i64: 16, 128>}, {transform_indices = @transform_1, window_bounds = array<i64: 128, 128>}, {transform_indices = @transform_2, window_bounds = array<i64: 1, 128>}, {transform_indices = @transform_3, window_bounds = array<i64: 16, 128>}]} {
    %c0_i32 = arith.constant 0 : i32
    %0 = arith.cmpi eq, %arg2, %c0_i32 : i32
    %1 = arith.extui %0 : i1 to i32
    %c0_i32_0 = arith.constant 0 : i32
    %2 = arith.cmpi ne, %1, %c0_i32_0 : i32
    scf.if %2 {
      %cst_10 = arith.constant 0.000000e+00 : f32
      %12 = vector.broadcast %cst_10 : f32 to vector<16x128xf32>
      %c0_11 = arith.constant 0 : index
      %c0_12 = arith.constant 0 : index
      %13 = vector.load %arg7[%c0_11, %c0_12] : memref<16x128xf32, #tpu.memory_space<vmem>>, vector<16x128xf32>
      tpu.vector_store %arg7[%c0_11, %c0_12], %12 {strides = array<i32>} : memref<16x128xf32, #tpu.memory_space<vmem>>, vector<16x128xf32>,
    } else {
    }
    %c0 = arith.constant 0 : index
    %c0_1 = arith.constant 0 : index
    %3 = vector.load %arg7[%c0, %c0_1] : memref<16x128xf32, #tpu.memory_space<vmem>>, vector<16x128xf32>
    %c0_2 = arith.constant 0 : index
    %c0_3 = arith.constant 0 : index
    %4 = vector.load %arg3[%c0_2, %c0_3] : memref<16x128xbf16, #tpu.memory_space<vmem>>, vector<16x128xbf16>
    %c0_4 = arith.constant 0 : index
    %c0_5 = arith.constant 0 : index
    %5 = vector.load %arg4[%c0_4, %c0_5] : memref<128x128xbf16, #tpu.memory_space<vmem>>, vector<128x128xbf16>
    %cst = arith.constant dense<0.000000e+00> : vector<16x128xf32>
    %6 = tpu.matmul %4, %5, %cst {dimension_numbers = #tpu.dot_dimension_numbers<[1], [0], [0], [1], [0, 0, 1, 1], [], []>} : vector<16x128xbf16>, vector<128x128xbf16>, vector<16x128xf32> -> vector<16x128xf32>
    %7 = arith.addf %3, %6 : vector<16x128xf32>
    %c0_6 = arith.constant 0 : index
    %c0_7 = arith.constant 0 : index
    %8 = vector.load %arg7[%c0_6, %c0_7] : memref<16x128xf32, #tpu.memory_space<vmem>>, vector<16x128xf32>
    tpu.vector_store %arg7[%c0_6, %c0_7], %7 {strides = array<i32>} : memref<16x128xf32, #tpu.memory_space<vmem>>, vector<16x128xf32>,
    %c0_i32_8 = arith.constant 0 : i32
    %9 = arith.cmpi eq, %arg2, %c0_i32_8 : i32
    %10 = arith.extui %9 : i1 to i32
    %c0_i32_9 = arith.constant 0 : i32
    %11 = arith.cmpi ne, %10, %c0_i32_9 : i32
    scf.if %11 {
      %c0_10 = arith.constant 0 : index
      %c0_11 = arith.constant 0 : index
      %12 = vector.load %arg7[%c0_10, %c0_11] : memref<16x128xf32, #tpu.memory_space<vmem>>, vector<16x128xf32>
      %c0_12 = arith.constant 0 : index
      %c0_13 = arith.constant 0 : index
      %13 = vector.load %arg5[%c0_12, %c0_13] : memref<1x128xf32, #tpu.memory_space<vmem>>, vector<1x128xf32>
      %14 = vector.broadcast %13 : vector<1x128xf32> to vector<16x128xf32>
      %15 = arith.addf %12, %14 : vector<16x128xf32>
      %16 = arith.truncf %15 : vector<16x128xf32> to vector<16x128xbf16>
      %c0_14 = arith.constant 0 : index
      %c0_15 = arith.constant 0 : index
      %17 = vector.load %arg6[%c0_14, %c0_15] : memref<16x128xbf16, #tpu.memory_space<vmem>>, vector<16x128xbf16>
      tpu.vector_store %arg6[%c0_14, %c0_15], %16 {strides = array<i32>} : memref<16x128xbf16, #tpu.memory_space<vmem>>, vector<16x128xbf16>,
    } else {
    }
    return
  }
  func.func @transform_0(%arg0: i32, %arg1: i32, %arg2: i32) -> (i32, i32) {
    %c0_i32 = arith.constant 0 : i32
    return %arg0, %arg2 : i32, i32
  }
  func.func @transform_1(%arg0: i32, %arg1: i32, %arg2: i32) -> (i32, i32) {
    %c0_i32 = arith.constant 0 : i32
    return %arg2, %arg1 : i32, i32
  }
  func.func @transform_2(%arg0: i32, %arg1: i32, %arg2: i32) -> (i32, i32) {
    %c0_i32 = arith.constant 0 : i32
    %c0_i32_0 = arith.constant 0 : i32
    return %c0_i32, %arg1 : i32, i32
  }
  func.func @transform_3(%arg0: i32, %arg1: i32, %arg2: i32) -> (i32, i32) {
    %c0_i32 = arith.constant 0 : i32
    return %arg0, %arg1 : i32, i32
  }
}

module attributes {stable_mosaic.version = 11 : i64} {
  func.func @_attention_kernel(%arg0: i32, %arg1: i32, %arg2: i32, %arg3: memref<1x1x8x32xbf16, #tpu.memory_space<vmem>>, %arg4: memref<1x1x8x32xbf16, #tpu.memory_space<vmem>>, %arg5: memref<1x1x8x32xbf16, #tpu.memory_space<vmem>>, %arg6: memref<1x1x8x32xbf16, #tpu.memory_space<vmem>>) attributes {dimension_semantics = [#tpu.dimension_semantics<parallel>, #tpu.dimension_semantics<parallel>, #tpu.dimension_semantics<parallel>], iteration_bounds = array<i64: 2, 4, 1>, scalar_prefetch = 0 : i64, scratch_operands = 0 : i64, tpu.core_type = #tpu.core_type<tc>, window_params = [{transform_indices = @transform_0, window_bounds = array<i64: 1, 1, 8, 32>}, {transform_indices = @transform_1, window_bounds = array<i64: 1, 1, 8, 32>}, {transform_indices = @transform_2, window_bounds = array<i64: 1, 1, 8, 32>}, {transform_indices = @transform_3, window_bounds = array<i64: 1, 1, 8, 32>}]} {
    %c0 = arith.constant 0 : index
    %c0_0 = arith.constant 0 : index
    %c0_1 = arith.constant 0 : index
    %c0_2 = arith.constant 0 : index
    %0 = vector.load %arg3[%c0, %c0_0, %c0_1, %c0_2] : memref<1x1x8x32xbf16, #tpu.memory_space<vmem>>, vector<1x1x8x32xbf16>
    %1 = vector.shape_cast %0 : vector<1x1x8x32xbf16> to vector<8x32xbf16>
    %c0_3 = arith.constant 0 : index
    %c0_4 = arith.constant 0 : index
    %c0_5 = arith.constant 0 : index
    %c0_6 = arith.constant 0 : index
    %2 = vector.load %arg4[%c0_3, %c0_4, %c0_5, %c0_6] : memref<1x1x8x32xbf16, #tpu.memory_space<vmem>>, vector<1x1x8x32xbf16>
    %3 = vector.shape_cast %2 : vector<1x1x8x32xbf16> to vector<8x32xbf16>
    %c0_7 = arith.constant 0 : index
    %c0_8 = arith.constant 0 : index
    %c0_9 = arith.constant 0 : index
    %c0_10 = arith.constant 0 : index
    %4 = vector.load %arg5[%c0_7, %c0_8, %c0_9, %c0_10] : memref<1x1x8x32xbf16, #tpu.memory_space<vmem>>, vector<1x1x8x32xbf16>
    %5 = vector.shape_cast %4 : vector<1x1x8x32xbf16> to vector<8x32xbf16>
    %cst = arith.constant dense<0.000000e+00> : vector<8x8xf32>
    %6 = tpu.matmul %1, %3, %cst {dimension_numbers = #tpu.dot_dimension_numbers<[1], [1], [0], [0], [0, 0, 1, 0], [], []>} : vector<8x32xbf16>, vector<8x32xbf16>, vector<8x8xf32> -> vector<8x8xf32>
    %cst_11 = arith.constant dense<0xFF800000> : vector<8xf32>
    %7 = vector.multi_reduction <maximumf>, %6, %cst_11 [1] : vector<8x8xf32> to vector<8xf32>
    %8 = vector.shape_cast %7 : vector<8xf32> to vector<8x1xf32>
    %9 = vector.broadcast %8 : vector<8x1xf32> to vector<8x8xf32>
    %10 = arith.subf %6, %9 : vector<8x8xf32>
    %11 = math.exp %10 : vector<8x8xf32>
    %cst_12 = arith.constant dense<0.000000e+00> : vector<8xf32>
    %12 = vector.multi_reduction <add>, %11, %cst_12 [1] : vector<8x8xf32> to vector<8xf32>
    %13 = vector.shape_cast %12 : vector<8xf32> to vector<8x1xf32>
    %14 = arith.truncf %11 : vector<8x8xf32> to vector<8x8xbf16>
    %cst_13 = arith.constant dense<0.000000e+00> : vector<8x32xf32>
    %15 = tpu.matmul %14, %5, %cst_13 {dimension_numbers = #tpu.dot_dimension_numbers<[1], [0], [0], [1], [0, 0, 1, 1], [], []>} : vector<8x8xbf16>, vector<8x32xbf16>, vector<8x32xf32> -> vector<8x32xf32>
    %16 = tpu.reciprocal %13 {approx = true} : vector<8x1xf32> -> vector<8x1xf32>
    %17 = vector.broadcast %16 : vector<8x1xf32> to vector<8x32xf32>
    %18 = arith.mulf %15, %17 : vector<8x32xf32>
    %19 = arith.truncf %18 : vector<8x32xf32> to vector<8x32xbf16>
    %c0_14 = arith.constant 0 : index
    %c0_15 = arith.constant 0 : index
    %c0_16 = arith.constant 0 : index
    %c0_17 = arith.constant 0 : index
    %20 = vector.load %arg6[%c0_14, %c0_15, %c0_16, %c0_17] : memref<1x1x8x32xbf16, #tpu.memory_space<vmem>>, vector<1x1x8x32xbf16>
    %21 = vector.shape_cast %20 : vector<1x1x8x32xbf16> to vector<8x32xbf16>
    %22 = vector.shape_cast %19 : vector<8x32xbf16> to vector<1x1x8x32xbf16>
    tpu.vector_store %arg6[%c0_14, %c0_15, %c0_16, %c0_17], %22 {strides = array<i32>} : memref<1x1x8x32xbf16, #tpu.memory_space<vmem>>, vector<1x1x8x32xbf16>,
    return
  }
  func.func @transform_0(%arg0: i32, %arg1: i32, %arg2: i32) -> (i32, i32, i32, i32) {
    %c0_i32 = arith.constant 0 : i32
    %c0_i32_0 = arith.constant 0 : i32
    return %arg0, %arg1, %arg2, %c0_i32 : i32, i32, i32, i32
  }
  func.func @transform_1(%arg0: i32, %arg1: i32, %arg2: i32) -> (i32, i32, i32, i32) {
    %c0_i32 = arith.constant 0 : i32
    %c0_i32_0 = arith.constant 0 : i32
    %c0_i32_1 = arith.constant 0 : i32
    return %arg0, %arg1, %c0_i32, %c0_i32_0 : i32, i32, i32, i32
  }
  func.func @transform_2(%arg0: i32, %arg1: i32, %arg2: i32) -> (i32, i32, i32, i32) {
    %c0_i32 = arith.constant 0 : i32
    %c0_i32_0 = arith.constant 0 : i32
    %c0_i32_1 = arith.constant 0 : i32
    return %arg0, %arg1, %c0_i32, %c0_i32_0 : i32, i32, i32, i32
  }
  func.func @transform_3(%arg0: i32, %arg1: i32, %arg2: i32) -> (i32, i32, i32, i32) {
    %c0_i32 = arith.constant 0 : i32
    %c0_i32_0 = arith.constant 0 : i32
    return %arg0, %arg1, %arg2, %c0_i32 : i32, i32, i32, i32
  }
}

module attributes {stable_mosaic.version = 11 : i64} {
  func.func @_linear_add_ln_kernel(%arg0: i32, %arg1: i32, %arg2: memref<16x128xbf16, #tpu.memory_space<vmem>>, %arg3: memref<128x128xbf16, #tpu.memory_space<vmem>>, %arg4: memref<1x128xf32, #tpu.memory_space<vmem>>, %arg5: memref<16x128xbf16, #tpu.memory_space<vmem>>, %arg6: memref<1x128xf32, #tpu.memory_space<vmem>>, %arg7: memref<1x128xf32, #tpu.memory_space<vmem>>, %arg8: memref<16x128xbf16, #tpu.memory_space<vmem>>, %arg9: memref<16x128xf32, #tpu.memory_space<vmem>>) attributes {dimension_semantics = [#tpu.dimension_semantics<parallel>, #tpu.dimension_semantics<arbitrary>], iteration_bounds = array<i64: 1, 1>, scalar_prefetch = 0 : i64, scratch_operands = 1 : i64, tpu.core_type = #tpu.core_type<tc>, window_params = [{transform_indices = @transform_0, window_bounds = array<i64: 16, 128>}, {transform_indices = @transform_1, window_bounds = array<i64: 128, 128>}, {pipeline_mode = #tpu.pipeline_mode<synchronous>, transform_indices = @transform_2, window_bounds = array<i64: 1, 128>}, {transform_indices = @transform_3, window_bounds = array<i64: 16, 128>}, {pipeline_mode = #tpu.pipeline_mode<synchronous>, transform_indices = @transform_4, window_bounds = array<i64: 1, 128>}, {pipeline_mode = #tpu.pipeline_mode<synchronous>, transform_indices = @transform_5, window_bounds = array<i64: 1, 128>}, {transform_indices = @transform_6, window_bounds = array<i64: 16, 128>}]} {
    %c0_i32 = arith.constant 0 : i32
    %0 = arith.cmpi eq, %arg1, %c0_i32 : i32
    %1 = arith.extui %0 : i1 to i32
    %c0_i32_0 = arith.constant 0 : i32
    %2 = arith.cmpi ne, %1, %c0_i32_0 : i32
    scf.if %2 {
      %cst_10 = arith.constant 0.000000e+00 : f32
      %12 = vector.broadcast %cst_10 : f32 to vector<16x128xf32>
      %c0_11 = arith.constant 0 : index
      %c0_12 = arith.constant 0 : index
      %13 = vector.load %arg9[%c0_11, %c0_12] : memref<16x128xf32, #tpu.memory_space<vmem>>, vector<16x128xf32>
      tpu.vector_store %arg9[%c0_11, %c0_12], %12 {strides = array<i32>} : memref<16x128xf32, #tpu.memory_space<vmem>>, vector<16x128xf32>,
    } else {
    }
    %c0 = arith.constant 0 : index
    %c0_1 = arith.constant 0 : index
    %3 = vector.load %arg9[%c0, %c0_1] : memref<16x128xf32, #tpu.memory_space<vmem>>, vector<16x128xf32>
    %c0_2 = arith.constant 0 : index
    %c0_3 = arith.constant 0 : index
    %4 = vector.load %arg2[%c0_2, %c0_3] : memref<16x128xbf16, #tpu.memory_space<vmem>>, vector<16x128xbf16>
    %c0_4 = arith.constant 0 : index
    %c0_5 = arith.constant 0 : index
    %5 = vector.load %arg3[%c0_4, %c0_5] : memref<128x128xbf16, #tpu.memory_space<vmem>>, vector<128x128xbf16>
    %cst = arith.constant dense<0.000000e+00> : vector<16x128xf32>
    %6 = tpu.matmul %4, %5, %cst {dimension_numbers = #tpu.dot_dimension_numbers<[1], [0], [0], [1], [0, 0, 1, 1], [], []>} : vector<16x128xbf16>, vector<128x128xbf16>, vector<16x128xf32> -> vector<16x128xf32>
    %7 = arith.addf %3, %6 : vector<16x128xf32>
    %c0_6 = arith.constant 0 : index
    %c0_7 = arith.constant 0 : index
    %8 = vector.load %arg9[%c0_6, %c0_7] : memref<16x128xf32, #tpu.memory_space<vmem>>, vector<16x128xf32>
    tpu.vector_store %arg9[%c0_6, %c0_7], %7 {strides = array<i32>} : memref<16x128xf32, #tpu.memory_space<vmem>>, vector<16x128xf32>,
    %c0_i32_8 = arith.constant 0 : i32
    %9 = arith.cmpi eq, %arg1, %c0_i32_8 : i32
    %10 = arith.extui %9 : i1 to i32
    %c0_i32_9 = arith.constant 0 : i32
    %11 = arith.cmpi ne, %10, %c0_i32_9 : i32
    scf.if %11 {
      %c0_10 = arith.constant 0 : index
      %c0_11 = arith.constant 0 : index
      %12 = vector.load %arg9[%c0_10, %c0_11] : memref<16x128xf32, #tpu.memory_space<vmem>>, vector<16x128xf32>
      %c0_12 = arith.constant 0 : index
      %c0_13 = arith.constant 0 : index
      %13 = vector.load %arg4[%c0_12, %c0_13] : memref<1x128xf32, #tpu.memory_space<vmem>>, vector<1x128xf32>
      %14 = vector.broadcast %13 : vector<1x128xf32> to vector<16x128xf32>
      %15 = arith.addf %12, %14 : vector<16x128xf32>
      %c0_14 = arith.constant 0 : index
      %c0_15 = arith.constant 0 : index
      %16 = vector.load %arg5[%c0_14, %c0_15] : memref<16x128xbf16, #tpu.memory_space<vmem>>, vector<16x128xbf16>
      %17 = arith.extf %16 : vector<16x128xbf16> to vector<16x128xf32>
      %18 = arith.addf %15, %17 : vector<16x128xf32>
      %cst_16 = arith.constant dense<0.000000e+00> : vector<16xf32>
      %19 = vector.multi_reduction <add>, %18, %cst_16 [1] : vector<16x128xf32> to vector<16xf32>
      %20 = vector.shape_cast %19 : vector<16xf32> to vector<16x1xf32>
      %cst_17 = arith.constant 1.280000e+02 : f32
      %21 = vector.broadcast %cst_17 : f32 to vector<16x1xf32>
      %22 = arith.divf %20, %21 : vector<16x1xf32>
      %23 = vector.broadcast %22 : vector<16x1xf32> to vector<16x128xf32>
      %24 = arith.subf %18, %23 : vector<16x128xf32>
      %25 = vector.broadcast %22 : vector<16x1xf32> to vector<16x128xf32>
      %26 = arith.subf %18, %25 : vector<16x128xf32>
      %27 = arith.mulf %24, %26 : vector<16x128xf32>
      %cst_18 = arith.constant dense<0.000000e+00> : vector<16xf32>
      %28 = vector.multi_reduction <add>, %27, %cst_18 [1] : vector<16x128xf32> to vector<16xf32>
      %29 = vector.shape_cast %28 : vector<16xf32> to vector<16x1xf32>
      %cst_19 = arith.constant 1.280000e+02 : f32
      %30 = vector.broadcast %cst_19 : f32 to vector<16x1xf32>
      %31 = arith.divf %29, %30 : vector<16x1xf32>
      %32 = vector.broadcast %22 : vector<16x1xf32> to vector<16x128xf32>
      %33 = arith.subf %18, %32 : vector<16x128xf32>
      %cst_20 = arith.constant 9.99999974E-6 : f32
      %34 = vector.broadcast %cst_20 : f32 to vector<16x1xf32>
      %35 = arith.addf %31, %34 : vector<16x1xf32>
      %36 = math.rsqrt %35 : vector<16x1xf32>
      %37 = vector.broadcast %36 : vector<16x1xf32> to vector<16x128xf32>
      %38 = arith.mulf %33, %37 : vector<16x128xf32>
      %c0_21 = arith.constant 0 : index
      %c0_22 = arith.constant 0 : index
      %39 = vector.load %arg6[%c0_21, %c0_22] : memref<1x128xf32, #tpu.memory_space<vmem>>, vector<1x128xf32>
      %40 = vector.broadcast %39 : vector<1x128xf32> to vector<16x128xf32>
      %41 = arith.mulf %38, %40 : vector<16x128xf32>
      %c0_23 = arith.constant 0 : index
      %c0_24 = arith.constant 0 : index
      %42 = vector.load %arg7[%c0_23, %c0_24] : memref<1x128xf32, #tpu.memory_space<vmem>>, vector<1x128xf32>
      %43 = vector.broadcast %42 : vector<1x128xf32> to vector<16x128xf32>
      %44 = arith.addf %41, %43 : vector<16x128xf32>
      %45 = arith.truncf %44 : vector<16x128xf32> to vector<16x128xbf16>
      %c0_25 = arith.constant 0 : index
      %c0_26 = arith.constant 0 : index
      %46 = vector.load %arg8[%c0_25, %c0_26] : memref<16x128xbf16, #tpu.memory_space<vmem>>, vector<16x128xbf16>
      tpu.vector_store %arg8[%c0_25, %c0_26], %45 {strides = array<i32>} : memref<16x128xbf16, #tpu.memory_space<vmem>>, vector<16x128xbf16>,
    } else {
    }
    return
  }
  func.func @transform_0(%arg0: i32, %arg1: i32) -> (i32, i32) {
    %c0_i32 = arith.constant 0 : i32
    return %arg0, %arg1 : i32, i32
  }
  func.func @transform_1(%arg0: i32, %arg1: i32) -> (i32, i32) {
    %c0_i32 = arith.constant 0 : i32
    %c0_i32_0 = arith.constant 0 : i32
    return %arg1, %c0_i32 : i32, i32
  }
  func.func @transform_2(%arg0: i32, %arg1: i32) -> (i32, i32) {
    %c0_i32 = arith.constant 0 : i32
    %c0_i32_0 = arith.constant 0 : i32
    %c0_i32_1 = arith.constant 0 : i32
    return %c0_i32, %c0_i32_0 : i32, i32
  }
  func.func @transform_3(%arg0: i32, %arg1: i32) -> (i32, i32) {
    %c0_i32 = arith.constant 0 : i32
    %c0_i32_0 = arith.constant 0 : i32
    return %arg0, %c0_i32 : i32, i32
  }
  func.func @transform_4(%arg0: i32, %arg1: i32) -> (i32, i32) {
    %c0_i32 = arith.constant 0 : i32
    %c0_i32_0 = arith.constant 0 : i32
    %c0_i32_1 = arith.constant 0 : i32
    return %c0_i32, %c0_i32_0 : i32, i32
  }
  func.func @transform_5(%arg0: i32, %arg1: i32) -> (i32, i32) {
    %c0_i32 = arith.constant 0 : i32
    %c0_i32_0 = arith.constant 0 : i32
    %c0_i32_1 = arith.constant 0 : i32
    return %c0_i32, %c0_i32_0 : i32, i32
  }
  func.func @transform_6(%arg0: i32, %arg1: i32) -> (i32, i32) {
    %c0_i32 = arith.constant 0 : i32
    %c0_i32_0 = arith.constant 0 : i32
    return %arg0, %c0_i32 : i32, i32
  }
}

module attributes {stable_mosaic.version = 11 : i64} {
  func.func @_linear_kernel(%arg0: i32, %arg1: i32, %arg2: i32, %arg3: memref<16x128xbf16, #tpu.memory_space<vmem>>, %arg4: memref<128x256xbf16, #tpu.memory_space<vmem>>, %arg5: memref<1x256xf32, #tpu.memory_space<vmem>>, %arg6: memref<16x256xbf16, #tpu.memory_space<vmem>>, %arg7: memref<16x256xf32, #tpu.memory_space<vmem>>) attributes {dimension_semantics = [#tpu.dimension_semantics<parallel>, #tpu.dimension_semantics<parallel>, #tpu.dimension_semantics<arbitrary>], iteration_bounds = array<i64: 1, 1, 1>, scalar_prefetch = 0 : i64, scratch_operands = 1 : i64, tpu.core_type = #tpu.core_type<tc>, window_params = [{transform_indices = @transform_0, window_bounds = array<i64: 16, 128>}, {transform_indices = @transform_1, window_bounds = array<i64: 128, 256>}, {transform_indices = @transform_2, window_bounds = array<i64: 1, 256>}, {transform_indices = @transform_3, window_bounds = array<i64: 16, 256>}]} {
    %c0_i32 = arith.constant 0 : i32
    %0 = arith.cmpi eq, %arg2, %c0_i32 : i32
    %1 = arith.extui %0 : i1 to i32
    %c0_i32_0 = arith.constant 0 : i32
    %2 = arith.cmpi ne, %1, %c0_i32_0 : i32
    scf.if %2 {
      %cst_10 = arith.constant 0.000000e+00 : f32
      %12 = vector.broadcast %cst_10 : f32 to vector<16x256xf32>
      %c0_11 = arith.constant 0 : index
      %c0_12 = arith.constant 0 : index
      %13 = vector.load %arg7[%c0_11, %c0_12] : memref<16x256xf32, #tpu.memory_space<vmem>>, vector<16x256xf32>
      tpu.vector_store %arg7[%c0_11, %c0_12], %12 {strides = array<i32>} : memref<16x256xf32, #tpu.memory_space<vmem>>, vector<16x256xf32>,
    } else {
    }
    %c0 = arith.constant 0 : index
    %c0_1 = arith.constant 0 : index
    %3 = vector.load %arg7[%c0, %c0_1] : memref<16x256xf32, #tpu.memory_space<vmem>>, vector<16x256xf32>
    %c0_2 = arith.constant 0 : index
    %c0_3 = arith.constant 0 : index
    %4 = vector.load %arg3[%c0_2, %c0_3] : memref<16x128xbf16, #tpu.memory_space<vmem>>, vector<16x128xbf16>
    %c0_4 = arith.constant 0 : index
    %c0_5 = arith.constant 0 : index
    %5 = vector.load %arg4[%c0_4, %c0_5] : memref<128x256xbf16, #tpu.memory_space<vmem>>, vector<128x256xbf16>
    %cst = arith.constant dense<0.000000e+00> : vector<16x256xf32>
    %6 = tpu.matmul %4, %5, %cst {dimension_numbers = #tpu.dot_dimension_numbers<[1], [0], [0], [1], [0, 0, 1, 1], [], []>} : vector<16x128xbf16>, vector<128x256xbf16>, vector<16x256xf32> -> vector<16x256xf32>
    %7 = arith.addf %3, %6 : vector<16x256xf32>
    %c0_6 = arith.constant 0 : index
    %c0_7 = arith.constant 0 : index
    %8 = vector.load %arg7[%c0_6, %c0_7] : memref<16x256xf32, #tpu.memory_space<vmem>>, vector<16x256xf32>
    tpu.vector_store %arg7[%c0_6, %c0_7], %7 {strides = array<i32>} : memref<16x256xf32, #tpu.memory_space<vmem>>, vector<16x256xf32>,
    %c0_i32_8 = arith.constant 0 : i32
    %9 = arith.cmpi eq, %arg2, %c0_i32_8 : i32
    %10 = arith.extui %9 : i1 to i32
    %c0_i32_9 = arith.constant 0 : i32
    %11 = arith.cmpi ne, %10, %c0_i32_9 : i32
    scf.if %11 {
      %c0_10 = arith.constant 0 : index
      %c0_11 = arith.constant 0 : index
      %12 = vector.load %arg7[%c0_10, %c0_11] : memref<16x256xf32, #tpu.memory_space<vmem>>, vector<16x256xf32>
      %c0_12 = arith.constant 0 : index
      %c0_13 = arith.constant 0 : index
      %13 = vector.load %arg5[%c0_12, %c0_13] : memref<1x256xf32, #tpu.memory_space<vmem>>, vector<1x256xf32>
      %14 = vector.broadcast %13 : vector<1x256xf32> to vector<16x256xf32>
      %15 = arith.addf %12, %14 : vector<16x256xf32>
      %cst_14 = arith.constant 5.000000e-01 : f32
      %16 = vector.broadcast %cst_14 : f32 to vector<16x256xf32>
      %17 = arith.mulf %16, %15 : vector<16x256xf32>
      %cst_15 = arith.constant 0.707106769 : f32
      %18 = vector.broadcast %cst_15 : f32 to vector<16x256xf32>
      %19 = arith.mulf %15, %18 : vector<16x256xf32>
      %20 = math.erf %19 : vector<16x256xf32>
      %cst_16 = arith.constant 1.000000e+00 : f32
      %21 = vector.broadcast %cst_16 : f32 to vector<16x256xf32>
      %22 = arith.addf %21, %20 : vector<16x256xf32>
      %23 = arith.mulf %17, %22 : vector<16x256xf32>
      %24 = arith.truncf %23 : vector<16x256xf32> to vector<16x256xbf16>
      %c0_17 = arith.constant 0 : index
      %c0_18 = arith.constant 0 : index
      %25 = vector.load %arg6[%c0_17, %c0_18] : memref<16x256xbf16, #tpu.memory_space<vmem>>, vector<16x256xbf16>
      tpu.vector_store %arg6[%c0_17, %c0_18], %24 {strides = array<i32>} : memref<16x256xbf16, #tpu.memory_space<vmem>>, vector<16x256xbf16>,
    } else {
    }
    return
  }
  func.func @transform_0(%arg0: i32, %arg1: i32, %arg2: i32) -> (i32, i32) {
    %c0_i32 = arith.constant 0 : i32
    return %arg0, %arg2 : i32, i32
  }
  func.func @transform_1(%arg0: i32, %arg1: i32, %arg2: i32) -> (i32, i32) {
    %c0_i32 = arith.constant 0 : i32
    return %arg2, %arg1 : i32, i32
  }
  func.func @transform_2(%arg0: i32, %arg1: i32, %arg2: i32) -> (i32, i32) {
    %c0_i32 = arith.constant 0 : i32
    %c0_i32_0 = arith.constant 0 : i32
    return %c0_i32, %arg1 : i32, i32
  }
  func.func @transform_3(%arg0: i32, %arg1: i32, %arg2: i32) -> (i32, i32) {
    %c0_i32 = arith.constant 0 : i32
    return %arg0, %arg1 : i32, i32
  }
}

module attributes {stable_mosaic.version = 11 : i64} {
  func.func @_layernorm_kernel(%arg0: i32, %arg1: memref<16x128xbf16, #tpu.memory_space<vmem>>, %arg2: memref<1x128xf32, #tpu.memory_space<vmem>>, %arg3: memref<1x128xf32, #tpu.memory_space<vmem>>, %arg4: memref<16x128xbf16, #tpu.memory_space<vmem>>) attributes {dimension_semantics = [#tpu.dimension_semantics<parallel>], iteration_bounds = array<i64: 1>, scalar_prefetch = 0 : i64, scratch_operands = 0 : i64, tpu.core_type = #tpu.core_type<tc>, window_params = [{transform_indices = @transform_0, window_bounds = array<i64: 16, 128>}, {pipeline_mode = #tpu.pipeline_mode<synchronous>, transform_indices = @transform_1, window_bounds = array<i64: 1, 128>}, {pipeline_mode = #tpu.pipeline_mode<synchronous>, transform_indices = @transform_2, window_bounds = array<i64: 1, 128>}, {transform_indices = @transform_3, window_bounds = array<i64: 16, 128>}]} {
    %c0 = arith.constant 0 : index
    %c0_0 = arith.constant 0 : index
    %0 = vector.load %arg1[%c0, %c0_0] : memref<16x128xbf16, #tpu.memory_space<vmem>>, vector<16x128xbf16>
    %1 = arith.extf %0 : vector<16x128xbf16> to vector<16x128xf32>
    %cst = arith.constant dense<0.000000e+00> : vector<16xf32>
    %2 = vector.multi_reduction <add>, %1, %cst [1] : vector<16x128xf32> to vector<16xf32>
    %3 = vector.shape_cast %2 : vector<16xf32> to vector<16x1xf32>
    %cst_1 = arith.constant 1.280000e+02 : f32
    %4 = vector.broadcast %cst_1 : f32 to vector<16x1xf32>
    %5 = arith.divf %3, %4 : vector<16x1xf32>
    %6 = vector.broadcast %5 : vector<16x1xf32> to vector<16x128xf32>
    %7 = arith.subf %1, %6 : vector<16x128xf32>
    %8 = vector.broadcast %5 : vector<16x1xf32> to vector<16x128xf32>
    %9 = arith.subf %1, %8 : vector<16x128xf32>
    %10 = arith.mulf %7, %9 : vector<16x128xf32>
    %cst_2 = arith.constant dense<0.000000e+00> : vector<16xf32>
    %11 = vector.multi_reduction <add>, %10, %cst_2 [1] : vector<16x128xf32> to vector<16xf32>
    %12 = vector.shape_cast %11 : vector<16xf32> to vector<16x1xf32>
    %cst_3 = arith.constant 1.280000e+02 : f32
    %13 = vector.broadcast %cst_3 : f32 to vector<16x1xf32>
    %14 = arith.divf %12, %13 : vector<16x1xf32>
    %15 = vector.broadcast %5 : vector<16x1xf32> to vector<16x128xf32>
    %16 = arith.subf %1, %15 : vector<16x128xf32>
    %cst_4 = arith.constant 9.99999974E-6 : f32
    %17 = vector.broadcast %cst_4 : f32 to vector<16x1xf32>
    %18 = arith.addf %14, %17 : vector<16x1xf32>
    %19 = math.rsqrt %18 : vector<16x1xf32>
    %20 = vector.broadcast %19 : vector<16x1xf32> to vector<16x128xf32>
    %21 = arith.mulf %16, %20 : vector<16x128xf32>
    %c0_5 = arith.constant 0 : index
    %c0_6 = arith.constant 0 : index
    %22 = vector.load %arg2[%c0_5, %c0_6] : memref<1x128xf32, #tpu.memory_space<vmem>>, vector<1x128xf32>
    %23 = vector.broadcast %22 : vector<1x128xf32> to vector<16x128xf32>
    %24 = arith.mulf %21, %23 : vector<16x128xf32>
    %c0_7 = arith.constant 0 : index
    %c0_8 = arith.constant 0 : index
    %25 = vector.load %arg3[%c0_7, %c0_8] : memref<1x128xf32, #tpu.memory_space<vmem>>, vector<1x128xf32>
    %26 = vector.broadcast %25 : vector<1x128xf32> to vector<16x128xf32>
    %27 = arith.addf %24, %26 : vector<16x128xf32>
    %28 = arith.truncf %27 : vector<16x128xf32> to vector<16x128xbf16>
    %c0_9 = arith.constant 0 : index
    %c0_10 = arith.constant 0 : index
    %29 = vector.load %arg4[%c0_9, %c0_10] : memref<16x128xbf16, #tpu.memory_space<vmem>>, vector<16x128xbf16>
    tpu.vector_store %arg4[%c0_9, %c0_10], %28 {strides = array<i32>} : memref<16x128xbf16, #tpu.memory_space<vmem>>, vector<16x128xbf16>,
    return
  }
  func.func @transform_0(%arg0: i32) -> (i32, i32) {
    %c0_i32 = arith.constant 0 : i32
    %c0_i32_0 = arith.constant 0 : i32
    return %arg0, %c0_i32 : i32, i32
  }
  func.func @transform_1(%arg0: i32) -> (i32, i32) {
    %c0_i32 = arith.constant 0 : i32
    %c0_i32_0 = arith.constant 0 : i32
    %c0_i32_1 = arith.constant 0 : i32
    return %c0_i32, %c0_i32_0 : i32, i32
  }
  func.func @transform_2(%arg0: i32) -> (i32, i32) {
    %c0_i32 = arith.constant 0 : i32
    %c0_i32_0 = arith.constant 0 : i32
    %c0_i32_1 = arith.constant 0 : i32
    return %c0_i32, %c0_i32_0 : i32, i32
  }
  func.func @transform_3(%arg0: i32) -> (i32, i32) {
    %c0_i32 = arith.constant 0 : i32
    %c0_i32_0 = arith.constant 0 : i32
    return %arg0, %c0_i32 : i32, i32
  }
}

module attributes {stable_mosaic.version = 11 : i64} {
  func.func @_linear_add_ln_kernel(%arg0: i32, %arg1: i32, %arg2: memref<16x256xbf16, #tpu.memory_space<vmem>>, %arg3: memref<256x128xbf16, #tpu.memory_space<vmem>>, %arg4: memref<1x128xf32, #tpu.memory_space<vmem>>, %arg5: memref<16x128xbf16, #tpu.memory_space<vmem>>, %arg6: memref<1x128xf32, #tpu.memory_space<vmem>>, %arg7: memref<1x128xf32, #tpu.memory_space<vmem>>, %arg8: memref<16x128xbf16, #tpu.memory_space<vmem>>, %arg9: memref<16x128xf32, #tpu.memory_space<vmem>>) attributes {dimension_semantics = [#tpu.dimension_semantics<parallel>, #tpu.dimension_semantics<arbitrary>], iteration_bounds = array<i64: 1, 1>, scalar_prefetch = 0 : i64, scratch_operands = 1 : i64, tpu.core_type = #tpu.core_type<tc>, window_params = [{transform_indices = @transform_0, window_bounds = array<i64: 16, 256>}, {transform_indices = @transform_1, window_bounds = array<i64: 256, 128>}, {pipeline_mode = #tpu.pipeline_mode<synchronous>, transform_indices = @transform_2, window_bounds = array<i64: 1, 128>}, {transform_indices = @transform_3, window_bounds = array<i64: 16, 128>}, {pipeline_mode = #tpu.pipeline_mode<synchronous>, transform_indices = @transform_4, window_bounds = array<i64: 1, 128>}, {pipeline_mode = #tpu.pipeline_mode<synchronous>, transform_indices = @transform_5, window_bounds = array<i64: 1, 128>}, {transform_indices = @transform_6, window_bounds = array<i64: 16, 128>}]} {
    %c0_i32 = arith.constant 0 : i32
    %0 = arith.cmpi eq, %arg1, %c0_i32 : i32
    %1 = arith.extui %0 : i1 to i32
    %c0_i32_0 = arith.constant 0 : i32
    %2 = arith.cmpi ne, %1, %c0_i32_0 : i32
    scf.if %2 {
      %cst_10 = arith.constant 0.000000e+00 : f32
      %12 = vector.broadcast %cst_10 : f32 to vector<16x128xf32>
      %c0_11 = arith.constant 0 : index
      %c0_12 = arith.constant 0 : index
      %13 = vector.load %arg9[%c0_11, %c0_12] : memref<16x128xf32, #tpu.memory_space<vmem>>, vector<16x128xf32>
      tpu.vector_store %arg9[%c0_11, %c0_12], %12 {strides = array<i32>} : memref<16x128xf32, #tpu.memory_space<vmem>>, vector<16x128xf32>,
    } else {
    }
    %c0 = arith.constant 0 : index
    %c0_1 = arith.constant 0 : index
    %3 = vector.load %arg9[%c0, %c0_1] : memref<16x128xf32, #tpu.memory_space<vmem>>, vector<16x128xf32>
    %c0_2 = arith.constant 0 : index
    %c0_3 = arith.constant 0 : index
    %4 = vector.load %arg2[%c0_2, %c0_3] : memref<16x256xbf16, #tpu.memory_space<vmem>>, vector<16x256xbf16>
    %c0_4 = arith.constant 0 : index
    %c0_5 = arith.constant 0 : index
    %5 = vector.load %arg3[%c0_4, %c0_5] : memref<256x128xbf16, #tpu.memory_space<vmem>>, vector<256x128xbf16>
    %cst = arith.constant dense<0.000000e+00> : vector<16x128xf32>
    %6 = tpu.matmul %4, %5, %cst {dimension_numbers = #tpu.dot_dimension_numbers<[1], [0], [0], [1], [0, 0, 1, 1], [], []>} : vector<16x256xbf16>, vector<256x128xbf16>, vector<16x128xf32> -> vector<16x128xf32>
    %7 = arith.addf %3, %6 : vector<16x128xf32>
    %c0_6 = arith.constant 0 : index
    %c0_7 = arith.constant 0 : index
    %8 = vector.load %arg9[%c0_6, %c0_7] : memref<16x128xf32, #tpu.memory_space<vmem>>, vector<16x128xf32>
    tpu.vector_store %arg9[%c0_6, %c0_7], %7 {strides = array<i32>} : memref<16x128xf32, #tpu.memory_space<vmem>>, vector<16x128xf32>,
    %c0_i32_8 = arith.constant 0 : i32
    %9 = arith.cmpi eq, %arg1, %c0_i32_8 : i32
    %10 = arith.extui %9 : i1 to i32
    %c0_i32_9 = arith.constant 0 : i32
    %11 = arith.cmpi ne, %10, %c0_i32_9 : i32
    scf.if %11 {
      %c0_10 = arith.constant 0 : index
      %c0_11 = arith.constant 0 : index
      %12 = vector.load %arg9[%c0_10, %c0_11] : memref<16x128xf32, #tpu.memory_space<vmem>>, vector<16x128xf32>
      %c0_12 = arith.constant 0 : index
      %c0_13 = arith.constant 0 : index
      %13 = vector.load %arg4[%c0_12, %c0_13] : memref<1x128xf32, #tpu.memory_space<vmem>>, vector<1x128xf32>
      %14 = vector.broadcast %13 : vector<1x128xf32> to vector<16x128xf32>
      %15 = arith.addf %12, %14 : vector<16x128xf32>
      %c0_14 = arith.constant 0 : index
      %c0_15 = arith.constant 0 : index
      %16 = vector.load %arg5[%c0_14, %c0_15] : memref<16x128xbf16, #tpu.memory_space<vmem>>, vector<16x128xbf16>
      %17 = arith.extf %16 : vector<16x128xbf16> to vector<16x128xf32>
      %18 = arith.addf %15, %17 : vector<16x128xf32>
      %cst_16 = arith.constant dense<0.000000e+00> : vector<16xf32>
      %19 = vector.multi_reduction <add>, %18, %cst_16 [1] : vector<16x128xf32> to vector<16xf32>
      %20 = vector.shape_cast %19 : vector<16xf32> to vector<16x1xf32>
      %cst_17 = arith.constant 1.280000e+02 : f32
      %21 = vector.broadcast %cst_17 : f32 to vector<16x1xf32>
      %22 = arith.divf %20, %21 : vector<16x1xf32>
      %23 = vector.broadcast %22 : vector<16x1xf32> to vector<16x128xf32>
      %24 = arith.subf %18, %23 : vector<16x128xf32>
      %25 = vector.broadcast %22 : vector<16x1xf32> to vector<16x128xf32>
      %26 = arith.subf %18, %25 : vector<16x128xf32>
      %27 = arith.mulf %24, %26 : vector<16x128xf32>
      %cst_18 = arith.constant dense<0.000000e+00> : vector<16xf32>
      %28 = vector.multi_reduction <add>, %27, %cst_18 [1] : vector<16x128xf32> to vector<16xf32>
      %29 = vector.shape_cast %28 : vector<16xf32> to vector<16x1xf32>
      %cst_19 = arith.constant 1.280000e+02 : f32
      %30 = vector.broadcast %cst_19 : f32 to vector<16x1xf32>
      %31 = arith.divf %29, %30 : vector<16x1xf32>
      %32 = vector.broadcast %22 : vector<16x1xf32> to vector<16x128xf32>
      %33 = arith.subf %18, %32 : vector<16x128xf32>
      %cst_20 = arith.constant 9.99999974E-6 : f32
      %34 = vector.broadcast %cst_20 : f32 to vector<16x1xf32>
      %35 = arith.addf %31, %34 : vector<16x1xf32>
      %36 = math.rsqrt %35 : vector<16x1xf32>
      %37 = vector.broadcast %36 : vector<16x1xf32> to vector<16x128xf32>
      %38 = arith.mulf %33, %37 : vector<16x128xf32>
      %c0_21 = arith.constant 0 : index
      %c0_22 = arith.constant 0 : index
      %39 = vector.load %arg6[%c0_21, %c0_22] : memref<1x128xf32, #tpu.memory_space<vmem>>, vector<1x128xf32>
      %40 = vector.broadcast %39 : vector<1x128xf32> to vector<16x128xf32>
      %41 = arith.mulf %38, %40 : vector<16x128xf32>
      %c0_23 = arith.constant 0 : index
      %c0_24 = arith.constant 0 : index
      %42 = vector.load %arg7[%c0_23, %c0_24] : memref<1x128xf32, #tpu.memory_space<vmem>>, vector<1x128xf32>
      %43 = vector.broadcast %42 : vector<1x128xf32> to vector<16x128xf32>
      %44 = arith.addf %41, %43 : vector<16x128xf32>
      %45 = arith.truncf %44 : vector<16x128xf32> to vector<16x128xbf16>
      %c0_25 = arith.constant 0 : index
      %c0_26 = arith.constant 0 : index
      %46 = vector.load %arg8[%c0_25, %c0_26] : memref<16x128xbf16, #tpu.memory_space<vmem>>, vector<16x128xbf16>
      tpu.vector_store %arg8[%c0_25, %c0_26], %45 {strides = array<i32>} : memref<16x128xbf16, #tpu.memory_space<vmem>>, vector<16x128xbf16>,
    } else {
    }
    return
  }
  func.func @transform_0(%arg0: i32, %arg1: i32) -> (i32, i32) {
    %c0_i32 = arith.constant 0 : i32
    return %arg0, %arg1 : i32, i32
  }
  func.func @transform_1(%arg0: i32, %arg1: i32) -> (i32, i32) {
    %c0_i32 = arith.constant 0 : i32
    %c0_i32_0 = arith.constant 0 : i32
    return %arg1, %c0_i32 : i32, i32
  }
  func.func @transform_2(%arg0: i32, %arg1: i32) -> (i32, i32) {
    %c0_i32 = arith.constant 0 : i32
    %c0_i32_0 = arith.constant 0 : i32
    %c0_i32_1 = arith.constant 0 : i32
    return %c0_i32, %c0_i32_0 : i32, i32
  }
  func.func @transform_3(%arg0: i32, %arg1: i32) -> (i32, i32) {
    %c0_i32 = arith.constant 0 : i32
    %c0_i32_0 = arith.constant 0 : i32
    return %arg0, %c0_i32 : i32, i32
  }
  func.func @transform_4(%arg0: i32, %arg1: i32) -> (i32, i32) {
    %c0_i32 = arith.constant 0 : i32
    %c0_i32_0 = arith.constant 0 : i32
    %c0_i32_1 = arith.constant 0 : i32
    return %c0_i32, %c0_i32_0 : i32, i32
  }
  func.func @transform_5(%arg0: i32, %arg1: i32) -> (i32, i32) {
    %c0_i32 = arith.constant 0 : i32
    %c0_i32_0 = arith.constant 0 : i32
    %c0_i32_1 = arith.constant 0 : i32
    return %c0_i32, %c0_i32_0 : i32, i32
  }
  func.func @transform_6(%arg0: i32, %arg1: i32) -> (i32, i32) {
    %c0_i32 = arith.constant 0 : i32
    %c0_i32_0 = arith.constant 0 : i32
    return %arg0, %c0_i32 : i32, i32
  }
}

module attributes {stable_mosaic.version = 11 : i64} {
  func.func @_linear_kernel(%arg0: i32, %arg1: i32, %arg2: i32, %arg3: memref<16x128xbf16, #tpu.memory_space<vmem>>, %arg4: memref<128x256xbf16, #tpu.memory_space<vmem>>, %arg5: memref<1x256xf32, #tpu.memory_space<vmem>>, %arg6: memref<16x256xf32, #tpu.memory_space<vmem>>, %arg7: memref<16x256xf32, #tpu.memory_space<vmem>>) attributes {dimension_semantics = [#tpu.dimension_semantics<parallel>, #tpu.dimension_semantics<parallel>, #tpu.dimension_semantics<arbitrary>], iteration_bounds = array<i64: 1, 2, 1>, scalar_prefetch = 0 : i64, scratch_operands = 1 : i64, tpu.core_type = #tpu.core_type<tc>, window_params = [{transform_indices = @transform_0, window_bounds = array<i64: 16, 128>}, {transform_indices = @transform_1, window_bounds = array<i64: 128, 256>}, {transform_indices = @transform_2, window_bounds = array<i64: 1, 256>}, {transform_indices = @transform_3, window_bounds = array<i64: 16, 256>}]} {
    %c0_i32 = arith.constant 0 : i32
    %0 = arith.cmpi eq, %arg2, %c0_i32 : i32
    %1 = arith.extui %0 : i1 to i32
    %c0_i32_0 = arith.constant 0 : i32
    %2 = arith.cmpi ne, %1, %c0_i32_0 : i32
    scf.if %2 {
      %cst_10 = arith.constant 0.000000e+00 : f32
      %12 = vector.broadcast %cst_10 : f32 to vector<16x256xf32>
      %c0_11 = arith.constant 0 : index
      %c0_12 = arith.constant 0 : index
      %13 = vector.load %arg7[%c0_11, %c0_12] : memref<16x256xf32, #tpu.memory_space<vmem>>, vector<16x256xf32>
      tpu.vector_store %arg7[%c0_11, %c0_12], %12 {strides = array<i32>} : memref<16x256xf32, #tpu.memory_space<vmem>>, vector<16x256xf32>,
    } else {
    }
    %c0 = arith.constant 0 : index
    %c0_1 = arith.constant 0 : index
    %3 = vector.load %arg7[%c0, %c0_1] : memref<16x256xf32, #tpu.memory_space<vmem>>, vector<16x256xf32>
    %c0_2 = arith.constant 0 : index
    %c0_3 = arith.constant 0 : index
    %4 = vector.load %arg3[%c0_2, %c0_3] : memref<16x128xbf16, #tpu.memory_space<vmem>>, vector<16x128xbf16>
    %c0_4 = arith.constant 0 : index
    %c0_5 = arith.constant 0 : index
    %5 = vector.load %arg4[%c0_4, %c0_5] : memref<128x256xbf16, #tpu.memory_space<vmem>>, vector<128x256xbf16>
    %cst = arith.constant dense<0.000000e+00> : vector<16x256xf32>
    %6 = tpu.matmul %4, %5, %cst {dimension_numbers = #tpu.dot_dimension_numbers<[1], [0], [0], [1], [0, 0, 1, 1], [], []>} : vector<16x128xbf16>, vector<128x256xbf16>, vector<16x256xf32> -> vector<16x256xf32>
    %7 = arith.addf %3, %6 : vector<16x256xf32>
    %c0_6 = arith.constant 0 : index
    %c0_7 = arith.constant 0 : index
    %8 = vector.load %arg7[%c0_6, %c0_7] : memref<16x256xf32, #tpu.memory_space<vmem>>, vector<16x256xf32>
    tpu.vector_store %arg7[%c0_6, %c0_7], %7 {strides = array<i32>} : memref<16x256xf32, #tpu.memory_space<vmem>>, vector<16x256xf32>,
    %c0_i32_8 = arith.constant 0 : i32
    %9 = arith.cmpi eq, %arg2, %c0_i32_8 : i32
    %10 = arith.extui %9 : i1 to i32
    %c0_i32_9 = arith.constant 0 : i32
    %11 = arith.cmpi ne, %10, %c0_i32_9 : i32
    scf.if %11 {
      %c0_10 = arith.constant 0 : index
      %c0_11 = arith.constant 0 : index
      %12 = vector.load %arg7[%c0_10, %c0_11] : memref<16x256xf32, #tpu.memory_space<vmem>>, vector<16x256xf32>
      %c0_12 = arith.constant 0 : index
      %c0_13 = arith.constant 0 : index
      %13 = vector.load %arg5[%c0_12, %c0_13] : memref<1x256xf32, #tpu.memory_space<vmem>>, vector<1x256xf32>
      %14 = vector.broadcast %13 : vector<1x256xf32> to vector<16x256xf32>
      %15 = arith.addf %12, %14 : vector<16x256xf32>
      %c0_14 = arith.constant 0 : index
      %c0_15 = arith.constant 0 : index
      %16 = vector.load %arg6[%c0_14, %c0_15] : memref<16x256xf32, #tpu.memory_space<vmem>>, vector<16x256xf32>
      tpu.vector_store %arg6[%c0_14, %c0_15], %15 {strides = array<i32>} : memref<16x256xf32, #tpu.memory_space<vmem>>, vector<16x256xf32>,
    } else {
    }
    return
  }
  func.func @transform_0(%arg0: i32, %arg1: i32, %arg2: i32) -> (i32, i32) {
    %c0_i32 = arith.constant 0 : i32
    return %arg0, %arg2 : i32, i32
  }
  func.func @transform_1(%arg0: i32, %arg1: i32, %arg2: i32) -> (i32, i32) {
    %c0_i32 = arith.constant 0 : i32
    return %arg2, %arg1 : i32, i32
  }
  func.func @transform_2(%arg0: i32, %arg1: i32, %arg2: i32) -> (i32, i32) {
    %c0_i32 = arith.constant 0 : i32
    %c0_i32_0 = arith.constant 0 : i32
    return %c0_i32, %arg1 : i32, i32
  }
  func.func @transform_3(%arg0: i32, %arg1: i32, %arg2: i32) -> (i32, i32) {
    %c0_i32 = arith.constant 0 : i32
    return %arg0, %arg1 : i32, i32
  }
}

</mosaic_0001>

<llo_original>
// kernel: gpt_forward.13
$region0: #{gpt_forward.13}
  #allocation0 [shape = 'u32[]', space=smem, size = 0x4, offset = 0x4, fixed_abs, tag = 'smem constant byte address 0x4 - core index']
  #allocation1 [shape = 'u32[144,128]{1,0:T(1,128)}', space=vmem, size = 0x12000, scoped, tag = 'internal scratch']
  %s0 = inlined_call_operand.vmem [shape: bf16[2,4,8,32], index: 0, kind: input, shape index: {}]
  %s1 = inlined_call_operand.vmem [shape: bf16[2,4,8,32], index: 1, kind: input, shape index: {}]
  %s2 = inlined_call_operand.vmem [shape: bf16[2,4,8,32], index: 2, kind: input, shape index: {}]
  %s3 = inlined_call_operand.vmem [shape: bf16[2,4,8,32], index: 3, kind: output, shape index: {}]
  %s4 = sld [smem:[#allocation0]]
  $region45: #{gpt_forward.13} parent=0
    _
  %s6 = ssub.s32 1, %s4
  %s7 = scalar_select 0, %s6, %s4
  loop: start=0, step=1, limit=10
  $region2: #{gpt_forward.13} parent=0 // loop_pre_header
    _
  $region3: #{gpt_forward.13} parent=0 // loop_header
    %s9 = sphi 0, %s13
    %p10 = scmp.ge.s32.totalorder %s9, 10
    %s16 = sphi 0, %s35
    %s17 = sphi 0, %s31
    %s18 = sphi 0, %s27
    %s19 = sphi 0, %s16
    %s20 = sphi 0, %s17
    %s21 = sphi 0, %s18
    %s22 = sphi 0, %s19
    %s23 = sphi 0, %s20
    %s24 = sphi 0, %s21
    %s42 = sphi 0, %s44
    %s45 = sphi 0, %s42
    %s46 = sphi 0, %s45
    %s62 = sphi 0, %s46
    %s70 = sphi 0, %s72
    %s73 = sphi 0, %s70
    %s74 = sphi 0, %s73
    %s90 = sphi 0, %s74
    %s98 = sphi 0, %s100
    %s101 = sphi 0, %s98
    %s102 = sphi 0, %s101
    %s118 = sphi 0, %s102
    %s128 = sphi 0, %s130
    %s131 = sphi 0, %s128
    %s132 = sphi 0, %s131
    %s148 = sphi 0, %s132
  $region4: #{gpt_forward.13} parent=0 // loop_header_branch
    %12 = sbr.rel (%p10) target = $region8
  $region5: #{gpt_forward.13} parent=0 // loop_body
    %s14 = ssub.s32 %s9, 1
    %s15 = ssub.s32 %s9, 2
    %s25 = sadd.s32 1, %s18
    %p26 = scmp.ge.s32.totalorder %s25, 1
    %s27 = scalar_select %p26, 0, %s25
    %s28 = sadd.s32 1, %s17
    %s29 = scalar_select %p26, %s28, %s17
    %p30 = scmp.ge.s32.totalorder %s29, 4
    %s31 = scalar_select %p30, 0, %s29
    %s32 = sadd.s32 1, %s16
    %s33 = scalar_select %p30, %s32, %s16
    %p34 = scmp.ge.s32.totalorder %s33, 2
    %s35 = scalar_select %p34, 0, %s33
    %s36 = ssub.s32 %s16, %s35
    %s37 = ssub.s32 %s17, %s31
    %s38 = sor.u32 %s36, %s37
    %s39 = ssub.s32 %s18, %s27
    %s40 = sor.u32 %s38, %s39
    %p41 = scmp.eq.s32.totalorder %s40, 0
    %s43 = sadd.s32 %s42, 1
    %s44 = scalar_select %p41, %s42, %s43
    %p47 = pneg %p41
    %p48 = scmp.eq.s32.totalorder %s9, 7
    %p49 = por %p47, %p48
    %p50 = scmp.ne.s32.totalorder %s42, %s45
    %p51 = scmp.eq.s32.totalorder %s9, 0
    %p52 = por %p50, %p51
    %p53 = scmp.ne.s32.totalorder %s42, %s45
    %p54 = scmp.eq.s32.totalorder %s14, 7
    %p55 = por %p53, %p54
    %p56 = scmp.ne.s32.totalorder %s45, %s46
    %p57 = scmp.eq.s32.totalorder %s14, 0
    %p58 = por %p56, %p57
    %p59 = scmp.ne.s32.totalorder %s45, %s46
    %p60 = scmp.eq.s32.totalorder %s15, 7
    %p61 = por %p59, %p60
    %p63 = scmp.ne.s32.totalorder %s46, %s62
    %p64 = scmp.eq.s32.totalorder %s15, 0
    %p65 = por %p63, %p64
    %s66 = ssub.s32 %s16, %s35
    %s67 = ssub.s32 %s17, %s31
    %s68 = sor.u32 %s66, %s67
    %p69 = scmp.eq.s32.totalorder %s68, 0
    %s71 = sadd.s32 %s70, 1
    %s72 = scalar_select %p69, %s70, %s71
    %p75 = pneg %p69
    %p76 = scmp.eq.s32.totalorder %s9, 7
    %p77 = por %p75, %p76
    %p78 = scmp.ne.s32.totalorder %s70, %s73
    %p79 = scmp.eq.s32.totalorder %s9, 0
    %p80 = por %p78, %p79
    %p81 = scmp.ne.s32.totalorder %s70, %s73
    %p82 = scmp.eq.s32.totalorder %s14, 7
    %p83 = por %p81, %p82
    %p84 = scmp.ne.s32.totalorder %s73, %s74
    %p85 = scmp.eq.s32.totalorder %s14, 0
    %p86 = por %p84, %p85
    %p87 = scmp.ne.s32.totalorder %s73, %s74
    %p88 = scmp.eq.s32.totalorder %s15, 7
    %p89 = por %p87, %p88
    %p91 = scmp.ne.s32.totalorder %s74, %s90
    %p92 = scmp.eq.s32.totalorder %s15, 0
    %p93 = por %p91, %p92
    %s94 = ssub.s32 %s16, %s35
    %s95 = ssub.s32 %s17, %s31
    %s96 = sor.u32 %s94, %s95
    %p97 = scmp.eq.s32.totalorder %s96, 0
    %s99 = sadd.s32 %s98, 1
    %s100 = scalar_select %p97, %s98, %s99
    %p103 = pneg %p97
    %p104 = scmp.eq.s32.totalorder %s9, 7
    %p105 = por %p103, %p104
    %p106 = scmp.ne.s32.totalorder %s98, %s101
    %p107 = scmp.eq.s32.totalorder %s9, 0
    %p108 = por %p106, %p107
    %p109 = scmp.ne.s32.totalorder %s98, %s101
    %p110 = scmp.eq.s32.totalorder %s14, 7
    %p111 = por %p109, %p110
    %p112 = scmp.ne.s32.totalorder %s101, %s102
    %p113 = scmp.eq.s32.totalorder %s14, 0
    %p114 = por %p112, %p113
    %p115 = scmp.ne.s32.totalorder %s101, %s102
    %p116 = scmp.eq.s32.totalorder %s15, 7
    %p117 = por %p115, %p116
    %p119 = scmp.ne.s32.totalorder %s102, %s118
    %p120 = scmp.eq.s32.totalorder %s15, 0
    %p121 = por %p119, %p120
    %s122 = ssub.s32 %s16, %s35
    %s123 = ssub.s32 %s17, %s31
    %s124 = sor.u32 %s122, %s123
    %s125 = ssub.s32 %s18, %s27
    %s126 = sor.u32 %s124, %s125
    %p127 = scmp.eq.s32.totalorder %s126, 0
    %s129 = sadd.s32 %s128, 1
    %s130 = scalar_select %p127, %s128, %s129
    %p133 = pneg %p127
    %p134 = scmp.eq.s32.totalorder %s9, 7
    %p135 = por %p133, %p134
    %p136 = scmp.ne.s32.totalorder %s128, %s131
    %p137 = scmp.eq.s32.totalorder %s9, 0
    %p138 = por %p136, %p137
    %p139 = scmp.ne.s32.totalorder %s128, %s131
    %p140 = scmp.eq.s32.totalorder %s14, 7
    %p141 = por %p139, %p140
    %p142 = scmp.ne.s32.totalorder %s131, %s132
    %p143 = scmp.eq.s32.totalorder %s14, 0
    %p144 = por %p142, %p143
    %p145 = scmp.ne.s32.totalorder %s131, %s132
    %p146 = scmp.eq.s32.totalorder %s15, 7
    %p147 = por %p145, %p146
    %p149 = scmp.ne.s32.totalorder %s132, %s148
    %p150 = scmp.eq.s32.totalorder %s15, 0
    %p151 = por %p149, %p150
    %p152 = scmp.le.s32.totalorder 1, %s9
    %p153 = scmp.lt.s32.totalorder %s9, 9
    %p154 = pnand %p152, %p153
    %p155 = pneg %p154
    // Predicated region
    $region9: #{gpt_forward.13} parent=5 // pred_check
      _
    $region10: #{gpt_forward.13} parent=5 // pred_check_branch
      %157 = sbr.rel (%p154) target = $region12
    $region11: #{gpt_forward.13} parent=5 // pred_region
      %s158 = ssub.s32 %s9, 1
    $region12: #{gpt_forward.13} parent=5 // pred_fallthru
      _
    %p159 = scmp.lt.s32.totalorder %s9, 8
    // Predicated region
    $region13: #{gpt_forward.13} parent=5 // pred_check
      %p160 = pneg %p159
    $region14: #{gpt_forward.13} parent=5 // pred_check_branch
      %162 = sbr.rel (%p160) target = $region16
    $region15: #{gpt_forward.13} parent=5 // pred_region
      // Predicated region
      $region17: #{gpt_forward.13} parent=15 // pred_check
        %p163 = pneg %p52
      $region18: #{gpt_forward.13} parent=15 // pred_check_branch
        %165 = sbr.rel (%p163) target = $region20
      $region19: #{gpt_forward.13} parent=15 // pred_region
        %p166 = scmp.lt.s32.totalorder %s16, 1
        %s167 = scalar_select %p166, %s16, 1
        %p168 = scmp.lt.s32.totalorder %s17, 3
        %s169 = scalar_select %p168, %s17, 3
        %p170 = scmp.lt.s32.totalorder %s18, 0
        %s171 = scalar_select %p170, %s18, 0
        %s172 = sadd.s32 %s171, %s169
        %s173 = smul.addr %s167, 4
        %s174 = sadd.s32 %s172, %s173
        %s175 = smul.addr %s174, 4
        %s176 = scalar_lea.vmem %s0, %s175
      $region20: #{gpt_forward.13} parent=15 // pred_fallthru
        _
      // Predicated region
      $region21: #{gpt_forward.13} parent=15 // pred_check
        %p177 = pneg %p80
      $region22: #{gpt_forward.13} parent=15 // pred_check_branch
        %179 = sbr.rel (%p177) target = $region24
      $region23: #{gpt_forward.13} parent=15 // pred_region
        %p180 = scmp.lt.s32.totalorder %s16, 1
        %s181 = scalar_select %p180, %s16, 1
        %p182 = scmp.lt.s32.totalorder %s17, 3
        %s183 = scalar_select %p182, %s17, 3
        %s184 = smul.addr %s181, 4
        %s185 = sadd.s32 %s183, %s184
        %s186 = smul.addr %s185, 4
        %s187 = scalar_lea.vmem %s1, %s186
      $region24: #{gpt_forward.13} parent=15 // pred_fallthru
        _
      // Predicated region
      $region25: #{gpt_forward.13} parent=15 // pred_check
        %p188 = pneg %p108
      $region26: #{gpt_forward.13} parent=15 // pred_check_branch
        %190 = sbr.rel (%p188) target = $region28
      $region27: #{gpt_forward.13} parent=15 // pred_region
        %p191 = scmp.lt.s32.totalorder %s16, 1
        %s192 = scalar_select %p191, %s16, 1
        %p193 = scmp.lt.s32.totalorder %s17, 3
        %s194 = scalar_select %p193, %s17, 3
        %s195 = smul.addr %s192, 4
        %s196 = sadd.s32 %s194, %s195
        %s197 = smul.addr %s196, 4
        %s198 = scalar_lea.vmem %s2, %s197
      $region28: #{gpt_forward.13} parent=15 // pred_fallthru
        _
    $region16: #{gpt_forward.13} parent=5 // pred_fallthru
      _
    %p199 = scmp.le.s32.totalorder 1, %s9
    %p200 = scmp.lt.s32.totalorder %s9, 9
    %p201 = pnand %p199, %p200
    %p202 = pneg %p201
    // Predicated region
    $region29: #{gpt_forward.13} parent=5 // pred_check
      _
    $region30: #{gpt_forward.13} parent=5 // pred_check_branch
      %204 = sbr.rel (%p201) target = $region32
    $region31: #{gpt_forward.13} parent=5 // pred_region
      %s205 = ssub.s32 %s9, 1
      %p206 = scmp.lt.s32.totalorder %s19, 1
      %s207 = scalar_select %p206, %s19, 1
      %p208 = scmp.lt.s32.totalorder %s20, 3
      %s209 = scalar_select %p208, %s20, 3
      %p210 = scmp.lt.s32.totalorder %s21, 0
      %s211 = scalar_select %p210, %s21, 0
      %s212 = sadd.s32 %s211, %s209
      %s213 = smul.addr %s207, 4
      %s214 = sadd.s32 %s212, %s213
      %s215 = smul.addr %s214, 4
      %s216 = scalar_lea.vmem %s0, %s215
      %p217 = pneg %p58
      %p218 = pneg %p55
      %p219 = scmp.lt.s32.totalorder %s19, 1
      %s220 = scalar_select %p219, %s19, 1
      %p221 = scmp.lt.s32.totalorder %s20, 3
      %s222 = scalar_select %p221, %s20, 3
      %s223 = smul.addr %s220, 4
      %s224 = sadd.s32 %s222, %s223
      %s225 = smul.addr %s224, 4
      %s226 = scalar_lea.vmem %s1, %s225
      %p227 = pneg %p86
      %p228 = pneg %p83
      %p229 = scmp.lt.s32.totalorder %s19, 1
      %s230 = scalar_select %p229, %s19, 1
      %p231 = scmp.lt.s32.totalorder %s20, 3
      %s232 = scalar_select %p231, %s20, 3
      %s233 = smul.addr %s230, 4
      %s234 = sadd.s32 %s232, %s233
      %s235 = smul.addr %s234, 4
      %s236 = scalar_lea.vmem %s2, %s235
      %p237 = pneg %p114
      %p238 = pneg %p111
      %p239 = pneg %p144
      %p240 = pneg %p141
      %p241 = scmp.lt.s32.totalorder %s19, 1
      %s242 = scalar_select %p241, %s19, 1
      %p243 = scmp.lt.s32.totalorder %s20, 3
      %s244 = scalar_select %p243, %s20, 3
      %p245 = scmp.lt.s32.totalorder %s21, 0
      %s246 = scalar_select %p245, %s21, 0
      %s247 = sadd.s32 %s246, %s244
      %s248 = smul.addr %s242, 4
      %s249 = sadd.s32 %s247, %s248
      %s250 = smul.addr %s249, 4
      %s251 = scalar_lea.vmem %s3, %s250
      %p252 = scmp.lt.s32.totalorder %s19, 1
      %s253 = scalar_select %p252, %s19, 1
      %p254 = scmp.lt.s32.totalorder %s20, 3
      %s255 = scalar_select %p254, %s20, 3
      %p256 = scmp.lt.s32.totalorder %s21, 0
      %s257 = scalar_select %p256, %s21, 0
      %s258 = sadd.s32 %s257, %s255
      %s259 = smul.addr %s253, 4
      %s260 = sadd.s32 %s258, %s259
      %s261 = smul.addr %s260, 4
      %s262 = scalar_lea.vmem %s0, %s261
      %p263 = scmp.lt.s32.totalorder %s19, 1
      %s264 = scalar_select %p263, %s19, 1
      %p265 = scmp.lt.s32.totalorder %s20, 3
      %s266 = scalar_select %p265, %s20, 3
      %s267 = smul.addr %s264, 4
      %s268 = sadd.s32 %s266, %s267
      %s269 = smul.addr %s268, 4
      %s270 = scalar_lea.vmem %s1, %s269
      %p271 = scmp.lt.s32.totalorder %s19, 1
      %s272 = scalar_select %p271, %s19, 1
      %p273 = scmp.lt.s32.totalorder %s20, 3
      %s274 = scalar_select %p273, %s20, 3
      %s275 = smul.addr %s272, 4
      %s276 = sadd.s32 %s274, %s275
      %s277 = smul.addr %s276, 4
      %s278 = scalar_lea.vmem %s2, %s277
      %p279 = scmp.lt.s32.totalorder %s19, 1
      %s280 = scalar_select %p279, %s19, 1
      %p281 = scmp.lt.s32.totalorder %s20, 3
      %s282 = scalar_select %p281, %s20, 3
      %p283 = scmp.lt.s32.totalorder %s21, 0
      %s284 = scalar_select %p283, %s21, 0
      %s285 = sadd.s32 %s284, %s282
      %s286 = smul.addr %s280, 4
      %s287 = sadd.s32 %s285, %s286
      %s288 = smul.addr %s287, 4
      %s289 = scalar_lea.vmem %s3, %s288
      %v291 = vld [vmem:[%s262] sm:$0xf]
      %v292 = vld [vmem:[%s270] sm:$0xf]
      %v293 = vld [vmem:[%s278] sm:$0xf]
      %vm294 = vcmask 261120
      %v296 = vsel %vm294, %v291, 0
      %v299 = vsel %vm294, %v292, 0
      %301 = vmatprep.subr.bf16.mxu0 0
      %302 = vmatpush1.bf16.xpose.msra.mxu0 %v299
      %303 = vmatprep.subr.bf16.mxu0 0
      %304 = vmatpush1.bf16.xpose.msra.mxu0 0
      %305 = vmatprep.subr.bf16.mxu0 0
      %306 = vmatpush1.bf16.xpose.msra.mxu0 0
      %307 = vmatprep.subr.bf16.mxu0 0
      %308 = vmatpush1.bf16.xpose.msra.mxu0 0
      %309 = vmatprep.subr.bf16.mxu0 0
      %310 = vmatpush1.bf16.xpose.msra.mxu0 0
      %311 = vmatprep.subr.bf16.mxu0 0
      %312 = vmatpush1.bf16.xpose.msra.mxu0 0
      %313 = vmatprep.subr.bf16.mxu0 0
      %314 = vmatpush1.bf16.xpose.msra.mxu0 0
      %315 = vmatprep.subr.bf16.mxu0 0
      %316 = vmatpush1.bf16.xpose.msra.mxu0 0
      %317 = vmatprep.subr.bf16.mxu0 0
      %318 = vmatpush1.bf16.xpose.msra.mxu0 0
      %319 = vmatprep.subr.bf16.mxu0 0
      %320 = vmatpush1.bf16.xpose.msra.mxu0 0
      %321 = vmatprep.subr.bf16.mxu0 0
      %322 = vmatpush1.bf16.xpose.msra.mxu0 0
      %323 = vmatprep.subr.bf16.mxu0 0
      %324 = vmatpush1.bf16.xpose.msra.mxu0 0
      %325 = vmatprep.subr.bf16.mxu0 0
      %326 = vmatpush1.bf16.xpose.msra.mxu0 0
      %327 = vmatprep.subr.bf16.mxu0 0
      %328 = vmatpush1.bf16.xpose.msra.mxu0 0
      %329 = vmatprep.subr.bf16.mxu0 0
      %330 = vmatpush1.bf16.xpose.msra.mxu0 0
      %331 = vmatprep.subr.bf16.mxu0 0
      %332 = vmatpush1.bf16.xpose.msra.mxu0 0
      %333 = vmatprep.mubr.bf16.mxu0 0
      %334 = vmatmul.mubr.bf16.gmra.mrb[0].mxu0 %v296
      %v335 = vpop.f32.mrb[0].mxu0
      %v336 = vadd.f32 0.0, %v335
      %v337 = vpop.f32.mrb[0].mxu0
      %v338 = vpop.f32.mrb[0].mxu0
      %v339 = vpop.f32.mrb[0].mxu0
      %340 = vdwg.mxu0
      %vm341 = vcmask 64512
      %v342 = vsel %vm341, %v336, -inf
      %343 = vmax.xlane.f32.xlu0 %v342
      %v344 = vpop.xlane.xlu0 %343
      %v345 = vsub.f32 %v336, %v344
      %v346 = vmul.f32 %v345, 1.442695
      %v347 = vpow.pop %v346
      %v348 = vsel %vm341, %v347, 0.0
      %349 = vadd.xlane.f32.xlu0 %v348
      %v350 = vpop.xlane.xlu0 %349
      %v351 = vpack.c.bf16 %v347, %v347
      %v353 = vsel %vm341, %v351, 0
      %vm355 = vcmask 1043456
      %v357 = vsel %vm355, %v293, 0
      %359 = vmatprep.subr.bf16.mxu0 0
      %360 = vmatpush1.bf16.msra.mxu0 %v357
      %361 = vmatprep.subr.bf16.mxu0 0
      %362 = vmatpush1.bf16.msra.mxu0 0
      %363 = vmatprep.subr.bf16.mxu0 0
      %364 = vmatpush1.bf16.msra.mxu0 0
      %365 = vmatprep.subr.bf16.mxu0 0
      %366 = vmatpush1.bf16.msra.mxu0 0
      %367 = vmatprep.subr.bf16.mxu0 0
      %368 = vmatpush1.bf16.msra.mxu0 0
      %369 = vmatprep.subr.bf16.mxu0 0
      %370 = vmatpush1.bf16.msra.mxu0 0
      %371 = vmatprep.subr.bf16.mxu0 0
      %372 = vmatpush1.bf16.msra.mxu0 0
      %373 = vmatprep.subr.bf16.mxu0 0
      %374 = vmatpush1.bf16.msra.mxu0 0
      %375 = vmatprep.subr.bf16.mxu0 0
      %376 = vmatpush1.bf16.msra.mxu0 0
      %377 = vmatprep.subr.bf16.mxu0 0
      %378 = vmatpush1.bf16.msra.mxu0 0
      %379 = vmatprep.subr.bf16.mxu0 0
      %380 = vmatpush1.bf16.msra.mxu0 0
      %381 = vmatprep.subr.bf16.mxu0 0
      %382 = vmatpush1.bf16.msra.mxu0 0
      %383 = vmatprep.subr.bf16.mxu0 0
      %384 = vmatpush1.bf16.msra.mxu0 0
      %385 = vmatprep.subr.bf16.mxu0 0
      %386 = vmatpush1.bf16.msra.mxu0 0
      %387 = vmatprep.subr.bf16.mxu0 0
      %388 = vmatpush1.bf16.msra.mxu0 0
      %389 = vmatprep.subr.bf16.mxu0 0
      %390 = vmatpush1.bf16.msra.mxu0 0
      %391 = vmatprep.mubr.bf16.mxu0 0
      %392 = vmatmul.mubr.bf16.gmra.mrb[0].mxu0 %v353
      %v393 = vpop.f32.mrb[0].mxu0
      %v394 = vadd.f32 0.0, %v393
      %v395 = vpop.f32.mrb[0].mxu0
      %v396 = vpop.f32.mrb[0].mxu0
      %v397 = vpop.f32.mrb[0].mxu0
      %398 = vdwg.mxu0
      %v399 = vrcp.pop %v350
      %v400 = vmul.f32 %v394, %v399
      %v401 = vpack.c.bf16 %v400, %v400
      %vm402 = vcmask 257024
      %403 = vst.msk [vmem:[%s289] sm:$0xf] %vm402, %v401
      %p404 = scmp.lt.s32.totalorder %s19, 1
      %s405 = scalar_select %p404, %s19, 1
      %p406 = scmp.lt.s32.totalorder %s20, 3
      %s407 = scalar_select %p406, %s20, 3
      %p408 = scmp.lt.s32.totalorder %s21, 0
      %s409 = scalar_select %p408, %s21, 0
      %s410 = sadd.s32 %s409, %s407
      %s411 = smul.addr %s405, 4
      %s412 = sadd.s32 %s410, %s411
      %s413 = smul.addr %s412, 4
      %s414 = scalar_lea.vmem %s3, %s413
      // Predicated region
      $region33: #{gpt_forward.13} parent=31 // pred_check
        %p415 = pneg %p141
      $region34: #{gpt_forward.13} parent=31 // pred_check_branch
        %417 = sbr.rel (%p415) target = $region36
      $region35: #{gpt_forward.13} parent=31 // pred_region
        _
      $region36: #{gpt_forward.13} parent=31 // pred_fallthru
        _
    $region32: #{gpt_forward.13} parent=5 // pred_fallthru
      _
    %p418 = scmp.le.s32.totalorder 2, %s9
    // Predicated region
    $region37: #{gpt_forward.13} parent=5 // pred_check
      %p419 = pneg %p418
    $region38: #{gpt_forward.13} parent=5 // pred_check_branch
      %421 = sbr.rel (%p419) target = $region40
    $region39: #{gpt_forward.13} parent=5 // pred_region
      %s422 = ssub.s32 %s9, 2
      // Predicated region
      $region41: #{gpt_forward.13} parent=39 // pred_check
        %p423 = pneg %p147
      $region42: #{gpt_forward.13} parent=39 // pred_check_branch
        %425 = sbr.rel (%p423) target = $region44
      $region43: #{gpt_forward.13} parent=39 // pred_region
        %p426 = scmp.lt.s32.totalorder %s22, 1
        %s427 = scalar_select %p426, %s22, 1
        %p428 = scmp.lt.s32.totalorder %s23, 3
        %s429 = scalar_select %p428, %s23, 3
        %p430 = scmp.lt.s32.totalorder %s24, 0
        %s431 = scalar_select %p430, %s24, 0
        %s432 = sadd.s32 %s431, %s429
        %s433 = smul.addr %s427, 4
        %s434 = sadd.s32 %s432, %s433
        %s435 = smul.addr %s434, 4
        %s436 = scalar_lea.vmem %s3, %s435
      $region44: #{gpt_forward.13} parent=39 // pred_fallthru
        _
    $region40: #{gpt_forward.13} parent=5 // pred_fallthru
      _
  $region6: #{gpt_forward.13} parent=0 // loop_footer
    %s13 = sadd.s32 1, %s9
  $region7: #{gpt_forward.13} parent=0 // loop_footer_branch
    %8 = sbr.rel target = $region3
  $region8: #{gpt_forward.13} parent=0 // loop_exit
    _

// kernel: gpt_forward.12
$region0: #{gpt_forward.12}
  #allocation0 [shape = 'u32[]', space=smem, size = 0x4, offset = 0x4, fixed_abs, tag = 'smem constant byte address 0x4 - core index']
  #allocation1 [shape = 'u32[144,128]{1,0:T(1,128)}', space=vmem, size = 0x12000, scoped, tag = 'internal scratch']
  #allocation2 [shape = 'f32[16,128]{1,0:T(8,128)}', space=vmem, size = 0x2000, scoped, tag = 'scratch operand']
  %s0 = inlined_call_operand.vmem [shape: bf16[16,128], index: 0, kind: input, shape index: {}]
  %s1 = inlined_call_operand.vmem [shape: bf16[128,384], index: 1, kind: input, shape index: {}]
  %s2 = inlined_call_operand.vmem [shape: f32[1,384], index: 2, kind: input, shape index: {}]
  %s3 = inlined_call_operand.vmem [shape: bf16[16,384], index: 3, kind: output, shape index: {}]
  %s4 = sld [smem:[#allocation0]]
  $region131: #{gpt_forward.12} parent=0
    _
  %s6 = ssub.s32 1, %s4
  %s7 = scalar_select 0, %s6, %s4
  $region1: #{gpt_forward.12} parent=0
    #allocation3 [shape = 'u8[65536]{0}', space=vmem, size = 0x10000, scoped, tag = 'input window, operand 1']
    #allocation4 [shape = 'u8[8192]{0}', space=vmem, size = 0x2000, scoped, tag = 'output window, operand 0']
    loop: start=0, step=1, limit=5
    $region2: #{gpt_forward.12} parent=1 // loop_pre_header
      _
    $region3: #{gpt_forward.12} parent=1 // loop_header
      %s9 = sphi 0, %s13
      %p10 = scmp.ge.s32.totalorder %s9, 5
      %s16 = sphi 0, %s35
      %s17 = sphi 0, %s31
      %s18 = sphi 0, %s27
      %s19 = sphi 0, %s16
      %s20 = sphi 0, %s17
      %s21 = sphi 0, %s18
      %s22 = sphi 0, %s19
      %s23 = sphi 0, %s20
      %s24 = sphi 0, %s21
      %s40 = sphi 0, %s42
      %s43 = sphi 0, %s40
      %s44 = sphi 0, %s43
      %s60 = sphi 0, %s44
      %s68 = sphi 0, %s70
      %s71 = sphi 0, %s68
      %s72 = sphi 0, %s71
      %s88 = sphi 0, %s72
      %s94 = sphi 0, %s96
      %s97 = sphi 0, %s94
      %s98 = sphi 0, %s97
      %s114 = sphi 0, %s98
      %s122 = sphi 0, %s124
      %s125 = sphi 0, %s122
      %s126 = sphi 0, %s125
      %s142 = sphi 0, %s126
    $region4: #{gpt_forward.12} parent=1 // loop_header_branch
      %12 = sbr.rel (%p10) target = $region8
    $region5: #{gpt_forward.12} parent=1 // loop_body
      %s14 = ssub.s32 %s9, 1
      %s15 = ssub.s32 %s9, 2
      %s25 = sadd.s32 1, %s18
      %p26 = scmp.ge.s32.totalorder %s25, 1
      %s27 = scalar_select %p26, 0, %s25
      %s28 = sadd.s32 1, %s17
      %s29 = scalar_select %p26, %s28, %s17
      %p30 = scmp.ge.s32.totalorder %s29, 3
      %s31 = scalar_select %p30, 0, %s29
      %s32 = sadd.s32 1, %s16
      %s33 = scalar_select %p30, %s32, %s16
      %p34 = scmp.ge.s32.totalorder %s33, 1
      %s35 = scalar_select %p34, 0, %s33
      %s36 = ssub.s32 %s16, %s35
      %s37 = ssub.s32 %s18, %s27
      %s38 = sor.u32 %s36, %s37
      %p39 = scmp.eq.s32.totalorder %s38, 0
      %s41 = sadd.s32 %s40, 1
      %s42 = scalar_select %p39, %s40, %s41
      %p45 = pneg %p39
      %p46 = scmp.eq.s32.totalorder %s9, 2
      %p47 = por %p45, %p46
      %p48 = scmp.ne.s32.totalorder %s40, %s43
      %p49 = scmp.eq.s32.totalorder %s9, 0
      %p50 = por %p48, %p49
      %p51 = scmp.ne.s32.totalorder %s40, %s43
      %p52 = scmp.eq.s32.totalorder %s14, 2
      %p53 = por %p51, %p52
      %p54 = scmp.ne.s32.totalorder %s43, %s44
      %p55 = scmp.eq.s32.totalorder %s14, 0
      %p56 = por %p54, %p55
      %p57 = scmp.ne.s32.totalorder %s43, %s44
      %p58 = scmp.eq.s32.totalorder %s15, 2
      %p59 = por %p57, %p58
      %p61 = scmp.ne.s32.totalorder %s44, %s60
      %p62 = scmp.eq.s32.totalorder %s15, 0
      %p63 = por %p61, %p62
      %s64 = ssub.s32 %s18, %s27
      %s65 = ssub.s32 %s17, %s31
      %s66 = sor.u32 %s64, %s65
      %p67 = scmp.eq.s32.totalorder %s66, 0
      %s69 = sadd.s32 %s68, 1
      %s70 = scalar_select %p67, %s68, %s69
      %p73 = pneg %p67
      %p74 = scmp.eq.s32.totalorder %s9, 2
      %p75 = por %p73, %p74
      %p76 = scmp.ne.s32.totalorder %s68, %s71
      %p77 = scmp.eq.s32.totalorder %s9, 0
      %p78 = por %p76, %p77
      %p79 = scmp.ne.s32.totalorder %s68, %s71
      %p80 = scmp.eq.s32.totalorder %s14, 2
      %p81 = por %p79, %p80
      %p82 = scmp.ne.s32.totalorder %s71, %s72
      %p83 = scmp.eq.s32.totalorder %s14, 0
      %p84 = por %p82, %p83
      %p85 = scmp.ne.s32.totalorder %s71, %s72
      %p86 = scmp.eq.s32.totalorder %s15, 2
      %p87 = por %p85, %p86
      %p89 = scmp.ne.s32.totalorder %s72, %s88
      %p90 = scmp.eq.s32.totalorder %s15, 0
      %p91 = por %p89, %p90
      %s92 = ssub.s32 %s17, %s31
      %p93 = scmp.eq.s32.totalorder %s92, 0
      %s95 = sadd.s32 %s94, 1
      %s96 = scalar_select %p93, %s94, %s95
      %p99 = pneg %p93
      %p100 = scmp.eq.s32.totalorder %s9, 2
      %p101 = por %p99, %p100
      %p102 = scmp.ne.s32.totalorder %s94, %s97
      %p103 = scmp.eq.s32.totalorder %s9, 0
      %p104 = por %p102, %p103
      %p105 = scmp.ne.s32.totalorder %s94, %s97
      %p106 = scmp.eq.s32.totalorder %s14, 2
      %p107 = por %p105, %p106
      %p108 = scmp.ne.s32.totalorder %s97, %s98
      %p109 = scmp.eq.s32.totalorder %s14, 0
      %p110 = por %p108, %p109
      %p111 = scmp.ne.s32.totalorder %s97, %s98
      %p112 = scmp.eq.s32.totalorder %s15, 2
      %p113 = por %p111, %p112
      %p115 = scmp.ne.s32.totalorder %s98, %s114
      %p116 = scmp.eq.s32.totalorder %s15, 0
      %p117 = por %p115, %p116
      %s118 = ssub.s32 %s16, %s35
      %s119 = ssub.s32 %s17, %s31
      %s120 = sor.u32 %s118, %s119
      %p121 = scmp.eq.s32.totalorder %s120, 0
      %s123 = sadd.s32 %s122, 1
      %s124 = scalar_select %p121, %s122, %s123
      %p127 = pneg %p121
      %p128 = scmp.eq.s32.totalorder %s9, 2
      %p129 = por %p127, %p128
      %p130 = scmp.ne.s32.totalorder %s122, %s125
      %p131 = scmp.eq.s32.totalorder %s9, 0
      %p132 = por %p130, %p131
      %p133 = scmp.ne.s32.totalorder %s122, %s125
      %p134 = scmp.eq.s32.totalorder %s14, 2
      %p135 = por %p133, %p134
      %p136 = scmp.ne.s32.totalorder %s125, %s126
      %p137 = scmp.eq.s32.totalorder %s14, 0
      %p138 = por %p136, %p137
      %p139 = scmp.ne.s32.totalorder %s125, %s126
      %p140 = scmp.eq.s32.totalorder %s15, 2
      %p141 = por %p139, %p140
      %p143 = scmp.ne.s32.totalorder %s126, %s142
      %p144 = scmp.eq.s32.totalorder %s15, 0
      %p145 = por %p143, %p144
      %p146 = scmp.le.s32.totalorder 1, %s9
      %p147 = scmp.lt.s32.totalorder %s9, 4
      %p148 = pnand %p146, %p147
      %p149 = pneg %p148
      // Predicated region
      $region9: #{gpt_forward.12} parent=5 // pred_check
        _
      $region10: #{gpt_forward.12} parent=5 // pred_check_branch
        %151 = sbr.rel (%p148) target = $region12
      $region11: #{gpt_forward.12} parent=5 // pred_region
        %s152 = ssub.s32 %s9, 1
        // Predicated region
        $region13: #{gpt_forward.12} parent=11 // pred_check
          %p153 = pneg %p56
        $region14: #{gpt_forward.12} parent=11 // pred_check_branch
          %155 = sbr.rel (%p153) target = $region16
        $region15: #{gpt_forward.12} parent=11 // pred_region
          %s156 = smul.u32 2, %s19
          %p157 = scmp.lt.s32.totalorder %s156, 1
          %s158 = scalar_select %p157, %s156, 1
          %p159 = scmp.lt.s32.totalorder %s21, 0
          %s160 = scalar_select %p159, %s21, 0
          %s161 = sadd.s32 %s160, %s158
          %s162 = smul.addr %s161, 4
          %s163 = scalar_lea.vmem %s0, %s162
          %s164 = smul.u32 2, %s19
        $region16: #{gpt_forward.12} parent=11 // pred_fallthru
          _
      $region12: #{gpt_forward.12} parent=5 // pred_fallthru
        _
      %p165 = scmp.lt.s32.totalorder %s9, 3
      // Predicated region
      $region17: #{gpt_forward.12} parent=5 // pred_check
        %p166 = pneg %p165
      $region18: #{gpt_forward.12} parent=5 // pred_check_branch
        %168 = sbr.rel (%p166) target = $region20
      $region19: #{gpt_forward.12} parent=5 // pred_region
        // Predicated region
        $region21: #{gpt_forward.12} parent=19 // pred_check
          %p169 = pneg %p78
        $region22: #{gpt_forward.12} parent=19 // pred_check_branch
          %171 = sbr.rel (%p169) target = $region24
        $region23: #{gpt_forward.12} parent=19 // pred_region
          %s172 = sand.u32 %s68, 1
          %s173 = sand.u32 %s68, 1
          %s174 = smul.addr %s173, 64
          %s175 = scalar_lea.vmem [#allocation3], %s174
          %s176 = smul.u32 16, %s18
          %s177 = smul.addr %s176, 3
          %s178 = sadd.s32 %s17, %s177
          %s179 = smul.addr %s178, 4
          %s180 = scalar_lea.vmem %s1, %s179
          // Predicated region
          $region25: #{gpt_forward.12} parent=23 // pred_check
            _
          $region26: #{gpt_forward.12} parent=23 // pred_check_branch
            %182 = sbr.rel (0) target = $region28
          $region27: #{gpt_forward.12} parent=23 // pred_region
            // Predicated region
            $region29: #{gpt_forward.12} parent=27 // pred_check
              _
            $region30: #{gpt_forward.12} parent=27 // pred_check_branch
              %184 = sbr.rel target = $region32
            $region31: #{gpt_forward.12} parent=27 // pred_region
              // Predicated region
              $region44: #{gpt_forward.12} parent=31 // pred_check
                _
              $region45: #{gpt_forward.12} parent=31 // pred_check_branch
                %229 = sbr.rel (0) target = $region47
              $region46: #{gpt_forward.12} parent=31 // pred_region
                loop: start=0, step=1, limit=1
                $region48: #{gpt_forward.12} parent=46 // loop_pre_header
                  _
                $region49: #{gpt_forward.12} parent=46 // loop_header
                  %s231 = sphi 0, %s235
                  %p232 = scmp.ge.s32.totalorder %s231, 1
                  %s236 = sphi %s180, %s180
                  %s237 = sphi %s175, %s175
                $region50: #{gpt_forward.12} parent=46 // loop_header_branch
                  %234 = sbr.rel (%p232) target = $region54
                $region51: #{gpt_forward.12} parent=46 // loop_body
                  _
                $region52: #{gpt_forward.12} parent=46 // loop_footer
                  %s235 = sadd.s32 1, %s231
                $region53: #{gpt_forward.12} parent=46 // loop_footer_branch
                  %230 = sbr.rel target = $region49
                $region54: #{gpt_forward.12} parent=46 // loop_exit
                  _
                loop: start=0, step=1, limit=1
                $region55: #{gpt_forward.12} parent=46 // loop_pre_header
                  _
                $region56: #{gpt_forward.12} parent=46 // loop_header
                  %s240 = sphi 0, %s244
                  %p241 = scmp.ge.s32.totalorder %s240, 1
                  %s245 = sphi %s180, %s180
                  %s246 = sphi %s175, %s175
                $region57: #{gpt_forward.12} parent=46 // loop_header_branch
                  %243 = sbr.rel (%p241) target = $region61
                $region58: #{gpt_forward.12} parent=46 // loop_body
                  %v247 = vld [vmem:[%s245] sm:$0xf]
                  %248 = vst [vmem:[%s246] sm:$0xf] %v247
                  %v249 = vld [vmem:[%s245 + $0xc] sm:$0xf]
                  %250 = vst [vmem:[%s246 + $0x4] sm:$0xf] %v249
                  %v251 = vld [vmem:[%s245 + $0x18] sm:$0xf]
                  %252 = vst [vmem:[%s246 + $0x8] sm:$0xf] %v251
                  %v253 = vld [vmem:[%s245 + $0x24] sm:$0xf]
                  %254 = vst [vmem:[%s246 + $0xc] sm:$0xf] %v253
                  %v255 = vld [vmem:[%s245 + $0x30] sm:$0xf]
                  %256 = vst [vmem:[%s246 + $0x10] sm:$0xf] %v255
                  %v257 = vld [vmem:[%s245 + $0x3c] sm:$0xf]
                  %258 = vst [vmem:[%s246 + $0x14] sm:$0xf] %v257
                  %v259 = vld [vmem:[%s245 + $0x48] sm:$0xf]
                  %260 = vst [vmem:[%s246 + $0x18] sm:$0xf] %v259
                  %v261 = vld [vmem:[%s245 + $0x54] sm:$0xf]
                  %262 = vst [vmem:[%s246 + $0x1c] sm:$0xf] %v261
                  %v263 = vld [vmem:[%s245 + $0x60] sm:$0xf]
                  %264 = vst [vmem:[%s246 + $0x20] sm:$0xf] %v263
                  %v265 = vld [vmem:[%s245 + $0x6c] sm:$0xf]
                  %266 = vst [vmem:[%s246 + $0x24] sm:$0xf] %v265
                  %v267 = vld [vmem:[%s245 + $0x78] sm:$0xf]
                  %268 = vst [vmem:[%s246 + $0x28] sm:$0xf] %v267
                  %v269 = vld [vmem:[%s245 + $0x84] sm:$0xf]
                  %270 = vst [vmem:[%s246 + $0x2c] sm:$0xf] %v269
                  %v271 = vld [vmem:[%s245 + $0x90] sm:$0xf]
                  %272 = vst [vmem:[%s246 + $0x30] sm:$0xf] %v271
                  %v273 = vld [vmem:[%s245 + $0x9c] sm:$0xf]
                  %274 = vst [vmem:[%s246 + $0x34] sm:$0xf] %v273
                  %v275 = vld [vmem:[%s245 + $0xa8] sm:$0xf]
                  %276 = vst [vmem:[%s246 + $0x38] sm:$0xf] %v275
                  %v277 = vld [vmem:[%s245 + $0xb4] sm:$0xf]
                  %278 = vst [vmem:[%s246 + $0x3c] sm:$0xf] %v277
                $region59: #{gpt_forward.12} parent=46 // loop_footer
                  %s244 = sadd.s32 1, %s240
                $region60: #{gpt_forward.12} parent=46 // loop_footer_branch
                  %239 = sbr.rel target = $region56
                $region61: #{gpt_forward.12} parent=46 // loop_exit
                  _
              $region47: #{gpt_forward.12} parent=31 // pred_fallthru
                _
            $region32: #{gpt_forward.12} parent=27 // pred_fallthru
              _
            // Predicated region
            $region33: #{gpt_forward.12} parent=27 // pred_check
              _
            $region34: #{gpt_forward.12} parent=27 // pred_check_branch
              %186 = sbr.rel (0) target = $region36
            $region35: #{gpt_forward.12} parent=27 // pred_region
              loop: start=0, step=1, limit=1
              $region37: #{gpt_forward.12} parent=35 // loop_pre_header
                _
              $region38: #{gpt_forward.12} parent=35 // loop_header
                %s189 = sphi 0, %s193
                %p190 = scmp.ge.s32.totalorder %s189, 1
                %s194 = sphi %s180, %s180
                %s195 = sphi %s175, %s175
              $region39: #{gpt_forward.12} parent=35 // loop_header_branch
                %192 = sbr.rel (%p190) target = $region43
              $region40: #{gpt_forward.12} parent=35 // loop_body
                %v196 = vld [vmem:[%s194] sm:$0xf]
                %197 = vst [vmem:[%s195] sm:$0xf] %v196
                %v198 = vld [vmem:[%s194 + $0xc] sm:$0xf]
                %199 = vst [vmem:[%s195 + $0x4] sm:$0xf] %v198
                %v200 = vld [vmem:[%s194 + $0x18] sm:$0xf]
                %201 = vst [vmem:[%s195 + $0x8] sm:$0xf] %v200
                %v202 = vld [vmem:[%s194 + $0x24] sm:$0xf]
                %203 = vst [vmem:[%s195 + $0xc] sm:$0xf] %v202
                %v204 = vld [vmem:[%s194 + $0x30] sm:$0xf]
                %205 = vst [vmem:[%s195 + $0x10] sm:$0xf] %v204
                %v206 = vld [vmem:[%s194 + $0x3c] sm:$0xf]
                %207 = vst [vmem:[%s195 + $0x14] sm:$0xf] %v206
                %v208 = vld [vmem:[%s194 + $0x48] sm:$0xf]
                %209 = vst [vmem:[%s195 + $0x18] sm:$0xf] %v208
                %v210 = vld [vmem:[%s194 + $0x54] sm:$0xf]
                %211 = vst [vmem:[%s195 + $0x1c] sm:$0xf] %v210
                %v212 = vld [vmem:[%s194 + $0x60] sm:$0xf]
                %213 = vst [vmem:[%s195 + $0x20] sm:$0xf] %v212
                %v214 = vld [vmem:[%s194 + $0x6c] sm:$0xf]
                %215 = vst [vmem:[%s195 + $0x24] sm:$0xf] %v214
                %v216 = vld [vmem:[%s194 + $0x78] sm:$0xf]
                %217 = vst [vmem:[%s195 + $0x28] sm:$0xf] %v216
                %v218 = vld [vmem:[%s194 + $0x84] sm:$0xf]
                %219 = vst [vmem:[%s195 + $0x2c] sm:$0xf] %v218
                %v220 = vld [vmem:[%s194 + $0x90] sm:$0xf]
                %221 = vst [vmem:[%s195 + $0x30] sm:$0xf] %v220
                %v222 = vld [vmem:[%s194 + $0x9c] sm:$0xf]
                %223 = vst [vmem:[%s195 + $0x34] sm:$0xf] %v222
                %v224 = vld [vmem:[%s194 + $0xa8] sm:$0xf]
                %225 = vst [vmem:[%s195 + $0x38] sm:$0xf] %v224
                %v226 = vld [vmem:[%s194 + $0xb4] sm:$0xf]
                %227 = vst [vmem:[%s195 + $0x3c] sm:$0xf] %v226
              $region41: #{gpt_forward.12} parent=35 // loop_footer
                %s193 = sadd.s32 1, %s189
              $region42: #{gpt_forward.12} parent=35 // loop_footer_branch
                %188 = sbr.rel target = $region38
              $region43: #{gpt_forward.12} parent=35 // loop_exit
                _
            $region36: #{gpt_forward.12} parent=27 // pred_fallthru
              _
          $region28: #{gpt_forward.12} parent=23 // pred_fallthru
            _
          %279 = vnop
        $region24: #{gpt_forward.12} parent=19 // pred_fallthru
          _
        // Predicated region
        $region62: #{gpt_forward.12} parent=19 // pred_check
          %p280 = pneg %p104
        $region63: #{gpt_forward.12} parent=19 // pred_check_branch
          %282 = sbr.rel (%p280) target = $region65
        $region64: #{gpt_forward.12} parent=19 // pred_region
          %p283 = scmp.lt.s32.totalorder %s17, 2
          %s284 = scalar_select %p283, %s17, 2
          %s285 = scalar_lea.vmem %s2, %s284
        $region65: #{gpt_forward.12} parent=19 // pred_fallthru
          _
      $region20: #{gpt_forward.12} parent=5 // pred_fallthru
        _
      %p286 = scmp.le.s32.totalorder 1, %s9
      %p287 = scmp.lt.s32.totalorder %s9, 4
      %p288 = pnand %p286, %p287
      %p289 = pneg %p288
      // Predicated region
      $region66: #{gpt_forward.12} parent=5 // pred_check
        _
      $region67: #{gpt_forward.12} parent=5 // pred_check_branch
        %291 = sbr.rel (%p288) target = $region69
      $region68: #{gpt_forward.12} parent=5 // pred_region
        %s292 = ssub.s32 %s9, 1
        %s293 = sand.u32 %s71, 1
        %s294 = sand.u32 %s71, 1
        %s295 = smul.addr %s294, 64
        %s296 = scalar_lea.vmem [#allocation3], %s295
        // Predicated region
        $region70: #{gpt_forward.12} parent=68 // pred_check
          %p297 = pneg %p84
        $region71: #{gpt_forward.12} parent=68 // pred_check_branch
          %299 = sbr.rel (%p297) target = $region73
        $region72: #{gpt_forward.12} parent=68 // pred_region
          _
        $region73: #{gpt_forward.12} parent=68 // pred_fallthru
          _
        %s300 = smul.u32 2, %s19
        %p301 = scmp.lt.s32.totalorder %s300, 1
        %s302 = scalar_select %p301, %s300, 1
        %p303 = scmp.lt.s32.totalorder %s21, 0
        %s304 = scalar_select %p303, %s21, 0
        %s305 = sadd.s32 %s304, %s302
        %s306 = smul.addr %s305, 4
        %s307 = scalar_lea.vmem %s0, %s306
        %p308 = pneg %p56
        %p309 = pneg %p53
        %s310 = sand.u32 %s71, 1
        %s311 = sand.u32 %s71, 1
        %s312 = smul.addr %s311, 64
        %s313 = scalar_lea.vmem [#allocation3], %s312
        %p314 = pneg %p84
        %p315 = pneg %p81
        %p316 = scmp.lt.s32.totalorder %s20, 2
        %s317 = scalar_select %p316, %s20, 2
        %s318 = scalar_lea.vmem %s2, %s317
        %p319 = pneg %p110
        %p320 = pneg %p107
        %p321 = pneg %p138
        %p322 = pneg %p135
        %s323 = sand.u32 %s125, 1
        %s324 = sand.u32 %s125, 1
        %s325 = smul.addr %s324, 8
        %s326 = scalar_lea.vmem [#allocation4], %s325
        %s327 = smul.u32 2, %s19
        %p328 = scmp.lt.s32.totalorder %s327, 1
        %s329 = scalar_select %p328, %s327, 1
        %p330 = scmp.lt.s32.totalorder %s21, 0
        %s331 = scalar_select %p330, %s21, 0
        %s332 = sadd.s32 %s331, %s329
        %s333 = smul.addr %s332, 4
        %s334 = scalar_lea.vmem %s0, %s333
        %s335 = smul.u32 2, %s19
        %s336 = smul.u32 16, %s21
        %p337 = scmp.lt.s32.totalorder %s20, 2
        %s338 = scalar_select %p337, %s20, 2
        %s339 = scalar_lea.vmem %s2, %s338
        %s340 = smul.u32 2, %s19
        %p342 = scmp.eq.s32.totalorder %s21, 0
        // Predicated region
        $region74: #{gpt_forward.12} parent=68 // pred_check
          %p343 = pneg %p342
        $region75: #{gpt_forward.12} parent=68 // pred_check_branch
          %345 = sbr.rel (%p343) target = $region77
        $region76: #{gpt_forward.12} parent=68 // pred_region
          %346 = vst [vmem:[#allocation2] sm:$0xff] 0.0
          %347 = vst [vmem:[#allocation2 + $0x8] sm:$0xff] 0.0
        $region77: #{gpt_forward.12} parent=68 // pred_fallthru
          _
        %v348 = vld [vmem:[#allocation2] sm:$0xff]
        %v349 = vld [vmem:[#allocation2 + $0x8] sm:$0xff]
        %v350 = vld [vmem:[%s334] sm:$0xf]
        %v351 = vld [vmem:[%s334 + $0x4] sm:$0xf]
        %v352 = vld [vmem:[%s296] sm:$0xf]
        %v353 = vld [vmem:[%s296 + $0x4] sm:$0xf]
        %v354 = vld [vmem:[%s296 + $0x8] sm:$0xf]
        %v355 = vld [vmem:[%s296 + $0xc] sm:$0xf]
        %v356 = vld [vmem:[%s296 + $0x10] sm:$0xf]
        %v357 = vld [vmem:[%s296 + $0x14] sm:$0xf]
        %v358 = vld [vmem:[%s296 + $0x18] sm:$0xf]
        %v359 = vld [vmem:[%s296 + $0x1c] sm:$0xf]
        %v360 = vld [vmem:[%s296 + $0x20] sm:$0xf]
        %v361 = vld [vmem:[%s296 + $0x24] sm:$0xf]
        %v362 = vld [vmem:[%s296 + $0x28] sm:$0xf]
        %v363 = vld [vmem:[%s296 + $0x2c] sm:$0xf]
        %v364 = vld [vmem:[%s296 + $0x30] sm:$0xf]
        %v365 = vld [vmem:[%s296 + $0x34] sm:$0xf]
        %v366 = vld [vmem:[%s296 + $0x38] sm:$0xf]
        %v367 = vld [vmem:[%s296 + $0x3c] sm:$0xf]
        %v370 = vunpack.c.l.b16 %v350
        %v371 = vunpack.c.l.b16 %v351
        %v372 = vpack.c.b16 %v371, %v370
        %v390 = vunpack.c.l.b16 %v352
        %v391 = vunpack.c.l.b16 %v353
        %v392 = vunpack.c.l.b16 %v354
        %v393 = vunpack.c.l.b16 %v355
        %v394 = vunpack.c.l.b16 %v356
        %v395 = vunpack.c.l.b16 %v357
        %v396 = vunpack.c.l.b16 %v358
        %v397 = vunpack.c.l.b16 %v359
        %v398 = vunpack.c.l.b16 %v360
        %v399 = vunpack.c.l.b16 %v361
        %v400 = vunpack.c.l.b16 %v362
        %v401 = vunpack.c.l.b16 %v363
        %v402 = vunpack.c.l.b16 %v364
        %v403 = vunpack.c.l.b16 %v365
        %v404 = vunpack.c.l.b16 %v366
        %v405 = vunpack.c.l.b16 %v367
        %v406 = vpack.c.b16 %v391, %v390
        %v407 = vpack.c.b16 %v393, %v392
        %v408 = vpack.c.b16 %v395, %v394
        %v409 = vpack.c.b16 %v397, %v396
        %v410 = vpack.c.b16 %v399, %v398
        %v411 = vpack.c.b16 %v401, %v400
        %v412 = vpack.c.b16 %v403, %v402
        %v413 = vpack.c.b16 %v405, %v404
        %422 = vmatprep.subr.bf16.mxu0 0
        %423 = vmatpush1.bf16.msra.mxu0 %v406
        %424 = vmatprep.subr.bf16.mxu0 0
        %425 = vmatpush1.bf16.msra.mxu0 %v407
        %426 = vmatprep.subr.bf16.mxu0 0
        %427 = vmatpush1.bf16.msra.mxu0 %v408
        %428 = vmatprep.subr.bf16.mxu0 0
        %429 = vmatpush1.bf16.msra.mxu0 %v409
        %430 = vmatprep.subr.bf16.mxu0 0
        %431 = vmatpush1.bf16.msra.mxu0 %v410
        %432 = vmatprep.subr.bf16.mxu0 0
        %433 = vmatpush1.bf16.msra.mxu0 %v411
        %434 = vmatprep.subr.bf16.mxu0 0
        %435 = vmatpush1.bf16.msra.mxu0 %v412
        %436 = vmatprep.subr.bf16.mxu0 0
        %437 = vmatpush1.bf16.msra.mxu0 %v413
        %438 = vmatprep.subr.bf16.mxu0 0
        %439 = vmatpush1.bf16.msra.mxu0 0
        %440 = vmatprep.subr.bf16.mxu0 0
        %441 = vmatpush1.bf16.msra.mxu0 0
        %442 = vmatprep.subr.bf16.mxu0 0
        %443 = vmatpush1.bf16.msra.mxu0 0
        %444 = vmatprep.subr.bf16.mxu0 0
        %445 = vmatpush1.bf16.msra.mxu0 0
        %446 = vmatprep.subr.bf16.mxu0 0
        %447 = vmatpush1.bf16.msra.mxu0 0
        %448 = vmatprep.subr.bf16.mxu0 0
        %449 = vmatpush1.bf16.msra.mxu0 0
        %450 = vmatprep.subr.bf16.mxu0 0
        %451 = vmatpush1.bf16.msra.mxu0 0
        %452 = vmatprep.subr.bf16.mxu0 0
        %453 = vmatpush1.bf16.msra.mxu0 0
        %454 = vmatprep.mubr.bf16.mxu0 0
        %455 = vmatmul.mubr.bf16.gmra.mrb[0].mxu0 %v372
        %v456 = vpop.f32.mrb[0].mxu0
        %v457 = vadd.f32 0.0, %v456
        %v458 = vpop.f32.mrb[0].mxu0
        %v459 = vpop.f32.mrb[0].mxu0
        %v460 = vadd.f32 0.0, %v459
        %v461 = vpop.f32.mrb[0].mxu0
        %462 = vdwg.mxu0
        %v463 = vadd.f32 %v348, %v457
        %v464 = vadd.f32 %v349, %v460
        %465 = vst [vmem:[#allocation2] sm:$0xff] %v463
        %466 = vst [vmem:[#allocation2 + $0x8] sm:$0xff] %v464
        // Predicated region
        $region78: #{gpt_forward.12} parent=68 // pred_check
          %p467 = pneg %p342
        $region79: #{gpt_forward.12} parent=68 // pred_check_branch
          %469 = sbr.rel (%p467) target = $region81
        $region80: #{gpt_forward.12} parent=68 // pred_region
          %v470 = vld [vmem:[#allocation2] sm:$0xff]
          %v471 = vld [vmem:[#allocation2 + $0x8] sm:$0xff]
          %v472 = vld [vmem:[%s339] sm:$0x1]
          %v474 = vlaneseq
          %v475 = vshrl.u32 %v474, 7
          %v476 = vsub.s32 0, %v475
          %v477 = vrot.slane %v472, %v476
          %v479 = vadd.f32 %v470, %v477
          %v480 = vadd.f32 %v471, %v477
          %v481 = vpack.c.bf16 %v480, %v479
          %v483 = vunpack.c.l.b16 %v481
          %v484 = vunpack.c.h.b16 %v481
          %v485 = vpack.c.b16 %v483, %v483
          %v486 = vpack.c.b16 %v484, %v484
          %489 = vst [vmem:[%s326] sm:$0xf] %v485
          %490 = vst [vmem:[%s326 + $0x4] sm:$0xf] %v486
        $region81: #{gpt_forward.12} parent=68 // pred_fallthru
          _
        %s491 = sand.u32 %s125, 1
        %s492 = sand.u32 %s125, 1
        %s493 = smul.addr %s492, 8
        %s494 = scalar_lea.vmem [#allocation4], %s493
        // Predicated region
        $region82: #{gpt_forward.12} parent=68 // pred_check
          %p495 = pneg %p135
        $region83: #{gpt_forward.12} parent=68 // pred_check_branch
          %497 = sbr.rel (%p495) target = $region85
        $region84: #{gpt_forward.12} parent=68 // pred_region
          %s498 = smul.u32 2, %s19
          %s499 = smul.addr %s498, 3
          %s500 = sadd.s32 %s20, %s499
          %s501 = smul.addr %s500, 4
          %s502 = scalar_lea.vmem %s3, %s501
          // Predicated region
          $region86: #{gpt_forward.12} parent=84 // pred_check
            _
          $region87: #{gpt_forward.12} parent=84 // pred_check_branch
            %504 = sbr.rel (0) target = $region89
          $region88: #{gpt_forward.12} parent=84 // pred_region
            // Predicated region
            $region90: #{gpt_forward.12} parent=88 // pred_check
              _
            $region91: #{gpt_forward.12} parent=88 // pred_check_branch
              %506 = sbr.rel target = $region93
            $region92: #{gpt_forward.12} parent=88 // pred_region
              // Predicated region
              $region105: #{gpt_forward.12} parent=92 // pred_check
                _
              $region106: #{gpt_forward.12} parent=92 // pred_check_branch
                %523 = sbr.rel (0) target = $region108
              $region107: #{gpt_forward.12} parent=92 // pred_region
                loop: start=0, step=1, limit=1
                $region109: #{gpt_forward.12} parent=107 // loop_pre_header
                  _
                $region110: #{gpt_forward.12} parent=107 // loop_header
                  %s525 = sphi 0, %s529
                  %p526 = scmp.ge.s32.totalorder %s525, 1
                  %s530 = sphi %s494, %s494
                  %s531 = sphi %s502, %s502
                $region111: #{gpt_forward.12} parent=107 // loop_header_branch
                  %528 = sbr.rel (%p526) target = $region115
                $region112: #{gpt_forward.12} parent=107 // loop_body
                  _
                $region113: #{gpt_forward.12} parent=107 // loop_footer
                  %s529 = sadd.s32 1, %s525
                $region114: #{gpt_forward.12} parent=107 // loop_footer_branch
                  %524 = sbr.rel target = $region110
                $region115: #{gpt_forward.12} parent=107 // loop_exit
                  _
                loop: start=0, step=1, limit=1
                $region116: #{gpt_forward.12} parent=107 // loop_pre_header
                  _
                $region117: #{gpt_forward.12} parent=107 // loop_header
                  %s534 = sphi 0, %s538
                  %p535 = scmp.ge.s32.totalorder %s534, 1
                  %s539 = sphi %s494, %s494
                  %s540 = sphi %s502, %s502
                $region118: #{gpt_forward.12} parent=107 // loop_header_branch
                  %537 = sbr.rel (%p535) target = $region122
                $region119: #{gpt_forward.12} parent=107 // loop_body
                  %v541 = vld [vmem:[%s539] sm:$0xf]
                  %542 = vst [vmem:[%s540] sm:$0xf] %v541
                  %v543 = vld [vmem:[%s539 + $0x4] sm:$0xf]
                  %544 = vst [vmem:[%s540 + $0xc] sm:$0xf] %v543
                $region120: #{gpt_forward.12} parent=107 // loop_footer
                  %s538 = sadd.s32 1, %s534
                $region121: #{gpt_forward.12} parent=107 // loop_footer_branch
                  %533 = sbr.rel target = $region117
                $region122: #{gpt_forward.12} parent=107 // loop_exit
                  _
              $region108: #{gpt_forward.12} parent=92 // pred_fallthru
                _
            $region93: #{gpt_forward.12} parent=88 // pred_fallthru
              _
            // Predicated region
            $region94: #{gpt_forward.12} parent=88 // pred_check
              _
            $region95: #{gpt_forward.12} parent=88 // pred_check_branch
              %508 = sbr.rel (0) target = $region97
            $region96: #{gpt_forward.12} parent=88 // pred_region
              loop: start=0, step=1, limit=1
              $region98: #{gpt_forward.12} parent=96 // loop_pre_header
                _
              $region99: #{gpt_forward.12} parent=96 // loop_header
                %s511 = sphi 0, %s515
                %p512 = scmp.ge.s32.totalorder %s511, 1
                %s516 = sphi %s494, %s494
                %s517 = sphi %s502, %s502
              $region100: #{gpt_forward.12} parent=96 // loop_header_branch
                %514 = sbr.rel (%p512) target = $region104
              $region101: #{gpt_forward.12} parent=96 // loop_body
                %v518 = vld [vmem:[%s516] sm:$0xf]
                %519 = vst [vmem:[%s517] sm:$0xf] %v518
                %v520 = vld [vmem:[%s516 + $0x4] sm:$0xf]
                %521 = vst [vmem:[%s517 + $0xc] sm:$0xf] %v520
              $region102: #{gpt_forward.12} parent=96 // loop_footer
                %s515 = sadd.s32 1, %s511
              $region103: #{gpt_forward.12} parent=96 // loop_footer_branch
                %510 = sbr.rel target = $region99
              $region104: #{gpt_forward.12} parent=96 // loop_exit
                _
            $region97: #{gpt_forward.12} parent=88 // pred_fallthru
              _
          $region89: #{gpt_forward.12} parent=84 // pred_fallthru
            _
          %545 = vnop
        $region85: #{gpt_forward.12} parent=68 // pred_fallthru
          _
      $region69: #{gpt_forward.12} parent=5 // pred_fallthru
        _
      %p546 = scmp.le.s32.totalorder 2, %s9
      // Predicated region
      $region123: #{gpt_forward.12} parent=5 // pred_check
        %p547 = pneg %p546
      $region124: #{gpt_forward.12} parent=5 // pred_check_branch
        %549 = sbr.rel (%p547) target = $region126
      $region125: #{gpt_forward.12} parent=5 // pred_region
        %s550 = ssub.s32 %s9, 2
        // Predicated region
        $region127: #{gpt_forward.12} parent=125 // pred_check
          %p551 = pneg %p141
        $region128: #{gpt_forward.12} parent=125 // pred_check_branch
          %553 = sbr.rel (%p551) target = $region130
        $region129: #{gpt_forward.12} parent=125 // pred_region
          %s554 = sand.u32 %s126, 1
          %s555 = sand.u32 %s126, 1
          %s556 = smul.addr %s555, 8
          %s557 = scalar_lea.vmem [#allocation4], %s556
        $region130: #{gpt_forward.12} parent=125 // pred_fallthru
          _
      $region126: #{gpt_forward.12} parent=5 // pred_fallthru
        _
    $region6: #{gpt_forward.12} parent=1 // loop_footer
      %s13 = sadd.s32 1, %s9
    $region7: #{gpt_forward.12} parent=1 // loop_footer_branch
      %8 = sbr.rel target = $region3
    $region8: #{gpt_forward.12} parent=1 // loop_exit
      _

// kernel: gpt_forward.15
$region0: #{gpt_forward.15}
  #allocation0 [shape = 'u32[]', space=smem, size = 0x4, offset = 0x4, fixed_abs, tag = 'smem constant byte address 0x4 - core index']
  #allocation1 [shape = 'u32[144,128]{1,0:T(1,128)}', space=vmem, size = 0x12000, scoped, tag = 'internal scratch']
  #allocation2 [shape = 'f32[16,256]{1,0:T(8,128)}', space=vmem, size = 0x4000, scoped, tag = 'scratch operand']
  %s0 = inlined_call_operand.vmem [shape: bf16[16,128], index: 0, kind: input, shape index: {}]
  %s1 = inlined_call_operand.vmem [shape: bf16[128,256], index: 1, kind: input, shape index: {}]
  %s2 = inlined_call_operand.vmem [shape: f32[1,256], index: 2, kind: input, shape index: {}]
  %s3 = inlined_call_operand.vmem [shape: bf16[16,256], index: 3, kind: output, shape index: {}]
  %s4 = sld [smem:[#allocation0]]
  $region30: #{gpt_forward.15} parent=0
    _
  %s6 = ssub.s32 1, %s4
  %s7 = scalar_select 0, %s6, %s4
  // Predicated region
  $region2: #{gpt_forward.15} parent=0 // pred_check
    _
  $region3: #{gpt_forward.15} parent=0 // pred_check_branch
    %9 = sbr.rel (0) target = $region5
  $region4: #{gpt_forward.15} parent=0 // pred_region
    _
  $region5: #{gpt_forward.15} parent=0 // pred_fallthru
    _
  // Predicated region
  $region6: #{gpt_forward.15} parent=0 // pred_check
    _
  $region7: #{gpt_forward.15} parent=0 // pred_check_branch
    %11 = sbr.rel (0) target = $region9
  $region8: #{gpt_forward.15} parent=0 // pred_region
    _
  $region9: #{gpt_forward.15} parent=0 // pred_fallthru
    _
  // Predicated region
  $region10: #{gpt_forward.15} parent=0 // pred_check
    _
  $region11: #{gpt_forward.15} parent=0 // pred_check_branch
    %13 = sbr.rel (0) target = $region13
  $region12: #{gpt_forward.15} parent=0 // pred_region
    _
  $region13: #{gpt_forward.15} parent=0 // pred_fallthru
    _
  %p15 = scmp.eq.s32.totalorder 0, 0
  // Predicated region
  $region14: #{gpt_forward.15} parent=0 // pred_check
    %p16 = pneg %p15
  $region15: #{gpt_forward.15} parent=0 // pred_check_branch
    %18 = sbr.rel (%p16) target = $region17
  $region16: #{gpt_forward.15} parent=0 // pred_region
    %19 = vst [vmem:[#allocation2] sm:$0xff] 0.0
    %20 = vst [vmem:[#allocation2 + $0x8] sm:$0xff] 0.0
    %21 = vst [vmem:[#allocation2 + $0x10] sm:$0xff] 0.0
    %22 = vst [vmem:[#allocation2 + $0x18] sm:$0xff] 0.0
  $region17: #{gpt_forward.15} parent=0 // pred_fallthru
    _
  %v23 = vld [vmem:[#allocation2] sm:$0xff]
  %v24 = vld [vmem:[#allocation2 + $0x8] sm:$0xff]
  %v25 = vld [vmem:[#allocation2 + $0x10] sm:$0xff]
  %v26 = vld [vmem:[#allocation2 + $0x18] sm:$0xff]
  %v27 = vld [vmem:[%s0] sm:$0xf]
  %v28 = vld [vmem:[%s0 + $0x4] sm:$0xf]
  %v29 = vld [vmem:[%s1] sm:$0xff]
  %v30 = vld [vmem:[%s1 + $0x8] sm:$0xff]
  %v31 = vld [vmem:[%s1 + $0x10] sm:$0xff]
  %v32 = vld [vmem:[%s1 + $0x18] sm:$0xff]
  %v33 = vld [vmem:[%s1 + $0x20] sm:$0xff]
  %v34 = vld [vmem:[%s1 + $0x28] sm:$0xff]
  %v35 = vld [vmem:[%s1 + $0x30] sm:$0xff]
  %v36 = vld [vmem:[%s1 + $0x38] sm:$0xff]
  %v37 = vld [vmem:[%s1 + $0x40] sm:$0xff]
  %v38 = vld [vmem:[%s1 + $0x48] sm:$0xff]
  %v39 = vld [vmem:[%s1 + $0x50] sm:$0xff]
  %v40 = vld [vmem:[%s1 + $0x58] sm:$0xff]
  %v41 = vld [vmem:[%s1 + $0x60] sm:$0xff]
  %v42 = vld [vmem:[%s1 + $0x68] sm:$0xff]
  %v43 = vld [vmem:[%s1 + $0x70] sm:$0xff]
  %v44 = vld [vmem:[%s1 + $0x78] sm:$0xff]
  %v47 = vunpack.c.l.b16 %v27
  %v48 = vunpack.c.l.b16 %v28
  %v49 = vpack.c.b16 %v48, %v47
  %v67 = vunpack.c.l.b16 %v29
  %v68 = vunpack.c.h.b16 %v29
  %v69 = vunpack.c.l.b16 %v30
  %v70 = vunpack.c.h.b16 %v30
  %v71 = vunpack.c.l.b16 %v31
  %v72 = vunpack.c.h.b16 %v31
  %v73 = vunpack.c.l.b16 %v32
  %v74 = vunpack.c.h.b16 %v32
  %v75 = vunpack.c.l.b16 %v33
  %v76 = vunpack.c.h.b16 %v33
  %v77 = vunpack.c.l.b16 %v34
  %v78 = vunpack.c.h.b16 %v34
  %v79 = vunpack.c.l.b16 %v35
  %v80 = vunpack.c.h.b16 %v35
  %v81 = vunpack.c.l.b16 %v36
  %v82 = vunpack.c.h.b16 %v36
  %v83 = vunpack.c.l.b16 %v37
  %v84 = vunpack.c.h.b16 %v37
  %v85 = vunpack.c.l.b16 %v38
  %v86 = vunpack.c.h.b16 %v38
  %v87 = vunpack.c.l.b16 %v39
  %v88 = vunpack.c.h.b16 %v39
  %v89 = vunpack.c.l.b16 %v40
  %v90 = vunpack.c.h.b16 %v40
  %v91 = vunpack.c.l.b16 %v41
  %v92 = vunpack.c.h.b16 %v41
  %v93 = vunpack.c.l.b16 %v42
  %v94 = vunpack.c.h.b16 %v42
  %v95 = vunpack.c.l.b16 %v43
  %v96 = vunpack.c.h.b16 %v43
  %v97 = vunpack.c.l.b16 %v44
  %v98 = vunpack.c.h.b16 %v44
  %v99 = vpack.c.b16 %v69, %v67
  %v100 = vpack.c.b16 %v70, %v68
  %v101 = vpack.c.b16 %v73, %v71
  %v102 = vpack.c.b16 %v74, %v72
  %v103 = vpack.c.b16 %v77, %v75
  %v104 = vpack.c.b16 %v78, %v76
  %v105 = vpack.c.b16 %v81, %v79
  %v106 = vpack.c.b16 %v82, %v80
  %v107 = vpack.c.b16 %v85, %v83
  %v108 = vpack.c.b16 %v86, %v84
  %v109 = vpack.c.b16 %v89, %v87
  %v110 = vpack.c.b16 %v90, %v88
  %v111 = vpack.c.b16 %v93, %v91
  %v112 = vpack.c.b16 %v94, %v92
  %v113 = vpack.c.b16 %v97, %v95
  %v114 = vpack.c.b16 %v98, %v96
  %131 = vmatprep.subr.bf16.mxu0 %v100
  %132 = vmatpush1.bf16.msra.mxu0 %v99
  %133 = vmatprep.subr.bf16.mxu0 %v102
  %134 = vmatpush1.bf16.msra.mxu0 %v101
  %135 = vmatprep.subr.bf16.mxu0 %v104
  %136 = vmatpush1.bf16.msra.mxu0 %v103
  %137 = vmatprep.subr.bf16.mxu0 %v106
  %138 = vmatpush1.bf16.msra.mxu0 %v105
  %139 = vmatprep.subr.bf16.mxu0 %v108
  %140 = vmatpush1.bf16.msra.mxu0 %v107
  %141 = vmatprep.subr.bf16.mxu0 %v110
  %142 = vmatpush1.bf16.msra.mxu0 %v109
  %143 = vmatprep.subr.bf16.mxu0 %v112
  %144 = vmatpush1.bf16.msra.mxu0 %v111
  %145 = vmatprep.subr.bf16.mxu0 %v114
  %146 = vmatpush1.bf16.msra.mxu0 %v113
  %147 = vmatprep.subr.bf16.mxu0 0
  %148 = vmatpush1.bf16.msra.mxu0 0
  %149 = vmatprep.subr.bf16.mxu0 0
  %150 = vmatpush1.bf16.msra.mxu0 0
  %151 = vmatprep.subr.bf16.mxu0 0
  %152 = vmatpush1.bf16.msra.mxu0 0
  %153 = vmatprep.subr.bf16.mxu0 0
  %154 = vmatpush1.bf16.msra.mxu0 0
  %155 = vmatprep.subr.bf16.mxu0 0
  %156 = vmatpush1.bf16.msra.mxu0 0
  %157 = vmatprep.subr.bf16.mxu0 0
  %158 = vmatpush1.bf16.msra.mxu0 0
  %159 = vmatprep.subr.bf16.mxu0 0
  %160 = vmatpush1.bf16.msra.mxu0 0
  %161 = vmatprep.subr.bf16.mxu0 0
  %162 = vmatpush1.bf16.msra.mxu0 0
  %163 = vmatprep.mubr.bf16.mxu0 0
  %164 = vmatmul.mubr.bf16.gmra.mrb[0].mxu0 %v49
  %v165 = vpop.f32.mrb[0].mxu0
  %v166 = vadd.f32 0.0, %v165
  %v167 = vpop.f32.mrb[0].mxu0
  %v168 = vadd.f32 0.0, %v167
  %v169 = vpop.f32.mrb[0].mxu0
  %v170 = vadd.f32 0.0, %v169
  %v171 = vpop.f32.mrb[0].mxu0
  %v172 = vadd.f32 0.0, %v171
  %173 = vdwg.mxu0
  %v174 = vadd.f32 %v23, %v166
  %v175 = vadd.f32 %v24, %v168
  %v176 = vadd.f32 %v25, %v170
  %v177 = vadd.f32 %v26, %v172
  %178 = vst [vmem:[#allocation2] sm:$0xff] %v174
  %179 = vst [vmem:[#allocation2 + $0x8] sm:$0xff] %v175
  %180 = vst [vmem:[#allocation2 + $0x10] sm:$0xff] %v176
  %181 = vst [vmem:[#allocation2 + $0x18] sm:$0xff] %v177
  // Predicated region
  $region18: #{gpt_forward.15} parent=0 // pred_check
    %p182 = pneg %p15
  $region19: #{gpt_forward.15} parent=0 // pred_check_branch
    %184 = sbr.rel (%p182) target = $region21
  $region20: #{gpt_forward.15} parent=0 // pred_region
    %v185 = vld [vmem:[#allocation2] sm:$0xff]
    %v186 = vld [vmem:[#allocation2 + $0x8] sm:$0xff]
    %v187 = vld [vmem:[#allocation2 + $0x10] sm:$0xff]
    %v188 = vld [vmem:[#allocation2 + $0x18] sm:$0xff]
    %v189 = vld [vmem:[%s2] sm:$0x3]
    %v191 = vlaneseq
    %v192 = vshrl.u32 %v191, 7
    %v193 = vsub.s32 0, %v192
    %v194 = vrot.slane %v189, %v193
    %v195 = vlaneseq
    %v196 = vshrl.u32 %v195, 7
    %v197 = vsub.s32 1, %v196
    %v198 = vrot.slane %v189, %v197
    %v201 = vadd.f32 %v185, %v194
    %v202 = vadd.f32 %v186, %v198
    %v203 = vadd.f32 %v187, %v194
    %v204 = vadd.f32 %v188, %v198
    %v205 = vmul.f32 %v201, 0.5
    %v206 = vmul.f32 %v202, 0.5
    %v207 = vmul.f32 %v203, 0.5
    %v208 = vmul.f32 %v204, 0.5
    %v209 = vmul.f32 %v201, 0.70710677
    %v210 = vmul.f32 %v202, 0.70710677
    %v211 = vmul.f32 %v203, 0.70710677
    %v212 = vmul.f32 %v204, 0.70710677
    %v213 = verf.f32.pop %v209
    %v214 = verf.f32.pop %v210
    %v215 = verf.f32.pop %v211
    %v216 = verf.f32.pop %v212
    %v217 = vadd.f32 %v213, 1.0
    %v218 = vadd.f32 %v214, 1.0
    %v219 = vadd.f32 %v215, 1.0
    %v220 = vadd.f32 %v216, 1.0
    %v221 = vmul.f32 %v205, %v217
    %v222 = vmul.f32 %v206, %v218
    %v223 = vmul.f32 %v207, %v219
    %v224 = vmul.f32 %v208, %v220
    %v225 = vpack.c.bf16 %v223, %v221
    %v226 = vpack.c.bf16 %v224, %v222
    %v229 = vunpack.c.l.b16 %v225
    %v230 = vunpack.c.l.b16 %v226
    %v231 = vunpack.c.h.b16 %v225
    %v232 = vunpack.c.h.b16 %v226
    %v233 = vpack.c.b16 %v230, %v229
    %v234 = vpack.c.b16 %v232, %v231
    %237 = vst [vmem:[%s3] sm:$0xff] %v233
    %238 = vst [vmem:[%s3 + $0x8] sm:$0xff] %v234
  $region21: #{gpt_forward.15} parent=0 // pred_fallthru
    _
  // Predicated region
  $region22: #{gpt_forward.15} parent=0 // pred_check
    _
  $region23: #{gpt_forward.15} parent=0 // pred_check_branch
    %240 = sbr.rel (0) target = $region25
  $region24: #{gpt_forward.15} parent=0 // pred_region
    _
  $region25: #{gpt_forward.15} parent=0 // pred_fallthru
    _
  // Predicated region
  $region26: #{gpt_forward.15} parent=0 // pred_check
    _
  $region27: #{gpt_forward.15} parent=0 // pred_check_branch
    %242 = sbr.rel (0) target = $region29
  $region28: #{gpt_forward.15} parent=0 // pred_region
    _
  $region29: #{gpt_forward.15} parent=0 // pred_fallthru
    _

// kernel: gpt_forward.14
$region0: #{gpt_forward.14}
  #allocation0 [shape = 'u32[]', space=smem, size = 0x4, offset = 0x4, fixed_abs, tag = 'smem constant byte address 0x4 - core index']
  #allocation1 [shape = 'u32[144,128]{1,0:T(1,128)}', space=vmem, size = 0x12000, scoped, tag = 'internal scratch']
  #allocation2 [shape = 'f32[16,128]{1,0:T(8,128)}', space=vmem, size = 0x2000, scoped, tag = 'scratch operand']
  %s0 = inlined_call_operand.vmem [shape: bf16[16,128], index: 0, kind: input, shape index: {}]
  %s1 = inlined_call_operand.vmem [shape: bf16[128,128], index: 1, kind: input, shape index: {}]
  %s2 = inlined_call_operand.vmem [shape: f32[1,128], index: 2, kind: input, shape index: {}]
  %s3 = inlined_call_operand.vmem [shape: bf16[16,128], index: 3, kind: input, shape index: {}]
  %s4 = inlined_call_operand.vmem [shape: f32[1,128], index: 4, kind: input, shape index: {}]
  %s5 = inlined_call_operand.vmem [shape: f32[1,128], index: 5, kind: input, shape index: {}]
  %s6 = inlined_call_operand.vmem [shape: bf16[16,128], index: 6, kind: output, shape index: {}]
  %s7 = sld [smem:[#allocation0]]
  $region42: #{gpt_forward.14} parent=0
    _
  %s9 = ssub.s32 1, %s7
  %s10 = scalar_select 0, %s9, %s7
  // Predicated region
  $region2: #{gpt_forward.14} parent=0 // pred_check
    _
  $region3: #{gpt_forward.14} parent=0 // pred_check_branch
    %12 = sbr.rel (0) target = $region5
  $region4: #{gpt_forward.14} parent=0 // pred_region
    _
  $region5: #{gpt_forward.14} parent=0 // pred_fallthru
    _
  // Predicated region
  $region6: #{gpt_forward.14} parent=0 // pred_check
    _
  $region7: #{gpt_forward.14} parent=0 // pred_check_branch
    %14 = sbr.rel (0) target = $region9
  $region8: #{gpt_forward.14} parent=0 // pred_region
    _
  $region9: #{gpt_forward.14} parent=0 // pred_fallthru
    _
  // Predicated region
  $region10: #{gpt_forward.14} parent=0 // pred_check
    _
  $region11: #{gpt_forward.14} parent=0 // pred_check_branch
    %16 = sbr.rel (0) target = $region13
  $region12: #{gpt_forward.14} parent=0 // pred_region
    _
  $region13: #{gpt_forward.14} parent=0 // pred_fallthru
    _
  // Predicated region
  $region14: #{gpt_forward.14} parent=0 // pred_check
    _
  $region15: #{gpt_forward.14} parent=0 // pred_check_branch
    %18 = sbr.rel (0) target = $region17
  $region16: #{gpt_forward.14} parent=0 // pred_region
    _
  $region17: #{gpt_forward.14} parent=0 // pred_fallthru
    _
  // Predicated region
  $region18: #{gpt_forward.14} parent=0 // pred_check
    _
  $region19: #{gpt_forward.14} parent=0 // pred_check_branch
    %20 = sbr.rel (0) target = $region21
  $region20: #{gpt_forward.14} parent=0 // pred_region
    _
  $region21: #{gpt_forward.14} parent=0 // pred_fallthru
    _
  // Predicated region
  $region22: #{gpt_forward.14} parent=0 // pred_check
    _
  $region23: #{gpt_forward.14} parent=0 // pred_check_branch
    %22 = sbr.rel (0) target = $region25
  $region24: #{gpt_forward.14} parent=0 // pred_region
    _
  $region25: #{gpt_forward.14} parent=0 // pred_fallthru
    _
  %p24 = scmp.eq.s32.totalorder 0, 0
  // Predicated region
  $region26: #{gpt_forward.14} parent=0 // pred_check
    %p25 = pneg %p24
  $region27: #{gpt_forward.14} parent=0 // pred_check_branch
    %27 = sbr.rel (%p25) target = $region29
  $region28: #{gpt_forward.14} parent=0 // pred_region
    %28 = vst [vmem:[#allocation2] sm:$0xff] 0.0
    %29 = vst [vmem:[#allocation2 + $0x8] sm:$0xff] 0.0
  $region29: #{gpt_forward.14} parent=0 // pred_fallthru
    _
  %v30 = vld [vmem:[#allocation2] sm:$0xff]
  %v31 = vld [vmem:[#allocation2 + $0x8] sm:$0xff]
  %v32 = vld [vmem:[%s0] sm:$0xf]
  %v33 = vld [vmem:[%s0 + $0x4] sm:$0xf]
  %v34 = vld [vmem:[%s1] sm:$0xf]
  %v35 = vld [vmem:[%s1 + $0x4] sm:$0xf]
  %v36 = vld [vmem:[%s1 + $0x8] sm:$0xf]
  %v37 = vld [vmem:[%s1 + $0xc] sm:$0xf]
  %v38 = vld [vmem:[%s1 + $0x10] sm:$0xf]
  %v39 = vld [vmem:[%s1 + $0x14] sm:$0xf]
  %v40 = vld [vmem:[%s1 + $0x18] sm:$0xf]
  %v41 = vld [vmem:[%s1 + $0x1c] sm:$0xf]
  %v42 = vld [vmem:[%s1 + $0x20] sm:$0xf]
  %v43 = vld [vmem:[%s1 + $0x24] sm:$0xf]
  %v44 = vld [vmem:[%s1 + $0x28] sm:$0xf]
  %v45 = vld [vmem:[%s1 + $0x2c] sm:$0xf]
  %v46 = vld [vmem:[%s1 + $0x30] sm:$0xf]
  %v47 = vld [vmem:[%s1 + $0x34] sm:$0xf]
  %v48 = vld [vmem:[%s1 + $0x38] sm:$0xf]
  %v49 = vld [vmem:[%s1 + $0x3c] sm:$0xf]
  %v52 = vunpack.c.l.b16 %v32
  %v53 = vunpack.c.l.b16 %v33
  %v54 = vpack.c.b16 %v53, %v52
  %v72 = vunpack.c.l.b16 %v34
  %v73 = vunpack.c.l.b16 %v35
  %v74 = vunpack.c.l.b16 %v36
  %v75 = vunpack.c.l.b16 %v37
  %v76 = vunpack.c.l.b16 %v38
  %v77 = vunpack.c.l.b16 %v39
  %v78 = vunpack.c.l.b16 %v40
  %v79 = vunpack.c.l.b16 %v41
  %v80 = vunpack.c.l.b16 %v42
  %v81 = vunpack.c.l.b16 %v43
  %v82 = vunpack.c.l.b16 %v44
  %v83 = vunpack.c.l.b16 %v45
  %v84 = vunpack.c.l.b16 %v46
  %v85 = vunpack.c.l.b16 %v47
  %v86 = vunpack.c.l.b16 %v48
  %v87 = vunpack.c.l.b16 %v49
  %v88 = vpack.c.b16 %v73, %v72
  %v89 = vpack.c.b16 %v75, %v74
  %v90 = vpack.c.b16 %v77, %v76
  %v91 = vpack.c.b16 %v79, %v78
  %v92 = vpack.c.b16 %v81, %v80
  %v93 = vpack.c.b16 %v83, %v82
  %v94 = vpack.c.b16 %v85, %v84
  %v95 = vpack.c.b16 %v87, %v86
  %104 = vmatprep.subr.bf16.mxu0 0
  %105 = vmatpush1.bf16.msra.mxu0 %v88
  %106 = vmatprep.subr.bf16.mxu0 0
  %107 = vmatpush1.bf16.msra.mxu0 %v89
  %108 = vmatprep.subr.bf16.mxu0 0
  %109 = vmatpush1.bf16.msra.mxu0 %v90
  %110 = vmatprep.subr.bf16.mxu0 0
  %111 = vmatpush1.bf16.msra.mxu0 %v91
  %112 = vmatprep.subr.bf16.mxu0 0
  %113 = vmatpush1.bf16.msra.mxu0 %v92
  %114 = vmatprep.subr.bf16.mxu0 0
  %115 = vmatpush1.bf16.msra.mxu0 %v93
  %116 = vmatprep.subr.bf16.mxu0 0
  %117 = vmatpush1.bf16.msra.mxu0 %v94
  %118 = vmatprep.subr.bf16.mxu0 0
  %119 = vmatpush1.bf16.msra.mxu0 %v95
  %120 = vmatprep.subr.bf16.mxu0 0
  %121 = vmatpush1.bf16.msra.mxu0 0
  %122 = vmatprep.subr.bf16.mxu0 0
  %123 = vmatpush1.bf16.msra.mxu0 0
  %124 = vmatprep.subr.bf16.mxu0 0
  %125 = vmatpush1.bf16.msra.mxu0 0
  %126 = vmatprep.subr.bf16.mxu0 0
  %127 = vmatpush1.bf16.msra.mxu0 0
  %128 = vmatprep.subr.bf16.mxu0 0
  %129 = vmatpush1.bf16.msra.mxu0 0
  %130 = vmatprep.subr.bf16.mxu0 0
  %131 = vmatpush1.bf16.msra.mxu0 0
  %132 = vmatprep.subr.bf16.mxu0 0
  %133 = vmatpush1.bf16.msra.mxu0 0
  %134 = vmatprep.subr.bf16.mxu0 0
  %135 = vmatpush1.bf16.msra.mxu0 0
  %136 = vmatprep.mubr.bf16.mxu0 0
  %137 = vmatmul.mubr.bf16.gmra.mrb[0].mxu0 %v54
  %v138 = vpop.f32.mrb[0].mxu0
  %v139 = vadd.f32 0.0, %v138
  %v140 = vpop.f32.mrb[0].mxu0
  %v141 = vpop.f32.mrb[0].mxu0
  %v142 = vadd.f32 0.0, %v141
  %v143 = vpop.f32.mrb[0].mxu0
  %144 = vdwg.mxu0
  %v145 = vadd.f32 %v30, %v139
  %v146 = vadd.f32 %v31, %v142
  %147 = vst [vmem:[#allocation2] sm:$0xff] %v145
  %148 = vst [vmem:[#allocation2 + $0x8] sm:$0xff] %v146
  // Predicated region
  $region30: #{gpt_forward.14} parent=0 // pred_check
    %p149 = pneg %p24
  $region31: #{gpt_forward.14} parent=0 // pred_check_branch
    %151 = sbr.rel (%p149) target = $region33
  $region32: #{gpt_forward.14} parent=0 // pred_region
    %v152 = vld [vmem:[#allocation2] sm:$0xff]
    %v153 = vld [vmem:[#allocation2 + $0x8] sm:$0xff]
    %v154 = vld [vmem:[%s2] sm:$0x1]
    %v156 = vlaneseq
    %v157 = vshrl.u32 %v156, 7
    %v158 = vsub.s32 0, %v157
    %v159 = vrot.slane %v154, %v158
    %v161 = vadd.f32 %v152, %v159
    %v162 = vadd.f32 %v153, %v159
    %v163 = vld [vmem:[%s3] sm:$0xf]
    %v164 = vld [vmem:[%s3 + $0x4] sm:$0xf]
    %v165 = vunpack.c.l.bf16 %v163
    %v166 = vunpack.c.l.bf16 %v164
    %v167 = vadd.f32 %v161, %v165
    %v168 = vadd.f32 %v162, %v166
    %169 = vadd.xlane.f32.xlu0 %v167
    %v170 = vpop.xlane.xlu0 %169
    %171 = vadd.xlane.f32.xlu0 %v168
    %v172 = vpop.xlane.xlu0 %171
    %v173 = vrcp.pop 128.0
    %v174 = vmul.f32 %v170, %v173
    %v175 = vmul.f32 %v172, %v173
    %v176 = vsub.f32 %v167, %v174
    %v177 = vsub.f32 %v168, %v175
    %v178 = vmul.f32 %v176, %v176
    %v179 = vmul.f32 %v177, %v177
    %180 = vadd.xlane.f32.xlu0 %v178
    %v181 = vpop.xlane.xlu0 %180
    %182 = vadd.xlane.f32.xlu0 %v179
    %v183 = vpop.xlane.xlu0 %182
    %v184 = vmul.f32 %v181, %v173
    %v185 = vmul.f32 %v183, %v173
    %v186 = vadd.f32 %v184, 1e-05
    %v187 = vadd.f32 %v185, 1e-05
    %v188 = vrsqrt.pop %v186
    %v189 = vrsqrt.pop %v187
    %v190 = vmul.f32 %v176, %v188
    %v191 = vmul.f32 %v177, %v189
    %v192 = vld [vmem:[%s4] sm:$0x1]
    %v194 = vlaneseq
    %v195 = vshrl.u32 %v194, 7
    %v196 = vsub.s32 0, %v195
    %v197 = vrot.slane %v192, %v196
    %v199 = vmul.f32 %v190, %v197
    %v200 = vmul.f32 %v191, %v197
    %v201 = vld [vmem:[%s5] sm:$0x1]
    %v203 = vlaneseq
    %v204 = vshrl.u32 %v203, 7
    %v205 = vsub.s32 0, %v204
    %v206 = vrot.slane %v201, %v205
    %v208 = vadd.f32 %v199, %v206
    %v209 = vadd.f32 %v200, %v206
    %v210 = vpack.c.bf16 %v209, %v208
    %v212 = vunpack.c.l.b16 %v210
    %v213 = vunpack.c.h.b16 %v210
    %v214 = vpack.c.b16 %v212, %v212
    %v215 = vpack.c.b16 %v213, %v213
    %218 = vst [vmem:[%s6] sm:$0xf] %v214
    %219 = vst [vmem:[%s6 + $0x4] sm:$0xf] %v215
  $region33: #{gpt_forward.14} parent=0 // pred_fallthru
    _
  // Predicated region
  $region34: #{gpt_forward.14} parent=0 // pred_check
    _
  $region35: #{gpt_forward.14} parent=0 // pred_check_branch
    %221 = sbr.rel (0) target = $region37
  $region36: #{gpt_forward.14} parent=0 // pred_region
    _
  $region37: #{gpt_forward.14} parent=0 // pred_fallthru
    _
  // Predicated region
  $region38: #{gpt_forward.14} parent=0 // pred_check
    _
  $region39: #{gpt_forward.14} parent=0 // pred_check_branch
    %223 = sbr.rel (0) target = $region41
  $region40: #{gpt_forward.14} parent=0 // pred_region
    _
  $region41: #{gpt_forward.14} parent=0 // pred_fallthru
    _

// kernel: gpt_forward.22
$region0: #{gpt_forward.22}
  #allocation0 [shape = 'u32[]', space=smem, size = 0x4, offset = 0x4, fixed_abs, tag = 'smem constant byte address 0x4 - core index']
  #allocation1 [shape = 'u32[144,128]{1,0:T(1,128)}', space=vmem, size = 0x12000, scoped, tag = 'internal scratch']
  %s0 = inlined_call_operand.vmem [shape: bf16[16,128], index: 0, kind: input, shape index: {}]
  %s1 = inlined_call_operand.vmem [shape: f32[1,128], index: 1, kind: input, shape index: {}]
  %s2 = inlined_call_operand.vmem [shape: f32[1,128], index: 2, kind: input, shape index: {}]
  %s3 = inlined_call_operand.vmem [shape: bf16[16,128], index: 3, kind: output, shape index: {}]
  %s4 = sld [smem:[#allocation0]]
  $region22: #{gpt_forward.22} parent=0
    _
  %s6 = ssub.s32 1, %s4
  %s7 = scalar_select 0, %s6, %s4
  // Predicated region
  $region2: #{gpt_forward.22} parent=0 // pred_check
    _
  $region3: #{gpt_forward.22} parent=0 // pred_check_branch
    %9 = sbr.rel (0) target = $region5
  $region4: #{gpt_forward.22} parent=0 // pred_region
    _
  $region5: #{gpt_forward.22} parent=0 // pred_fallthru
    _
  // Predicated region
  $region6: #{gpt_forward.22} parent=0 // pred_check
    _
  $region7: #{gpt_forward.22} parent=0 // pred_check_branch
    %11 = sbr.rel (0) target = $region9
  $region8: #{gpt_forward.22} parent=0 // pred_region
    _
  $region9: #{gpt_forward.22} parent=0 // pred_fallthru
    _
  // Predicated region
  $region10: #{gpt_forward.22} parent=0 // pred_check
    _
  $region11: #{gpt_forward.22} parent=0 // pred_check_branch
    %13 = sbr.rel (0) target = $region13
  $region12: #{gpt_forward.22} parent=0 // pred_region
    _
  $region13: #{gpt_forward.22} parent=0 // pred_fallthru
    _
  %v14 = vld [vmem:[%s0] sm:$0xf]
  %v15 = vld [vmem:[%s0 + $0x4] sm:$0xf]
  %v16 = vunpack.c.l.bf16 %v14
  %v17 = vunpack.c.l.bf16 %v15
  %18 = vadd.xlane.f32.xlu0 %v16
  %v19 = vpop.xlane.xlu0 %18
  %20 = vadd.xlane.f32.xlu0 %v17
  %v21 = vpop.xlane.xlu0 %20
  %v22 = vrcp.pop 128.0
  %v23 = vmul.f32 %v19, %v22
  %v24 = vmul.f32 %v21, %v22
  %v25 = vsub.f32 %v16, %v23
  %v26 = vsub.f32 %v17, %v24
  %v27 = vmul.f32 %v25, %v25
  %v28 = vmul.f32 %v26, %v26
  %29 = vadd.xlane.f32.xlu0 %v27
  %v30 = vpop.xlane.xlu0 %29
  %31 = vadd.xlane.f32.xlu0 %v28
  %v32 = vpop.xlane.xlu0 %31
  %v33 = vmul.f32 %v30, %v22
  %v34 = vmul.f32 %v32, %v22
  %v35 = vadd.f32 %v33, 1e-05
  %v36 = vadd.f32 %v34, 1e-05
  %v37 = vrsqrt.pop %v35
  %v38 = vrsqrt.pop %v36
  %v39 = vmul.f32 %v25, %v37
  %v40 = vmul.f32 %v26, %v38
  %v41 = vld [vmem:[%s1] sm:$0x1]
  %v43 = vlaneseq
  %v44 = vshrl.u32 %v43, 7
  %v45 = vsub.s32 0, %v44
  %v46 = vrot.slane %v41, %v45
  %v48 = vmul.f32 %v39, %v46
  %v49 = vmul.f32 %v40, %v46
  %v50 = vld [vmem:[%s2] sm:$0x1]
  %v52 = vlaneseq
  %v53 = vshrl.u32 %v52, 7
  %v54 = vsub.s32 0, %v53
  %v55 = vrot.slane %v50, %v54
  %v57 = vadd.f32 %v48, %v55
  %v58 = vadd.f32 %v49, %v55
  %v59 = vpack.c.bf16 %v58, %v57
  %v61 = vunpack.c.l.b16 %v59
  %v62 = vunpack.c.h.b16 %v59
  %v63 = vpack.c.b16 %v61, %v61
  %v64 = vpack.c.b16 %v62, %v62
  %67 = vst [vmem:[%s3] sm:$0xf] %v63
  %68 = vst [vmem:[%s3 + $0x4] sm:$0xf] %v64
  // Predicated region
  $region14: #{gpt_forward.22} parent=0 // pred_check
    _
  $region15: #{gpt_forward.22} parent=0 // pred_check_branch
    %70 = sbr.rel (0) target = $region17
  $region16: #{gpt_forward.22} parent=0 // pred_region
    _
  $region17: #{gpt_forward.22} parent=0 // pred_fallthru
    _
  // Predicated region
  $region18: #{gpt_forward.22} parent=0 // pred_check
    _
  $region19: #{gpt_forward.22} parent=0 // pred_check_branch
    %72 = sbr.rel (0) target = $region21
  $region20: #{gpt_forward.22} parent=0 // pred_region
    _
  $region21: #{gpt_forward.22} parent=0 // pred_fallthru
    _

// kernel: gpt_forward.23
$region0: #{gpt_forward.23}
  #allocation0 [shape = 'u32[]', space=smem, size = 0x4, offset = 0x4, fixed_abs, tag = 'smem constant byte address 0x4 - core index']
  #allocation1 [shape = 'u32[144,128]{1,0:T(1,128)}', space=vmem, size = 0x12000, scoped, tag = 'internal scratch']
  #allocation2 [shape = 'f32[16,256]{1,0:T(8,128)}', space=vmem, size = 0x4000, scoped, tag = 'scratch operand']
  %s0 = inlined_call_operand.vmem [shape: bf16[16,128], index: 0, kind: input, shape index: {}]
  %s1 = inlined_call_operand.vmem [shape: bf16[128,512], index: 1, kind: input, shape index: {}]
  %s2 = inlined_call_operand.vmem [shape: f32[1,512], index: 2, kind: input, shape index: {}]
  %s3 = inlined_call_operand.hbm [shape: f32[16,512], index: 3, kind: output, shape index: {}]
  %s4 = sld [smem:[#allocation0]]
  $region91: #{gpt_forward.23} parent=0
    _
  %s6 = ssub.s32 1, %s4
  %s7 = scalar_select 0, %s6, %s4
  $region1: #{gpt_forward.23} parent=0
    #allocation3 [shape = 'u8[131072]{0}', space=vmem, size = 0x20000, scoped, tag = 'input window, operand 1']
    #allocation4 [shape = 'u8[32768]{0}', space=vmem, size = 0x8000, scoped, tag = 'output window, operand 0']
    #allocation5 [shape = 's32[2]{0}', space=sflag, size = 0x8, scoped, tag = 'scoped memory for gpt_forward.23']
    %8 = vsyncpa [#allocation5], 0
    %s9 = scalar_lea.sflag [#allocation5], 1
    %10 = vsyncpa %s9, 0
    loop: start=0, step=1, limit=4
    $region2: #{gpt_forward.23} parent=1 // loop_pre_header
      _
    $region3: #{gpt_forward.23} parent=1 // loop_header
      %s12 = sphi 0, %s16
      %p13 = scmp.ge.s32.totalorder %s12, 4
      %s19 = sphi 0, %s38
      %s20 = sphi 0, %s34
      %s21 = sphi 0, %s30
      %s22 = sphi 0, %s19
      %s23 = sphi 0, %s20
      %s24 = sphi 0, %s21
      %s25 = sphi 0, %s22
      %s26 = sphi 0, %s23
      %s27 = sphi 0, %s24
      %s43 = sphi 0, %s45
      %s46 = sphi 0, %s43
      %s47 = sphi 0, %s46
      %s63 = sphi 0, %s47
      %s71 = sphi 0, %s73
      %s74 = sphi 0, %s71
      %s75 = sphi 0, %s74
      %s91 = sphi 0, %s75
      %s97 = sphi 0, %s99
      %s100 = sphi 0, %s97
      %s101 = sphi 0, %s100
      %s117 = sphi 0, %s101
      %s125 = sphi 0, %s127
      %s128 = sphi 0, %s125
      %s129 = sphi 0, %s128
      %s145 = sphi 0, %s129
    $region4: #{gpt_forward.23} parent=1 // loop_header_branch
      %15 = sbr.rel (%p13) target = $region8
    $region5: #{gpt_forward.23} parent=1 // loop_body
      %s17 = ssub.s32 %s12, 1
      %s18 = ssub.s32 %s12, 2
      %s28 = sadd.s32 1, %s21
      %p29 = scmp.ge.s32.totalorder %s28, 1
      %s30 = scalar_select %p29, 0, %s28
      %s31 = sadd.s32 1, %s20
      %s32 = scalar_select %p29, %s31, %s20
      %p33 = scmp.ge.s32.totalorder %s32, 2
      %s34 = scalar_select %p33, 0, %s32
      %s35 = sadd.s32 1, %s19
      %s36 = scalar_select %p33, %s35, %s19
      %p37 = scmp.ge.s32.totalorder %s36, 1
      %s38 = scalar_select %p37, 0, %s36
      %s39 = ssub.s32 %s19, %s38
      %s40 = ssub.s32 %s21, %s30
      %s41 = sor.u32 %s39, %s40
      %p42 = scmp.eq.s32.totalorder %s41, 0
      %s44 = sadd.s32 %s43, 1
      %s45 = scalar_select %p42, %s43, %s44
      %p48 = pneg %p42
      %p49 = scmp.eq.s32.totalorder %s12, 1
      %p50 = por %p48, %p49
      %p51 = scmp.ne.s32.totalorder %s43, %s46
      %p52 = scmp.eq.s32.totalorder %s12, 0
      %p53 = por %p51, %p52
      %p54 = scmp.ne.s32.totalorder %s43, %s46
      %p55 = scmp.eq.s32.totalorder %s17, 1
      %p56 = por %p54, %p55
      %p57 = scmp.ne.s32.totalorder %s46, %s47
      %p58 = scmp.eq.s32.totalorder %s17, 0
      %p59 = por %p57, %p58
      %p60 = scmp.ne.s32.totalorder %s46, %s47
      %p61 = scmp.eq.s32.totalorder %s18, 1
      %p62 = por %p60, %p61
      %p64 = scmp.ne.s32.totalorder %s47, %s63
      %p65 = scmp.eq.s32.totalorder %s18, 0
      %p66 = por %p64, %p65
      %s67 = ssub.s32 %s21, %s30
      %s68 = ssub.s32 %s20, %s34
      %s69 = sor.u32 %s67, %s68
      %p70 = scmp.eq.s32.totalorder %s69, 0
      %s72 = sadd.s32 %s71, 1
      %s73 = scalar_select %p70, %s71, %s72
      %p76 = pneg %p70
      %p77 = scmp.eq.s32.totalorder %s12, 1
      %p78 = por %p76, %p77
      %p79 = scmp.ne.s32.totalorder %s71, %s74
      %p80 = scmp.eq.s32.totalorder %s12, 0
      %p81 = por %p79, %p80
      %p82 = scmp.ne.s32.totalorder %s71, %s74
      %p83 = scmp.eq.s32.totalorder %s17, 1
      %p84 = por %p82, %p83
      %p85 = scmp.ne.s32.totalorder %s74, %s75
      %p86 = scmp.eq.s32.totalorder %s17, 0
      %p87 = por %p85, %p86
      %p88 = scmp.ne.s32.totalorder %s74, %s75
      %p89 = scmp.eq.s32.totalorder %s18, 1
      %p90 = por %p88, %p89
      %p92 = scmp.ne.s32.totalorder %s75, %s91
      %p93 = scmp.eq.s32.totalorder %s18, 0
      %p94 = por %p92, %p93
      %s95 = ssub.s32 %s20, %s34
      %p96 = scmp.eq.s32.totalorder %s95, 0
      %s98 = sadd.s32 %s97, 1
      %s99 = scalar_select %p96, %s97, %s98
      %p102 = pneg %p96
      %p103 = scmp.eq.s32.totalorder %s12, 1
      %p104 = por %p102, %p103
      %p105 = scmp.ne.s32.totalorder %s97, %s100
      %p106 = scmp.eq.s32.totalorder %s12, 0
      %p107 = por %p105, %p106
      %p108 = scmp.ne.s32.totalorder %s97, %s100
      %p109 = scmp.eq.s32.totalorder %s17, 1
      %p110 = por %p108, %p109
      %p111 = scmp.ne.s32.totalorder %s100, %s101
      %p112 = scmp.eq.s32.totalorder %s17, 0
      %p113 = por %p111, %p112
      %p114 = scmp.ne.s32.totalorder %s100, %s101
      %p115 = scmp.eq.s32.totalorder %s18, 1
      %p116 = por %p114, %p115
      %p118 = scmp.ne.s32.totalorder %s101, %s117
      %p119 = scmp.eq.s32.totalorder %s18, 0
      %p120 = por %p118, %p119
      %s121 = ssub.s32 %s19, %s38
      %s122 = ssub.s32 %s20, %s34
      %s123 = sor.u32 %s121, %s122
      %p124 = scmp.eq.s32.totalorder %s123, 0
      %s126 = sadd.s32 %s125, 1
      %s127 = scalar_select %p124, %s125, %s126
      %p130 = pneg %p124
      %p131 = scmp.eq.s32.totalorder %s12, 1
      %p132 = por %p130, %p131
      %p133 = scmp.ne.s32.totalorder %s125, %s128
      %p134 = scmp.eq.s32.totalorder %s12, 0
      %p135 = por %p133, %p134
      %p136 = scmp.ne.s32.totalorder %s125, %s128
      %p137 = scmp.eq.s32.totalorder %s17, 1
      %p138 = por %p136, %p137
      %p139 = scmp.ne.s32.totalorder %s128, %s129
      %p140 = scmp.eq.s32.totalorder %s17, 0
      %p141 = por %p139, %p140
      %p142 = scmp.ne.s32.totalorder %s128, %s129
      %p143 = scmp.eq.s32.totalorder %s18, 1
      %p144 = por %p142, %p143
      %p146 = scmp.ne.s32.totalorder %s129, %s145
      %p147 = scmp.eq.s32.totalorder %s18, 0
      %p148 = por %p146, %p147
      %p149 = scmp.le.s32.totalorder 1, %s12
      %p150 = scmp.lt.s32.totalorder %s12, 3
      %p151 = pnand %p149, %p150
      %p152 = pneg %p151
      // Predicated region
      $region9: #{gpt_forward.23} parent=5 // pred_check
        _
      $region10: #{gpt_forward.23} parent=5 // pred_check_branch
        %154 = sbr.rel (%p151) target = $region12
      $region11: #{gpt_forward.23} parent=5 // pred_region
        %s155 = ssub.s32 %s12, 1
        // Predicated region
        $region13: #{gpt_forward.23} parent=11 // pred_check
          %p156 = pneg %p59
        $region14: #{gpt_forward.23} parent=11 // pred_check_branch
          %158 = sbr.rel (%p156) target = $region16
        $region15: #{gpt_forward.23} parent=11 // pred_region
          %s159 = smul.u32 2, %s22
          %p160 = scmp.lt.s32.totalorder %s159, 1
          %s161 = scalar_select %p160, %s159, 1
          %p162 = scmp.lt.s32.totalorder %s24, 0
          %s163 = scalar_select %p162, %s24, 0
          %s164 = sadd.s32 %s163, %s161
          %s165 = smul.addr %s164, 4
          %s166 = scalar_lea.vmem %s0, %s165
          %s167 = smul.u32 2, %s22
        $region16: #{gpt_forward.23} parent=11 // pred_fallthru
          _
      $region12: #{gpt_forward.23} parent=5 // pred_fallthru
        _
      %p168 = scmp.lt.s32.totalorder %s12, 2
      // Predicated region
      $region17: #{gpt_forward.23} parent=5 // pred_check
        %p169 = pneg %p168
      $region18: #{gpt_forward.23} parent=5 // pred_check_branch
        %171 = sbr.rel (%p169) target = $region20
      $region19: #{gpt_forward.23} parent=5 // pred_region
        // Predicated region
        $region21: #{gpt_forward.23} parent=19 // pred_check
          %p172 = pneg %p81
        $region22: #{gpt_forward.23} parent=19 // pred_check_branch
          %174 = sbr.rel (%p172) target = $region24
        $region23: #{gpt_forward.23} parent=19 // pred_region
          %s175 = sand.u32 %s71, 1
          %s176 = sand.u32 %s71, 1
          %s177 = smul.addr %s176, 128
          %s178 = scalar_lea.vmem [#allocation3], %s177
          %s179 = smul.u32 16, %s21
          %s180 = smul.u32 2, %s20
          %s181 = smul.addr %s179, 4
          %s182 = sadd.s32 %s180, %s181
          %s183 = smul.addr %s182, 4
          %s184 = scalar_lea.vmem %s1, %s183
          // Predicated region
          $region25: #{gpt_forward.23} parent=23 // pred_check
            _
          $region26: #{gpt_forward.23} parent=23 // pred_check_branch
            %186 = sbr.rel (0) target = $region28
          $region27: #{gpt_forward.23} parent=23 // pred_region
            // Predicated region
            $region29: #{gpt_forward.23} parent=27 // pred_check
              _
            $region30: #{gpt_forward.23} parent=27 // pred_check_branch
              %188 = sbr.rel (0) target = $region32
            $region31: #{gpt_forward.23} parent=27 // pred_region
              // Predicated region
              $region44: #{gpt_forward.23} parent=31 // pred_check
                _
              $region45: #{gpt_forward.23} parent=31 // pred_check_branch
                %233 = sbr.rel (0) target = $region47
              $region46: #{gpt_forward.23} parent=31 // pred_region
                loop: start=0, step=1, limit=1
                $region48: #{gpt_forward.23} parent=46 // loop_pre_header
                  _
                $region49: #{gpt_forward.23} parent=46 // loop_header
                  %s235 = sphi 0, %s239
                  %p236 = scmp.ge.s32.totalorder %s235, 1
                  %s240 = sphi %s184, %s184
                  %s241 = sphi %s178, %s178
                $region50: #{gpt_forward.23} parent=46 // loop_header_branch
                  %238 = sbr.rel (%p236) target = $region54
                $region51: #{gpt_forward.23} parent=46 // loop_body
                  %v242 = vld [vmem:[%s240] sm:$0xff]
                  %243 = vst [vmem:[%s241] sm:$0xff] %v242
                  %v244 = vld [vmem:[%s240 + $0x10] sm:$0xff]
                  %245 = vst [vmem:[%s241 + $0x8] sm:$0xff] %v244
                  %v246 = vld [vmem:[%s240 + $0x20] sm:$0xff]
                  %247 = vst [vmem:[%s241 + $0x10] sm:$0xff] %v246
                  %v248 = vld [vmem:[%s240 + $0x30] sm:$0xff]
                  %249 = vst [vmem:[%s241 + $0x18] sm:$0xff] %v248
                  %v250 = vld [vmem:[%s240 + $0x40] sm:$0xff]
                  %251 = vst [vmem:[%s241 + $0x20] sm:$0xff] %v250
                  %v252 = vld [vmem:[%s240 + $0x50] sm:$0xff]
                  %253 = vst [vmem:[%s241 + $0x28] sm:$0xff] %v252
                  %v254 = vld [vmem:[%s240 + $0x60] sm:$0xff]
                  %255 = vst [vmem:[%s241 + $0x30] sm:$0xff] %v254
                  %v256 = vld [vmem:[%s240 + $0x70] sm:$0xff]
                  %257 = vst [vmem:[%s241 + $0x38] sm:$0xff] %v256
                  %v258 = vld [vmem:[%s240 + $0x80] sm:$0xff]
                  %259 = vst [vmem:[%s241 + $0x40] sm:$0xff] %v258
                  %v260 = vld [vmem:[%s240 + $0x90] sm:$0xff]
                  %261 = vst [vmem:[%s241 + $0x48] sm:$0xff] %v260
                  %v262 = vld [vmem:[%s240 + $0xa0] sm:$0xff]
                  %263 = vst [vmem:[%s241 + $0x50] sm:$0xff] %v262
                  %v264 = vld [vmem:[%s240 + $0xb0] sm:$0xff]
                  %265 = vst [vmem:[%s241 + $0x58] sm:$0xff] %v264
                  %v266 = vld [vmem:[%s240 + $0xc0] sm:$0xff]
                  %267 = vst [vmem:[%s241 + $0x60] sm:$0xff] %v266
                  %v268 = vld [vmem:[%s240 + $0xd0] sm:$0xff]
                  %269 = vst [vmem:[%s241 + $0x68] sm:$0xff] %v268
                  %v270 = vld [vmem:[%s240 + $0xe0] sm:$0xff]
                  %271 = vst [vmem:[%s241 + $0x70] sm:$0xff] %v270
                  %v272 = vld [vmem:[%s240 + $0xf0] sm:$0xff]
                  %273 = vst [vmem:[%s241 + $0x78] sm:$0xff] %v272
                $region52: #{gpt_forward.23} parent=46 // loop_footer
                  %s239 = sadd.s32 1, %s235
                $region53: #{gpt_forward.23} parent=46 // loop_footer_branch
                  %234 = sbr.rel target = $region49
                $region54: #{gpt_forward.23} parent=46 // loop_exit
                  _
              $region47: #{gpt_forward.23} parent=31 // pred_fallthru
                _
              // Predicated region
              $region55: #{gpt_forward.23} parent=31 // pred_check
                _
              $region56: #{gpt_forward.23} parent=31 // pred_check_branch
                %275 = sbr.rel target = $region58
              $region57: #{gpt_forward.23} parent=31 // pred_region
                _
              $region58: #{gpt_forward.23} parent=31 // pred_fallthru
                _
            $region32: #{gpt_forward.23} parent=27 // pred_fallthru
              _
            // Predicated region
            $region33: #{gpt_forward.23} parent=27 // pred_check
              _
            $region34: #{gpt_forward.23} parent=27 // pred_check_branch
              %190 = sbr.rel target = $region36
            $region35: #{gpt_forward.23} parent=27 // pred_region
              loop: start=0, step=1, limit=1
              $region37: #{gpt_forward.23} parent=35 // loop_pre_header
                _
              $region38: #{gpt_forward.23} parent=35 // loop_header
                %s193 = sphi 0, %s197
                %p194 = scmp.ge.s32.totalorder %s193, 1
                %s198 = sphi %s184, %s184
                %s199 = sphi %s178, %s178
              $region39: #{gpt_forward.23} parent=35 // loop_header_branch
                %196 = sbr.rel (%p194) target = $region43
              $region40: #{gpt_forward.23} parent=35 // loop_body
                %v200 = vld [vmem:[%s198] sm:$0xff]
                %201 = vst [vmem:[%s199] sm:$0xff] %v200
                %v202 = vld [vmem:[%s198 + $0x10] sm:$0xff]
                %203 = vst [vmem:[%s199 + $0x8] sm:$0xff] %v202
                %v204 = vld [vmem:[%s198 + $0x20] sm:$0xff]
                %205 = vst [vmem:[%s199 + $0x10] sm:$0xff] %v204
                %v206 = vld [vmem:[%s198 + $0x30] sm:$0xff]
                %207 = vst [vmem:[%s199 + $0x18] sm:$0xff] %v206
                %v208 = vld [vmem:[%s198 + $0x40] sm:$0xff]
                %209 = vst [vmem:[%s199 + $0x20] sm:$0xff] %v208
                %v210 = vld [vmem:[%s198 + $0x50] sm:$0xff]
                %211 = vst [vmem:[%s199 + $0x28] sm:$0xff] %v210
                %v212 = vld [vmem:[%s198 + $0x60] sm:$0xff]
                %213 = vst [vmem:[%s199 + $0x30] sm:$0xff] %v212
                %v214 = vld [vmem:[%s198 + $0x70] sm:$0xff]
                %215 = vst [vmem:[%s199 + $0x38] sm:$0xff] %v214
                %v216 = vld [vmem:[%s198 + $0x80] sm:$0xff]
                %217 = vst [vmem:[%s199 + $0x40] sm:$0xff] %v216
                %v218 = vld [vmem:[%s198 + $0x90] sm:$0xff]
                %219 = vst [vmem:[%s199 + $0x48] sm:$0xff] %v218
                %v220 = vld [vmem:[%s198 + $0xa0] sm:$0xff]
                %221 = vst [vmem:[%s199 + $0x50] sm:$0xff] %v220
                %v222 = vld [vmem:[%s198 + $0xb0] sm:$0xff]
                %223 = vst [vmem:[%s199 + $0x58] sm:$0xff] %v222
                %v224 = vld [vmem:[%s198 + $0xc0] sm:$0xff]
                %225 = vst [vmem:[%s199 + $0x60] sm:$0xff] %v224
                %v226 = vld [vmem:[%s198 + $0xd0] sm:$0xff]
                %227 = vst [vmem:[%s199 + $0x68] sm:$0xff] %v226
                %v228 = vld [vmem:[%s198 + $0xe0] sm:$0xff]
                %229 = vst [vmem:[%s199 + $0x70] sm:$0xff] %v228
                %v230 = vld [vmem:[%s198 + $0xf0] sm:$0xff]
                %231 = vst [vmem:[%s199 + $0x78] sm:$0xff] %v230
              $region41: #{gpt_forward.23} parent=35 // loop_footer
                %s197 = sadd.s32 1, %s193
              $region42: #{gpt_forward.23} parent=35 // loop_footer_branch
                %192 = sbr.rel target = $region38
              $region43: #{gpt_forward.23} parent=35 // loop_exit
                _
            $region36: #{gpt_forward.23} parent=27 // pred_fallthru
              _
          $region28: #{gpt_forward.23} parent=23 // pred_fallthru
            _
          %276 = vnop
        $region24: #{gpt_forward.23} parent=19 // pred_fallthru
          _
        // Predicated region
        $region59: #{gpt_forward.23} parent=19 // pred_check
          %p277 = pneg %p107
        $region60: #{gpt_forward.23} parent=19 // pred_check_branch
          %279 = sbr.rel (%p277) target = $region62
        $region61: #{gpt_forward.23} parent=19 // pred_region
          %s280 = smul.u32 2, %s20
          %p281 = scmp.lt.s32.totalorder %s280, 3
          %s282 = scalar_select %p281, %s280, 3
          %s283 = scalar_lea.vmem %s2, %s282
          %s284 = smul.u32 2, %s20
        $region62: #{gpt_forward.23} parent=19 // pred_fallthru
          _
      $region20: #{gpt_forward.23} parent=5 // pred_fallthru
        _
      %p285 = scmp.le.s32.totalorder 1, %s12
      %p286 = scmp.lt.s32.totalorder %s12, 3
      %p287 = pnand %p285, %p286
      %p288 = pneg %p287
      // Predicated region
      $region63: #{gpt_forward.23} parent=5 // pred_check
        _
      $region64: #{gpt_forward.23} parent=5 // pred_check_branch
        %290 = sbr.rel (%p287) target = $region66
      $region65: #{gpt_forward.23} parent=5 // pred_region
        %s291 = ssub.s32 %s12, 1
        %s292 = sand.u32 %s74, 1
        %s293 = sand.u32 %s74, 1
        %s294 = smul.addr %s293, 128
        %s295 = scalar_lea.vmem [#allocation3], %s294
        // Predicated region
        $region67: #{gpt_forward.23} parent=65 // pred_check
          %p296 = pneg %p87
        $region68: #{gpt_forward.23} parent=65 // pred_check_branch
          %298 = sbr.rel (%p296) target = $region70
        $region69: #{gpt_forward.23} parent=65 // pred_region
          _
        $region70: #{gpt_forward.23} parent=65 // pred_fallthru
          _
        %s299 = smul.u32 2, %s22
        %p300 = scmp.lt.s32.totalorder %s299, 1
        %s301 = scalar_select %p300, %s299, 1
        %p302 = scmp.lt.s32.totalorder %s24, 0
        %s303 = scalar_select %p302, %s24, 0
        %s304 = sadd.s32 %s303, %s301
        %s305 = smul.addr %s304, 4
        %s306 = scalar_lea.vmem %s0, %s305
        %p307 = pneg %p59
        %p308 = pneg %p56
        %s309 = sand.u32 %s74, 1
        %s310 = sand.u32 %s74, 1
        %s311 = smul.addr %s310, 128
        %s312 = scalar_lea.vmem [#allocation3], %s311
        %p313 = pneg %p87
        %p314 = pneg %p84
        %s315 = smul.u32 2, %s23
        %p316 = scmp.lt.s32.totalorder %s315, 3
        %s317 = scalar_select %p316, %s315, 3
        %s318 = scalar_lea.vmem %s2, %s317
        %p319 = pneg %p113
        %p320 = pneg %p110
        %p321 = pneg %p141
        %p322 = pneg %p138
        %s323 = sand.u32 %s128, 1
        %s324 = scalar_lea.sflag [#allocation5], %s323
        %s325 = sand.u32 %s128, 1
        %s326 = smul.addr %s325, 32
        %s327 = scalar_lea.vmem [#allocation4], %s326
        %s328 = smul.u32 2, %s22
        %p329 = scmp.lt.s32.totalorder %s328, 1
        %s330 = scalar_select %p329, %s328, 1
        %p331 = scmp.lt.s32.totalorder %s24, 0
        %s332 = scalar_select %p331, %s24, 0
        %s333 = sadd.s32 %s332, %s330
        %s334 = smul.addr %s333, 4
        %s335 = scalar_lea.vmem %s0, %s334
        %s336 = smul.u32 2, %s22
        %s337 = smul.u32 16, %s24
        %s338 = smul.u32 2, %s23
        %s339 = smul.u32 2, %s23
        %p340 = scmp.lt.s32.totalorder %s339, 3
        %s341 = scalar_select %p340, %s339, 3
        %s342 = scalar_lea.vmem %s2, %s341
        %s343 = smul.u32 2, %s23
        %s344 = smul.u32 2, %s22
        %s345 = smul.u32 2, %s23
        %p347 = scmp.eq.s32.totalorder %s24, 0
        // Predicated region
        $region71: #{gpt_forward.23} parent=65 // pred_check
          %p348 = pneg %p347
        $region72: #{gpt_forward.23} parent=65 // pred_check_branch
          %350 = sbr.rel (%p348) target = $region74
        $region73: #{gpt_forward.23} parent=65 // pred_region
          %351 = vst [vmem:[#allocation2] sm:$0xff] 0.0
          %352 = vst [vmem:[#allocation2 + $0x8] sm:$0xff] 0.0
          %353 = vst [vmem:[#allocation2 + $0x10] sm:$0xff] 0.0
          %354 = vst [vmem:[#allocation2 + $0x18] sm:$0xff] 0.0
        $region74: #{gpt_forward.23} parent=65 // pred_fallthru
          _
        %v355 = vld [vmem:[#allocation2] sm:$0xff]
        %v356 = vld [vmem:[#allocation2 + $0x8] sm:$0xff]
        %v357 = vld [vmem:[#allocation2 + $0x10] sm:$0xff]
        %v358 = vld [vmem:[#allocation2 + $0x18] sm:$0xff]
        %v359 = vld [vmem:[%s335] sm:$0xf]
        %v360 = vld [vmem:[%s335 + $0x4] sm:$0xf]
        %v361 = vld [vmem:[%s295] sm:$0xff]
        %v362 = vld [vmem:[%s295 + $0x8] sm:$0xff]
        %v363 = vld [vmem:[%s295 + $0x10] sm:$0xff]
        %v364 = vld [vmem:[%s295 + $0x18] sm:$0xff]
        %v365 = vld [vmem:[%s295 + $0x20] sm:$0xff]
        %v366 = vld [vmem:[%s295 + $0x28] sm:$0xff]
        %v367 = vld [vmem:[%s295 + $0x30] sm:$0xff]
        %v368 = vld [vmem:[%s295 + $0x38] sm:$0xff]
        %v369 = vld [vmem:[%s295 + $0x40] sm:$0xff]
        %v370 = vld [vmem:[%s295 + $0x48] sm:$0xff]
        %v371 = vld [vmem:[%s295 + $0x50] sm:$0xff]
        %v372 = vld [vmem:[%s295 + $0x58] sm:$0xff]
        %v373 = vld [vmem:[%s295 + $0x60] sm:$0xff]
        %v374 = vld [vmem:[%s295 + $0x68] sm:$0xff]
        %v375 = vld [vmem:[%s295 + $0x70] sm:$0xff]
        %v376 = vld [vmem:[%s295 + $0x78] sm:$0xff]
        %v379 = vunpack.c.l.b16 %v359
        %v380 = vunpack.c.l.b16 %v360
        %v381 = vpack.c.b16 %v380, %v379
        %v399 = vunpack.c.l.b16 %v361
        %v400 = vunpack.c.h.b16 %v361
        %v401 = vunpack.c.l.b16 %v362
        %v402 = vunpack.c.h.b16 %v362
        %v403 = vunpack.c.l.b16 %v363
        %v404 = vunpack.c.h.b16 %v363
        %v405 = vunpack.c.l.b16 %v364
        %v406 = vunpack.c.h.b16 %v364
        %v407 = vunpack.c.l.b16 %v365
        %v408 = vunpack.c.h.b16 %v365
        %v409 = vunpack.c.l.b16 %v366
        %v410 = vunpack.c.h.b16 %v366
        %v411 = vunpack.c.l.b16 %v367
        %v412 = vunpack.c.h.b16 %v367
        %v413 = vunpack.c.l.b16 %v368
        %v414 = vunpack.c.h.b16 %v368
        %v415 = vunpack.c.l.b16 %v369
        %v416 = vunpack.c.h.b16 %v369
        %v417 = vunpack.c.l.b16 %v370
        %v418 = vunpack.c.h.b16 %v370
        %v419 = vunpack.c.l.b16 %v371
        %v420 = vunpack.c.h.b16 %v371
        %v421 = vunpack.c.l.b16 %v372
        %v422 = vunpack.c.h.b16 %v372
        %v423 = vunpack.c.l.b16 %v373
        %v424 = vunpack.c.h.b16 %v373
        %v425 = vunpack.c.l.b16 %v374
        %v426 = vunpack.c.h.b16 %v374
        %v427 = vunpack.c.l.b16 %v375
        %v428 = vunpack.c.h.b16 %v375
        %v429 = vunpack.c.l.b16 %v376
        %v430 = vunpack.c.h.b16 %v376
        %v431 = vpack.c.b16 %v401, %v399
        %v432 = vpack.c.b16 %v402, %v400
        %v433 = vpack.c.b16 %v405, %v403
        %v434 = vpack.c.b16 %v406, %v404
        %v435 = vpack.c.b16 %v409, %v407
        %v436 = vpack.c.b16 %v410, %v408
        %v437 = vpack.c.b16 %v413, %v411
        %v438 = vpack.c.b16 %v414, %v412
        %v439 = vpack.c.b16 %v417, %v415
        %v440 = vpack.c.b16 %v418, %v416
        %v441 = vpack.c.b16 %v421, %v419
        %v442 = vpack.c.b16 %v422, %v420
        %v443 = vpack.c.b16 %v425, %v423
        %v444 = vpack.c.b16 %v426, %v424
        %v445 = vpack.c.b16 %v429, %v427
        %v446 = vpack.c.b16 %v430, %v428
        %463 = vmatprep.subr.bf16.mxu0 %v432
        %464 = vmatpush1.bf16.msra.mxu0 %v431
        %465 = vmatprep.subr.bf16.mxu0 %v434
        %466 = vmatpush1.bf16.msra.mxu0 %v433
        %467 = vmatprep.subr.bf16.mxu0 %v436
        %468 = vmatpush1.bf16.msra.mxu0 %v435
        %469 = vmatprep.subr.bf16.mxu0 %v438
        %470 = vmatpush1.bf16.msra.mxu0 %v437
        %471 = vmatprep.subr.bf16.mxu0 %v440
        %472 = vmatpush1.bf16.msra.mxu0 %v439
        %473 = vmatprep.subr.bf16.mxu0 %v442
        %474 = vmatpush1.bf16.msra.mxu0 %v441
        %475 = vmatprep.subr.bf16.mxu0 %v444
        %476 = vmatpush1.bf16.msra.mxu0 %v443
        %477 = vmatprep.subr.bf16.mxu0 %v446
        %478 = vmatpush1.bf16.msra.mxu0 %v445
        %479 = vmatprep.subr.bf16.mxu0 0
        %480 = vmatpush1.bf16.msra.mxu0 0
        %481 = vmatprep.subr.bf16.mxu0 0
        %482 = vmatpush1.bf16.msra.mxu0 0
        %483 = vmatprep.subr.bf16.mxu0 0
        %484 = vmatpush1.bf16.msra.mxu0 0
        %485 = vmatprep.subr.bf16.mxu0 0
        %486 = vmatpush1.bf16.msra.mxu0 0
        %487 = vmatprep.subr.bf16.mxu0 0
        %488 = vmatpush1.bf16.msra.mxu0 0
        %489 = vmatprep.subr.bf16.mxu0 0
        %490 = vmatpush1.bf16.msra.mxu0 0
        %491 = vmatprep.subr.bf16.mxu0 0
        %492 = vmatpush1.bf16.msra.mxu0 0
        %493 = vmatprep.subr.bf16.mxu0 0
        %494 = vmatpush1.bf16.msra.mxu0 0
        %495 = vmatprep.mubr.bf16.mxu0 0
        %496 = vmatmul.mubr.bf16.gmra.mrb[0].mxu0 %v381
        %v497 = vpop.f32.mrb[0].mxu0
        %v498 = vadd.f32 0.0, %v497
        %v499 = vpop.f32.mrb[0].mxu0
        %v500 = vadd.f32 0.0, %v499
        %v501 = vpop.f32.mrb[0].mxu0
        %v502 = vadd.f32 0.0, %v501
        %v503 = vpop.f32.mrb[0].mxu0
        %v504 = vadd.f32 0.0, %v503
        %505 = vdwg.mxu0
        %v506 = vadd.f32 %v355, %v498
        %v507 = vadd.f32 %v356, %v500
        %v508 = vadd.f32 %v357, %v502
        %v509 = vadd.f32 %v358, %v504
        %510 = vst [vmem:[#allocation2] sm:$0xff] %v506
        %511 = vst [vmem:[#allocation2 + $0x8] sm:$0xff] %v507
        %512 = vst [vmem:[#allocation2 + $0x10] sm:$0xff] %v508
        %513 = vst [vmem:[#allocation2 + $0x18] sm:$0xff] %v509
        // Predicated region
        $region75: #{gpt_forward.23} parent=65 // pred_check
          %p514 = pneg %p347
        $region76: #{gpt_forward.23} parent=65 // pred_check_branch
          %516 = sbr.rel (%p514) target = $region78
        $region77: #{gpt_forward.23} parent=65 // pred_region
          %v517 = vld [vmem:[#allocation2] sm:$0xff]
          %v518 = vld [vmem:[#allocation2 + $0x8] sm:$0xff]
          %v519 = vld [vmem:[#allocation2 + $0x10] sm:$0xff]
          %v520 = vld [vmem:[#allocation2 + $0x18] sm:$0xff]
          %v521 = vld [vmem:[%s342] sm:$0x3]
          %v523 = vlaneseq
          %v524 = vshrl.u32 %v523, 7
          %v525 = vsub.s32 0, %v524
          %v526 = vrot.slane %v521, %v525
          %v527 = vlaneseq
          %v528 = vshrl.u32 %v527, 7
          %v529 = vsub.s32 1, %v528
          %v530 = vrot.slane %v521, %v529
          %v533 = vadd.f32 %v517, %v526
          %v534 = vadd.f32 %v518, %v530
          %v535 = vadd.f32 %v519, %v526
          %v536 = vadd.f32 %v520, %v530
          %537 = vst [vmem:[%s327] sm:$0xff] %v533
          %538 = vst [vmem:[%s327 + $0x8] sm:$0xff] %v534
          %539 = vst [vmem:[%s327 + $0x10] sm:$0xff] %v535
          %540 = vst [vmem:[%s327 + $0x18] sm:$0xff] %v536
        $region78: #{gpt_forward.23} parent=65 // pred_fallthru
          _
        %s541 = sand.u32 %s128, 1
        %s542 = scalar_lea.sflag [#allocation5], %s541
        %s543 = sand.u32 %s128, 1
        %s544 = smul.addr %s543, 32
        %s545 = scalar_lea.vmem [#allocation4], %s544
        // Predicated region
        $region79: #{gpt_forward.23} parent=65 // pred_check
          %p546 = pneg %p138
        $region80: #{gpt_forward.23} parent=65 // pred_check_branch
          %548 = sbr.rel (%p546) target = $region82
        $region81: #{gpt_forward.23} parent=65 // pred_region
          %s549 = smul.u32 2, %s22
          %s550 = smul.u32 2, %s23
          %s552 = ssub.s32 512, 512
          %553 = vsyncadd %s542, %s552
          %s554 = smul.addr %s549, 4
          %s555 = sadd.s32 %s550, %s554
          %s556 = smul.addr %s555, 128
          %s557 = scalar_lea.hbm %s3, %s556
          %s558 = sshll.u32 %s545, 4
          %s559 = int_to_ptr.vmem [resolvable:$true] %s558
          %564 = dma.vmem_to_hbm [thread:$0]  %s559, 512, %s557, %s542, 256, 512, 16
        $region82: #{gpt_forward.23} parent=65 // pred_fallthru
          _
      $region66: #{gpt_forward.23} parent=5 // pred_fallthru
        _
      %p565 = scmp.le.s32.totalorder 2, %s12
      // Predicated region
      $region83: #{gpt_forward.23} parent=5 // pred_check
        %p566 = pneg %p565
      $region84: #{gpt_forward.23} parent=5 // pred_check_branch
        %568 = sbr.rel (%p566) target = $region86
      $region85: #{gpt_forward.23} parent=5 // pred_region
        %s569 = ssub.s32 %s12, 2
        // Predicated region
        $region87: #{gpt_forward.23} parent=85 // pred_check
          %p570 = pneg %p144
        $region88: #{gpt_forward.23} parent=85 // pred_check_branch
          %572 = sbr.rel (%p570) target = $region90
        $region89: #{gpt_forward.23} parent=85 // pred_region
          %s573 = sand.u32 %s129, 1
          %s574 = scalar_lea.sflag [#allocation5], %s573
          %s575 = sand.u32 %s129, 1
          %s576 = smul.addr %s575, 32
          %s577 = scalar_lea.vmem [#allocation4], %s576
          %578 = dma.done %s574, 512
        $region90: #{gpt_forward.23} parent=85 // pred_fallthru
          _
      $region86: #{gpt_forward.23} parent=5 // pred_fallthru
        _
    $region6: #{gpt_forward.23} parent=1 // loop_footer
      %s16 = sadd.s32 1, %s12
    $region7: #{gpt_forward.23} parent=1 // loop_footer_branch
      %11 = sbr.rel target = $region3
    $region8: #{gpt_forward.23} parent=1 // loop_exit
      _
    %579 = vsyncpa [#allocation5], 1
    %s580 = scalar_lea.sflag [#allocation5], 1
    %581 = vsyncpa %s580, 1

// kernel: gpt_forward.16
$region0: #{gpt_forward.16}
  #allocation0 [shape = 'u32[]', space=smem, size = 0x4, offset = 0x4, fixed_abs, tag = 'smem constant byte address 0x4 - core index']
  #allocation1 [shape = 'u32[144,128]{1,0:T(1,128)}', space=vmem, size = 0x12000, scoped, tag = 'internal scratch']
  #allocation2 [shape = 'f32[16,128]{1,0:T(8,128)}', space=vmem, size = 0x2000, scoped, tag = 'scratch operand']
  %s0 = inlined_call_operand.vmem [shape: bf16[16,256], index: 0, kind: input, shape index: {}]
  %s1 = inlined_call_operand.vmem [shape: bf16[256,128], index: 1, kind: input, shape index: {}]
  %s2 = inlined_call_operand.vmem [shape: f32[1,128], index: 2, kind: input, shape index: {}]
  %s3 = inlined_call_operand.vmem [shape: bf16[16,128], index: 3, kind: input, shape index: {}]
  %s4 = inlined_call_operand.vmem [shape: f32[1,128], index: 4, kind: input, shape index: {}]
  %s5 = inlined_call_operand.vmem [shape: f32[1,128], index: 5, kind: input, shape index: {}]
  %s6 = inlined_call_operand.vmem [shape: bf16[16,128], index: 6, kind: output, shape index: {}]
  %s7 = sld [smem:[#allocation0]]
  $region42: #{gpt_forward.16} parent=0
    _
  %s9 = ssub.s32 1, %s7
  %s10 = scalar_select 0, %s9, %s7
  // Predicated region
  $region2: #{gpt_forward.16} parent=0 // pred_check
    _
  $region3: #{gpt_forward.16} parent=0 // pred_check_branch
    %12 = sbr.rel (0) target = $region5
  $region4: #{gpt_forward.16} parent=0 // pred_region
    _
  $region5: #{gpt_forward.16} parent=0 // pred_fallthru
    _
  // Predicated region
  $region6: #{gpt_forward.16} parent=0 // pred_check
    _
  $region7: #{gpt_forward.16} parent=0 // pred_check_branch
    %14 = sbr.rel (0) target = $region9
  $region8: #{gpt_forward.16} parent=0 // pred_region
    _
  $region9: #{gpt_forward.16} parent=0 // pred_fallthru
    _
  // Predicated region
  $region10: #{gpt_forward.16} parent=0 // pred_check
    _
  $region11: #{gpt_forward.16} parent=0 // pred_check_branch
    %16 = sbr.rel (0) target = $region13
  $region12: #{gpt_forward.16} parent=0 // pred_region
    _
  $region13: #{gpt_forward.16} parent=0 // pred_fallthru
    _
  // Predicated region
  $region14: #{gpt_forward.16} parent=0 // pred_check
    _
  $region15: #{gpt_forward.16} parent=0 // pred_check_branch
    %18 = sbr.rel (0) target = $region17
  $region16: #{gpt_forward.16} parent=0 // pred_region
    _
  $region17: #{gpt_forward.16} parent=0 // pred_fallthru
    _
  // Predicated region
  $region18: #{gpt_forward.16} parent=0 // pred_check
    _
  $region19: #{gpt_forward.16} parent=0 // pred_check_branch
    %20 = sbr.rel (0) target = $region21
  $region20: #{gpt_forward.16} parent=0 // pred_region
    _
  $region21: #{gpt_forward.16} parent=0 // pred_fallthru
    _
  // Predicated region
  $region22: #{gpt_forward.16} parent=0 // pred_check
    _
  $region23: #{gpt_forward.16} parent=0 // pred_check_branch
    %22 = sbr.rel (0) target = $region25
  $region24: #{gpt_forward.16} parent=0 // pred_region
    _
  $region25: #{gpt_forward.16} parent=0 // pred_fallthru
    _
  %p24 = scmp.eq.s32.totalorder 0, 0
  // Predicated region
  $region26: #{gpt_forward.16} parent=0 // pred_check
    %p25 = pneg %p24
  $region27: #{gpt_forward.16} parent=0 // pred_check_branch
    %27 = sbr.rel (%p25) target = $region29
  $region28: #{gpt_forward.16} parent=0 // pred_region
    %28 = vst [vmem:[#allocation2] sm:$0xff] 0.0
    %29 = vst [vmem:[#allocation2 + $0x8] sm:$0xff] 0.0
  $region29: #{gpt_forward.16} parent=0 // pred_fallthru
    _
  %v30 = vld [vmem:[#allocation2] sm:$0xff]
  %v31 = vld [vmem:[#allocation2 + $0x8] sm:$0xff]
  %v32 = vld [vmem:[%s0] sm:$0xff]
  %v33 = vld [vmem:[%s0 + $0x8] sm:$0xff]
  %v34 = vld [vmem:[%s1] sm:$0xf]
  %v35 = vld [vmem:[%s1 + $0x4] sm:$0xf]
  %v36 = vld [vmem:[%s1 + $0x8] sm:$0xf]
  %v37 = vld [vmem:[%s1 + $0xc] sm:$0xf]
  %v38 = vld [vmem:[%s1 + $0x10] sm:$0xf]
  %v39 = vld [vmem:[%s1 + $0x14] sm:$0xf]
  %v40 = vld [vmem:[%s1 + $0x18] sm:$0xf]
  %v41 = vld [vmem:[%s1 + $0x1c] sm:$0xf]
  %v42 = vld [vmem:[%s1 + $0x20] sm:$0xf]
  %v43 = vld [vmem:[%s1 + $0x24] sm:$0xf]
  %v44 = vld [vmem:[%s1 + $0x28] sm:$0xf]
  %v45 = vld [vmem:[%s1 + $0x2c] sm:$0xf]
  %v46 = vld [vmem:[%s1 + $0x30] sm:$0xf]
  %v47 = vld [vmem:[%s1 + $0x34] sm:$0xf]
  %v48 = vld [vmem:[%s1 + $0x38] sm:$0xf]
  %v49 = vld [vmem:[%s1 + $0x3c] sm:$0xf]
  %v50 = vld [vmem:[%s1 + $0x40] sm:$0xf]
  %v51 = vld [vmem:[%s1 + $0x44] sm:$0xf]
  %v52 = vld [vmem:[%s1 + $0x48] sm:$0xf]
  %v53 = vld [vmem:[%s1 + $0x4c] sm:$0xf]
  %v54 = vld [vmem:[%s1 + $0x50] sm:$0xf]
  %v55 = vld [vmem:[%s1 + $0x54] sm:$0xf]
  %v56 = vld [vmem:[%s1 + $0x58] sm:$0xf]
  %v57 = vld [vmem:[%s1 + $0x5c] sm:$0xf]
  %v58 = vld [vmem:[%s1 + $0x60] sm:$0xf]
  %v59 = vld [vmem:[%s1 + $0x64] sm:$0xf]
  %v60 = vld [vmem:[%s1 + $0x68] sm:$0xf]
  %v61 = vld [vmem:[%s1 + $0x6c] sm:$0xf]
  %v62 = vld [vmem:[%s1 + $0x70] sm:$0xf]
  %v63 = vld [vmem:[%s1 + $0x74] sm:$0xf]
  %v64 = vld [vmem:[%s1 + $0x78] sm:$0xf]
  %v65 = vld [vmem:[%s1 + $0x7c] sm:$0xf]
  %v68 = vunpack.c.l.b16 %v32
  %v69 = vunpack.c.h.b16 %v32
  %v70 = vunpack.c.l.b16 %v33
  %v71 = vunpack.c.h.b16 %v33
  %v72 = vpack.c.b16 %v70, %v68
  %v73 = vpack.c.b16 %v71, %v69
  %v108 = vunpack.c.l.b16 %v34
  %v109 = vunpack.c.l.b16 %v35
  %v110 = vunpack.c.l.b16 %v36
  %v111 = vunpack.c.l.b16 %v37
  %v112 = vunpack.c.l.b16 %v38
  %v113 = vunpack.c.l.b16 %v39
  %v114 = vunpack.c.l.b16 %v40
  %v115 = vunpack.c.l.b16 %v41
  %v116 = vunpack.c.l.b16 %v42
  %v117 = vunpack.c.l.b16 %v43
  %v118 = vunpack.c.l.b16 %v44
  %v119 = vunpack.c.l.b16 %v45
  %v120 = vunpack.c.l.b16 %v46
  %v121 = vunpack.c.l.b16 %v47
  %v122 = vunpack.c.l.b16 %v48
  %v123 = vunpack.c.l.b16 %v49
  %v124 = vunpack.c.l.b16 %v50
  %v125 = vunpack.c.l.b16 %v51
  %v126 = vunpack.c.l.b16 %v52
  %v127 = vunpack.c.l.b16 %v53
  %v128 = vunpack.c.l.b16 %v54
  %v129 = vunpack.c.l.b16 %v55
  %v130 = vunpack.c.l.b16 %v56
  %v131 = vunpack.c.l.b16 %v57
  %v132 = vunpack.c.l.b16 %v58
  %v133 = vunpack.c.l.b16 %v59
  %v134 = vunpack.c.l.b16 %v60
  %v135 = vunpack.c.l.b16 %v61
  %v136 = vunpack.c.l.b16 %v62
  %v137 = vunpack.c.l.b16 %v63
  %v138 = vunpack.c.l.b16 %v64
  %v139 = vunpack.c.l.b16 %v65
  %v140 = vpack.c.b16 %v109, %v108
  %v141 = vpack.c.b16 %v111, %v110
  %v142 = vpack.c.b16 %v113, %v112
  %v143 = vpack.c.b16 %v115, %v114
  %v144 = vpack.c.b16 %v117, %v116
  %v145 = vpack.c.b16 %v119, %v118
  %v146 = vpack.c.b16 %v121, %v120
  %v147 = vpack.c.b16 %v123, %v122
  %v148 = vpack.c.b16 %v125, %v124
  %v149 = vpack.c.b16 %v127, %v126
  %v150 = vpack.c.b16 %v129, %v128
  %v151 = vpack.c.b16 %v131, %v130
  %v152 = vpack.c.b16 %v133, %v132
  %v153 = vpack.c.b16 %v135, %v134
  %v154 = vpack.c.b16 %v137, %v136
  %v155 = vpack.c.b16 %v139, %v138
  %172 = vmatprep.subr.bf16.mxu0 0
  %173 = vmatpush1.bf16.msra.mxu0 %v140
  %174 = vmatprep.subr.bf16.mxu0 0
  %175 = vmatpush1.bf16.msra.mxu0 %v141
  %176 = vmatprep.subr.bf16.mxu0 0
  %177 = vmatpush1.bf16.msra.mxu0 %v142
  %178 = vmatprep.subr.bf16.mxu0 0
  %179 = vmatpush1.bf16.msra.mxu0 %v143
  %180 = vmatprep.subr.bf16.mxu0 0
  %181 = vmatpush1.bf16.msra.mxu0 %v144
  %182 = vmatprep.subr.bf16.mxu0 0
  %183 = vmatpush1.bf16.msra.mxu0 %v145
  %184 = vmatprep.subr.bf16.mxu0 0
  %185 = vmatpush1.bf16.msra.mxu0 %v146
  %186 = vmatprep.subr.bf16.mxu0 0
  %187 = vmatpush1.bf16.msra.mxu0 %v147
  %188 = vmatprep.subr.bf16.mxu0 0
  %189 = vmatpush1.bf16.msra.mxu0 %v148
  %190 = vmatprep.subr.bf16.mxu0 0
  %191 = vmatpush1.bf16.msra.mxu0 %v149
  %192 = vmatprep.subr.bf16.mxu0 0
  %193 = vmatpush1.bf16.msra.mxu0 %v150
  %194 = vmatprep.subr.bf16.mxu0 0
  %195 = vmatpush1.bf16.msra.mxu0 %v151
  %196 = vmatprep.subr.bf16.mxu0 0
  %197 = vmatpush1.bf16.msra.mxu0 %v152
  %198 = vmatprep.subr.bf16.mxu0 0
  %199 = vmatpush1.bf16.msra.mxu0 %v153
  %200 = vmatprep.subr.bf16.mxu0 0
  %201 = vmatpush1.bf16.msra.mxu0 %v154
  %202 = vmatprep.subr.bf16.mxu0 0
  %203 = vmatpush1.bf16.msra.mxu0 %v155
  %204 = vmatprep.mubr.bf16.mxu0 %v73
  %205 = vmatmul.mubr.bf16.gmra.mrb[0].mxu0 %v72
  %v206 = vpop.f32.mrb[0].mxu0
  %v207 = vadd.f32 0.0, %v206
  %v208 = vpop.f32.mrb[0].mxu0
  %v209 = vpop.f32.mrb[0].mxu0
  %v210 = vadd.f32 0.0, %v209
  %v211 = vpop.f32.mrb[0].mxu0
  %212 = vdwg.mxu0
  %v213 = vadd.f32 %v30, %v207
  %v214 = vadd.f32 %v31, %v210
  %215 = vst [vmem:[#allocation2] sm:$0xff] %v213
  %216 = vst [vmem:[#allocation2 + $0x8] sm:$0xff] %v214
  // Predicated region
  $region30: #{gpt_forward.16} parent=0 // pred_check
    %p217 = pneg %p24
  $region31: #{gpt_forward.16} parent=0 // pred_check_branch
    %219 = sbr.rel (%p217) target = $region33
  $region32: #{gpt_forward.16} parent=0 // pred_region
    %v220 = vld [vmem:[#allocation2] sm:$0xff]
    %v221 = vld [vmem:[#allocation2 + $0x8] sm:$0xff]
    %v222 = vld [vmem:[%s2] sm:$0x1]
    %v224 = vlaneseq
    %v225 = vshrl.u32 %v224, 7
    %v226 = vsub.s32 0, %v225
    %v227 = vrot.slane %v222, %v226
    %v229 = vadd.f32 %v220, %v227
    %v230 = vadd.f32 %v221, %v227
    %v231 = vld [vmem:[%s3] sm:$0xf]
    %v232 = vld [vmem:[%s3 + $0x4] sm:$0xf]
    %v233 = vunpack.c.l.bf16 %v231
    %v234 = vunpack.c.l.bf16 %v232
    %v235 = vadd.f32 %v229, %v233
    %v236 = vadd.f32 %v230, %v234
    %237 = vadd.xlane.f32.xlu0 %v235
    %v238 = vpop.xlane.xlu0 %237
    %239 = vadd.xlane.f32.xlu0 %v236
    %v240 = vpop.xlane.xlu0 %239
    %v241 = vrcp.pop 128.0
    %v242 = vmul.f32 %v238, %v241
    %v243 = vmul.f32 %v240, %v241
    %v244 = vsub.f32 %v235, %v242
    %v245 = vsub.f32 %v236, %v243
    %v246 = vmul.f32 %v244, %v244
    %v247 = vmul.f32 %v245, %v245
    %248 = vadd.xlane.f32.xlu0 %v246
    %v249 = vpop.xlane.xlu0 %248
    %250 = vadd.xlane.f32.xlu0 %v247
    %v251 = vpop.xlane.xlu0 %250
    %v252 = vmul.f32 %v249, %v241
    %v253 = vmul.f32 %v251, %v241
    %v254 = vadd.f32 %v252, 1e-05
    %v255 = vadd.f32 %v253, 1e-05
    %v256 = vrsqrt.pop %v254
    %v257 = vrsqrt.pop %v255
    %v258 = vmul.f32 %v244, %v256
    %v259 = vmul.f32 %v245, %v257
    %v260 = vld [vmem:[%s4] sm:$0x1]
    %v262 = vlaneseq
    %v263 = vshrl.u32 %v262, 7
    %v264 = vsub.s32 0, %v263
    %v265 = vrot.slane %v260, %v264
    %v267 = vmul.f32 %v258, %v265
    %v268 = vmul.f32 %v259, %v265
    %v269 = vld [vmem:[%s5] sm:$0x1]
    %v271 = vlaneseq
    %v272 = vshrl.u32 %v271, 7
    %v273 = vsub.s32 0, %v272
    %v274 = vrot.slane %v269, %v273
    %v276 = vadd.f32 %v267, %v274
    %v277 = vadd.f32 %v268, %v274
    %v278 = vpack.c.bf16 %v277, %v276
    %v280 = vunpack.c.l.b16 %v278
    %v281 = vunpack.c.h.b16 %v278
    %v282 = vpack.c.b16 %v280, %v280
    %v283 = vpack.c.b16 %v281, %v281
    %286 = vst [vmem:[%s6] sm:$0xf] %v282
    %287 = vst [vmem:[%s6 + $0x4] sm:$0xf] %v283
  $region33: #{gpt_forward.16} parent=0 // pred_fallthru
    _
  // Predicated region
  $region34: #{gpt_forward.16} parent=0 // pred_check
    _
  $region35: #{gpt_forward.16} parent=0 // pred_check_branch
    %289 = sbr.rel (0) target = $region37
  $region36: #{gpt_forward.16} parent=0 // pred_region
    _
  $region37: #{gpt_forward.16} parent=0 // pred_fallthru
    _
  // Predicated region
  $region38: #{gpt_forward.16} parent=0 // pred_check
    _
  $region39: #{gpt_forward.16} parent=0 // pred_check_branch
    %291 = sbr.rel (0) target = $region41
  $region40: #{gpt_forward.16} parent=0 // pred_region
    _
  $region41: #{gpt_forward.16} parent=0 // pred_fallthru
    _

</llo_original>
